<compile_context>
chip_gen: v7x
topology: tpu7x:2x2x1
jax: 0.10.0
libtpu: 0.0.40
codegen_flags: <defaults>
</compile_context>

<pallas_src>
import numpy as np

import jax
import jax.numpy as jnp
from jax.experimental import pallas as pl
from jax.experimental.pallas import tpu as pltpu

K = 5
STRIDE = 2
BN_EPS = 1e-5
N_FILTERS = 16


def conv2d_size_out(size, kernel_size=K, stride=STRIDE):
    return (size - (kernel_size - 1) - 1) // stride + 1


def _vmem_spec():
    # Whole-array block resident in VMEM (total footprint < 2 MiB).
    return pl.BlockSpec(memory_space=pltpu.MemorySpace.VMEM)


# --------------------------------------------------------------------------
# Fused Pallas kernel: 3x (conv + BN + ReLU) + fc + softmax, batch == 1
# --------------------------------------------------------------------------
def pgconvnet_kernel(x_ref,
                     sh1_ref, mw1_ref, cs1_ref, gb1_ref,
                     sh2_ref, mw2_ref, cs2_ref, gb2_ref,
                     sh3_ref, mw3_ref, cs3_ref, gb3_ref,
                     wfc_ref, fb_ref, o_ref):
    """Activation layout: a[h, w*C + c] == x[c, h, w]  (H on sublanes, W*C on lanes).

    Per conv layer (all constants packed at init):
      sh_ref: (K, OH, H)        0/1 row-selection matrices (rows h = 2i + kh)
      mw_ref: (K, W*Cin, OW*Cout) banded weight matrices  mw[kh][w*Cin+c, j*Cout+o]
                                  = W[o, c, kh, w-2j] when 0 <= w-2j < K
      cs_ref: (OW*Cout, OW*Cout)  per-channel sum-and-broadcast matrix
      gb_ref: (2, OW*Cout)        row 0 = gamma, row 1 = beta (channel-tiled)
    fc:
      wfc_ref: (OH3, OW3*Cout, outputs)  fc weight pre-permuted to this layout
      fb_ref:  (1, outputs)
    """
    a = x_ref[...]                                            # (H, W*C), layer-1 C == 1
    layer_refs = ((sh1_ref, mw1_ref, cs1_ref, gb1_ref),
                  (sh2_ref, mw2_ref, cs2_ref, gb2_ref),
                  (sh3_ref, mw3_ref, cs3_ref, gb3_ref))

    for sh_ref, mw_ref, cs_ref, gb_ref in layer_refs:
        # ---- Conv2d(k=5, stride=2); conv bias omitted (cancelled by BN mean) ----
        acc = None
        for kh in range(K):
            rows = jnp.dot(sh_ref[kh], a,
                           preferred_element_type=jnp.float32)       # (OH, W*Cin)
            part = jnp.dot(rows, mw_ref[kh],
                           preferred_element_type=jnp.float32)       # (OH, OW*Cout)
            acc = part if acc is None else acc + part

        # ---- BatchNorm2d (training-mode batch stats) folded to scale/shift + ReLU ----
        inv_p = 1.0 / float(acc.shape[0] * (acc.shape[1] // N_FILTERS))  # 1/(OH*OW)
        colsum = jnp.sum(acc, axis=0, keepdims=True)                  # (1, OW*Cout)
        colsq = jnp.sum(acc * acc, axis=0, keepdims=True)
        cs = cs_ref[...]
        mean_r = jnp.dot(colsum, cs, preferred_element_type=jnp.float32) * inv_p
        ex2_r = jnp.dot(colsq, cs, preferred_element_type=jnp.float32) * inv_p
        var_r = ex2_r - mean_r * mean_r                               # biased batch var
        gb = gb_ref[...]
        scale_r = gb[0:1, :] * jax.lax.rsqrt(var_r + BN_EPS)
        shift_r = gb[1:2, :] - mean_r * scale_r
        a = jnp.maximum(acc * scale_r + shift_r, 0.0)                 # next (H, W*C)

    # ---- fc over the torch (C, H, W)-ordered flatten + softmax (batch == 1) ----
    logits = fb_ref[...]                                              # (1, outputs)
    for i in range(a.shape[0]):                                       # OH3 rows (== 2)
        logits = logits + jnp.dot(a[i:i + 1, :], wfc_ref[i],
                                  preferred_element_type=jnp.float32)
    m = jnp.max(logits, axis=-1, keepdims=True)
    e = jnp.exp(logits - m)
    o_ref[...] = e / jnp.sum(e, axis=-1, keepdims=True)


# --------------------------------------------------------------------------
# Parameter init (torch-layout) and one-time packing into kernel constants
# --------------------------------------------------------------------------
def init_params(key, h, w, outputs):
    """Deterministic synthetic parameters with the same shapes as the torch module."""
    keys = jax.random.split(key, 14)
    params = {}
    c_in = 1
    ki = 0
    for li in range(3):
        bound = 1.0 / float(np.sqrt(c_in * K * K))
        params[f"conv{li + 1}"] = dict(
            weight=jax.random.uniform(keys[ki], (N_FILTERS, c_in, K, K),
                                      jnp.float32, -bound, bound),
            # conv bias is a mathematical no-op under training-mode BN (mean absorbs it)
            bias=jax.random.uniform(keys[ki + 1], (N_FILTERS,), jnp.float32, -bound, bound),
            bn_gamma=jax.random.uniform(keys[ki + 2], (N_FILTERS,), jnp.float32, 0.5, 1.5),
            bn_beta=jax.random.uniform(keys[ki + 3], (N_FILTERS,), jnp.float32, -0.1, 0.1),
        )
        ki += 4
        c_in = N_FILTERS

    convw = conv2d_size_out(conv2d_size_out(conv2d_size_out(w)))
    convh = conv2d_size_out(conv2d_size_out(conv2d_size_out(h)))
    lin = convw * convh * N_FILTERS
    fb = 1.0 / float(np.sqrt(lin))
    params["fc"] = dict(
        weight=jax.random.uniform(keys[12], (outputs, lin), jnp.float32, -fb, fb),
        bias=jax.random.uniform(keys[13], (outputs,), jnp.float32, -fb, fb),
    )
    return params


def pack_params(params, h, w):
    """One-time repack of torch-layout params into the kernel's matmul constants."""
    layers = []
    H, W, C = h, w, 1
    for li in range(3):
        wt = np.asarray(params[f"conv{li + 1}"]["weight"], dtype=np.float32)  # (Cout,Cin,K,K)
        gamma = np.asarray(params[f"conv{li + 1}"]["bn_gamma"], dtype=np.float32)
        beta = np.asarray(params[f"conv{li + 1}"]["bn_beta"], dtype=np.float32)
        cout, cin = wt.shape[0], wt.shape[1]
        assert cin == C
        oh, ow = conv2d_size_out(H), conv2d_size_out(W)

        # Row-selection matrices: sh[kh, i, 2i+kh] = 1
        sh = np.zeros((K, oh, H), np.float32)
        for kh in range(K):
            sh[kh, np.arange(oh), STRIDE * np.arange(oh) + kh] = 1.0

        # Banded weight matrices: mw[kh][w*Cin+c, j*Cout+o] = W[o,c,kh,w-2j]
        mw = np.zeros((K, W * cin, ow * cout), np.float32)
        for kh in range(K):
            for j in range(ow):
                for kw in range(K):
                    wcol = STRIDE * j + kw
                    mw[kh, wcol * cin:(wcol + 1) * cin,
                       j * cout:(j + 1) * cout] = wt[:, :, kh, kw].T

        # Per-channel sum + broadcast matrix; gamma/beta tiled to the lane layout.
        cs = np.tile(np.eye(cout, dtype=np.float32), (ow, ow))
        gb = np.stack([np.tile(gamma, ow), np.tile(beta, ow)], axis=0)

        layers.append(tuple(jnp.asarray(x) for x in (sh, mw, cs, gb)))
        H, W, C = oh, ow, cout

    # fc weight permuted so it consumes the (H, W*C) activation layout directly,
    # matching torch's x.view(1, -1) (C, H, W)-ordered flatten.
    fw = np.asarray(params["fc"]["weight"], dtype=np.float32)    # (outputs, lin)
    outputs = fw.shape[0]
    oh3, ow3, c3 = H, W, C
    wfc = np.zeros((oh3, ow3 * c3, outputs), np.float32)
    for i in range(oh3):
        for j in range(ow3):
            for c in range(c3):
                wfc[i, j * c3 + c, :] = fw[:, c * oh3 * ow3 + i * ow3 + j]
    fb = np.asarray(params["fc"]["bias"], dtype=np.float32).reshape(1, outputs)

    return dict(layers=layers, wfc=jnp.asarray(wfc), fb=jnp.asarray(fb))


def make_forward(packed):
    """Returns a jitted forward(x_nchw) -> probs for batch size 1."""
    consts = []
    for layer in packed["layers"]:
        consts.extend(layer)
    consts.append(packed["wfc"])
    consts.append(packed["fb"])
    n_out = packed["fb"].shape[-1]

    call = pl.pallas_call(
        pgconvnet_kernel,
        out_shape=jax.ShapeDtypeStruct((1, n_out), jnp.float32),
        in_specs=[_vmem_spec()] * (1 + len(consts)),
        out_specs=_vmem_spec(),
    )

    @jax.jit
    def forward(x_nchw):
        # TODO(synk): batch > 1 not supported (torch forward softmaxes over the
        # squeezed dim-0, i.e. the batch axis, for N > 1 -- ambiguous semantics;
        # a leading "parallel" grid axis would cover batched rollouts on v7x).
        assert x_nchw.shape[0] == 1 and x_nchw.shape[1] == 1
        h, w = x_nchw.shape[-2], x_nchw.shape[-1]
        x2d = x_nchw.astype(jnp.float32).reshape(h, w)
        return call(x2d, *consts).reshape(-1)

    return forward


if __name__ == "__main__":
    H, W, OUTPUTS = 40, 40, 3
    key = jax.random.PRNGKey(0)
    pkey, xkey = jax.random.split(key)

    params = init_params(pkey, H, W, OUTPUTS)
    packed = pack_params(params, H, W)          # one-time packing, off the hot path
    forward = make_forward(packed)

    x = jax.random.uniform(xkey, (1, 1, H, W), jnp.float32)   # NCHW, batch 1 (like torch)
    probs = jax.block_until_ready(forward(x))

    assert probs.shape == (OUTPUTS,)
    assert bool(jnp.all(jnp.isfinite(probs)))
    assert abs(float(jnp.sum(probs)) - 1.0) < 1e-4
    print("KERNEL_OK")
</pallas_src>

<mosaic_0001>
module attributes {stable_mosaic.version = 11 : i64} {
  func.func @pgconvnet_kernel(%arg0: memref<40x40xf32, #tpu.memory_space<vmem>>, %arg1: memref<5x18x40xf32, #tpu.memory_space<vmem>>, %arg2: memref<5x40x288xf32, #tpu.memory_space<vmem>>, %arg3: memref<288x288xf32, #tpu.memory_space<vmem>>, %arg4: memref<2x288xf32, #tpu.memory_space<vmem>>, %arg5: memref<5x7x18xf32, #tpu.memory_space<vmem>>, %arg6: memref<5x288x112xf32, #tpu.memory_space<vmem>>, %arg7: memref<112x112xf32, #tpu.memory_space<vmem>>, %arg8: memref<2x112xf32, #tpu.memory_space<vmem>>, %arg9: memref<5x2x7xf32, #tpu.memory_space<vmem>>, %arg10: memref<5x112x32xf32, #tpu.memory_space<vmem>>, %arg11: memref<32x32xf32, #tpu.memory_space<vmem>>, %arg12: memref<2x32xf32, #tpu.memory_space<vmem>>, %arg13: memref<2x32x3xf32, #tpu.memory_space<vmem>>, %arg14: memref<1x3xf32, #tpu.memory_space<vmem>>, %arg15: memref<1x3xf32, #tpu.memory_space<vmem>>) attributes {dimension_semantics = [], scalar_prefetch = 0 : i64, scratch_operands = 0 : i64, tpu.core_type = #tpu.core_type<tc>} {
    %c0 = arith.constant 0 : index
    %c0_0 = arith.constant 0 : index
    %0 = vector.load %arg0[%c0, %c0_0] : memref<40x40xf32, #tpu.memory_space<vmem>>, vector<40x40xf32>
    %c0_1 = arith.constant 0 : index
    %c0_2 = arith.constant 0 : index
    %c0_3 = arith.constant 0 : index
    %1 = vector.load %arg1[%c0_1, %c0_2, %c0_3] : memref<5x18x40xf32, #tpu.memory_space<vmem>>, vector<1x18x40xf32>
    %2 = vector.shape_cast %1 : vector<1x18x40xf32> to vector<18x40xf32>
    %cst = arith.constant dense<0.000000e+00> : vector<18x40xf32>
    %3 = tpu.matmul %2, %0, %cst {dimension_numbers = #tpu.dot_dimension_numbers<[1], [0], [0], [1], [0, 0, 1, 1], [], []>} : vector<18x40xf32>, vector<40x40xf32>, vector<18x40xf32> -> vector<18x40xf32>
    %c0_4 = arith.constant 0 : index
    %c0_5 = arith.constant 0 : index
    %c0_6 = arith.constant 0 : index
    %4 = vector.load %arg2[%c0_4, %c0_5, %c0_6] : memref<5x40x288xf32, #tpu.memory_space<vmem>>, vector<1x40x288xf32>
    %5 = vector.shape_cast %4 : vector<1x40x288xf32> to vector<40x288xf32>
    %cst_7 = arith.constant dense<0.000000e+00> : vector<18x288xf32>
    %6 = tpu.matmul %3, %5, %cst_7 {dimension_numbers = #tpu.dot_dimension_numbers<[1], [0], [0], [1], [0, 0, 1, 1], [], []>} : vector<18x40xf32>, vector<40x288xf32>, vector<18x288xf32> -> vector<18x288xf32>
    %c1 = arith.constant 1 : index
    %c0_8 = arith.constant 0 : index
    %c0_9 = arith.constant 0 : index
    %7 = vector.load %arg1[%c1, %c0_8, %c0_9] : memref<5x18x40xf32, #tpu.memory_space<vmem>>, vector<1x18x40xf32>
    %8 = vector.shape_cast %7 : vector<1x18x40xf32> to vector<18x40xf32>
    %cst_10 = arith.constant dense<0.000000e+00> : vector<18x40xf32>
    %9 = tpu.matmul %8, %0, %cst_10 {dimension_numbers = #tpu.dot_dimension_numbers<[1], [0], [0], [1], [0, 0, 1, 1], [], []>} : vector<18x40xf32>, vector<40x40xf32>, vector<18x40xf32> -> vector<18x40xf32>
    %c1_11 = arith.constant 1 : index
    %c0_12 = arith.constant 0 : index
    %c0_13 = arith.constant 0 : index
    %10 = vector.load %arg2[%c1_11, %c0_12, %c0_13] : memref<5x40x288xf32, #tpu.memory_space<vmem>>, vector<1x40x288xf32>
    %11 = vector.shape_cast %10 : vector<1x40x288xf32> to vector<40x288xf32>
    %cst_14 = arith.constant dense<0.000000e+00> : vector<18x288xf32>
    %12 = tpu.matmul %9, %11, %cst_14 {dimension_numbers = #tpu.dot_dimension_numbers<[1], [0], [0], [1], [0, 0, 1, 1], [], []>} : vector<18x40xf32>, vector<40x288xf32>, vector<18x288xf32> -> vector<18x288xf32>
    %13 = arith.addf %6, %12 : vector<18x288xf32>
    %c2 = arith.constant 2 : index
    %c0_15 = arith.constant 0 : index
    %c0_16 = arith.constant 0 : index
    %14 = vector.load %arg1[%c2, %c0_15, %c0_16] : memref<5x18x40xf32, #tpu.memory_space<vmem>>, vector<1x18x40xf32>
    %15 = vector.shape_cast %14 : vector<1x18x40xf32> to vector<18x40xf32>
    %cst_17 = arith.constant dense<0.000000e+00> : vector<18x40xf32>
    %16 = tpu.matmul %15, %0, %cst_17 {dimension_numbers = #tpu.dot_dimension_numbers<[1], [0], [0], [1], [0, 0, 1, 1], [], []>} : vector<18x40xf32>, vector<40x40xf32>, vector<18x40xf32> -> vector<18x40xf32>
    %c2_18 = arith.constant 2 : index
    %c0_19 = arith.constant 0 : index
    %c0_20 = arith.constant 0 : index
    %17 = vector.load %arg2[%c2_18, %c0_19, %c0_20] : memref<5x40x288xf32, #tpu.memory_space<vmem>>, vector<1x40x288xf32>
    %18 = vector.shape_cast %17 : vector<1x40x288xf32> to vector<40x288xf32>
    %cst_21 = arith.constant dense<0.000000e+00> : vector<18x288xf32>
    %19 = tpu.matmul %16, %18, %cst_21 {dimension_numbers = #tpu.dot_dimension_numbers<[1], [0], [0], [1], [0, 0, 1, 1], [], []>} : vector<18x40xf32>, vector<40x288xf32>, vector<18x288xf32> -> vector<18x288xf32>
    %20 = arith.addf %13, %19 : vector<18x288xf32>
    %c3 = arith.constant 3 : index
    %c0_22 = arith.constant 0 : index
    %c0_23 = arith.constant 0 : index
    %21 = vector.load %arg1[%c3, %c0_22, %c0_23] : memref<5x18x40xf32, #tpu.memory_space<vmem>>, vector<1x18x40xf32>
    %22 = vector.shape_cast %21 : vector<1x18x40xf32> to vector<18x40xf32>
    %cst_24 = arith.constant dense<0.000000e+00> : vector<18x40xf32>
    %23 = tpu.matmul %22, %0, %cst_24 {dimension_numbers = #tpu.dot_dimension_numbers<[1], [0], [0], [1], [0, 0, 1, 1], [], []>} : vector<18x40xf32>, vector<40x40xf32>, vector<18x40xf32> -> vector<18x40xf32>
    %c3_25 = arith.constant 3 : index
    %c0_26 = arith.constant 0 : index
    %c0_27 = arith.constant 0 : index
    %24 = vector.load %arg2[%c3_25, %c0_26, %c0_27] : memref<5x40x288xf32, #tpu.memory_space<vmem>>, vector<1x40x288xf32>
    %25 = vector.shape_cast %24 : vector<1x40x288xf32> to vector<40x288xf32>
    %cst_28 = arith.constant dense<0.000000e+00> : vector<18x288xf32>
    %26 = tpu.matmul %23, %25, %cst_28 {dimension_numbers = #tpu.dot_dimension_numbers<[1], [0], [0], [1], [0, 0, 1, 1], [], []>} : vector<18x40xf32>, vector<40x288xf32>, vector<18x288xf32> -> vector<18x288xf32>
    %27 = arith.addf %20, %26 : vector<18x288xf32>
    %c4 = arith.constant 4 : index
    %c0_29 = arith.constant 0 : index
    %c0_30 = arith.constant 0 : index
    %28 = vector.load %arg1[%c4, %c0_29, %c0_30] : memref<5x18x40xf32, #tpu.memory_space<vmem>>, vector<1x18x40xf32>
    %29 = vector.shape_cast %28 : vector<1x18x40xf32> to vector<18x40xf32>
    %cst_31 = arith.constant dense<0.000000e+00> : vector<18x40xf32>
    %30 = tpu.matmul %29, %0, %cst_31 {dimension_numbers = #tpu.dot_dimension_numbers<[1], [0], [0], [1], [0, 0, 1, 1], [], []>} : vector<18x40xf32>, vector<40x40xf32>, vector<18x40xf32> -> vector<18x40xf32>
    %c4_32 = arith.constant 4 : index
    %c0_33 = arith.constant 0 : index
    %c0_34 = arith.constant 0 : index
    %31 = vector.load %arg2[%c4_32, %c0_33, %c0_34] : memref<5x40x288xf32, #tpu.memory_space<vmem>>, vector<1x40x288xf32>
    %32 = vector.shape_cast %31 : vector<1x40x288xf32> to vector<40x288xf32>
    %cst_35 = arith.constant dense<0.000000e+00> : vector<18x288xf32>
    %33 = tpu.matmul %30, %32, %cst_35 {dimension_numbers = #tpu.dot_dimension_numbers<[1], [0], [0], [1], [0, 0, 1, 1], [], []>} : vector<18x40xf32>, vector<40x288xf32>, vector<18x288xf32> -> vector<18x288xf32>
    %34 = arith.addf %27, %33 : vector<18x288xf32>
    %cst_36 = arith.constant dense<0.000000e+00> : vector<288xf32>
    %35 = vector.multi_reduction <add>, %34, %cst_36 [0] : vector<18x288xf32> to vector<288xf32>
    %36 = vector.shape_cast %35 : vector<288xf32> to vector<1x288xf32>
    %37 = arith.mulf %34, %34 : vector<18x288xf32>
    %cst_37 = arith.constant dense<0.000000e+00> : vector<288xf32>
    %38 = vector.multi_reduction <add>, %37, %cst_37 [0] : vector<18x288xf32> to vector<288xf32>
    %39 = vector.shape_cast %38 : vector<288xf32> to vector<1x288xf32>
    %c0_38 = arith.constant 0 : index
    %c0_39 = arith.constant 0 : index
    %40 = vector.load %arg3[%c0_38, %c0_39] : memref<288x288xf32, #tpu.memory_space<vmem>>, vector<288x288xf32>
    %cst_40 = arith.constant dense<0.000000e+00> : vector<1x288xf32>
    %41 = tpu.matmul %36, %40, %cst_40 {dimension_numbers = #tpu.dot_dimension_numbers<[1], [0], [0], [1], [0, 0, 1, 1], [], []>} : vector<1x288xf32>, vector<288x288xf32>, vector<1x288xf32> -> vector<1x288xf32>
    %cst_41 = arith.constant 0.00308641978 : f32
    %42 = vector.broadcast %cst_41 : f32 to vector<1x288xf32>
    %43 = arith.mulf %41, %42 : vector<1x288xf32>
    %cst_42 = arith.constant dense<0.000000e+00> : vector<1x288xf32>
    %44 = tpu.matmul %39, %40, %cst_42 {dimension_numbers = #tpu.dot_dimension_numbers<[1], [0], [0], [1], [0, 0, 1, 1], [], []>} : vector<1x288xf32>, vector<288x288xf32>, vector<1x288xf32> -> vector<1x288xf32>
    %cst_43 = arith.constant 0.00308641978 : f32
    %45 = vector.broadcast %cst_43 : f32 to vector<1x288xf32>
    %46 = arith.mulf %44, %45 : vector<1x288xf32>
    %47 = arith.mulf %43, %43 : vector<1x288xf32>
    %48 = arith.subf %46, %47 : vector<1x288xf32>
    %c0_44 = arith.constant 0 : index
    %c0_45 = arith.constant 0 : index
    %49 = vector.load %arg4[%c0_44, %c0_45] : memref<2x288xf32, #tpu.memory_space<vmem>>, vector<2x288xf32>
    %50 = vector.extract_strided_slice %49 {offsets = [0, 0], sizes = [1, 288], strides = [1, 1]} : vector<2x288xf32> to vector<1x288xf32>
    %cst_46 = arith.constant 9.99999974E-6 : f32
    %51 = vector.broadcast %cst_46 : f32 to vector<1x288xf32>
    %52 = arith.addf %48, %51 : vector<1x288xf32>
    %53 = math.rsqrt %52 : vector<1x288xf32>
    %54 = arith.mulf %50, %53 : vector<1x288xf32>
    %55 = vector.extract_strided_slice %49 {offsets = [1, 0], sizes = [1, 288], strides = [1, 1]} : vector<2x288xf32> to vector<1x288xf32>
    %56 = arith.mulf %43, %54 : vector<1x288xf32>
    %57 = arith.subf %55, %56 : vector<1x288xf32>
    %58 = vector.broadcast %54 : vector<1x288xf32> to vector<18x288xf32>
    %59 = arith.mulf %34, %58 : vector<18x288xf32>
    %60 = vector.broadcast %57 : vector<1x288xf32> to vector<18x288xf32>
    %61 = arith.addf %59, %60 : vector<18x288xf32>
    %cst_47 = arith.constant 0.000000e+00 : f32
    %62 = vector.broadcast %cst_47 : f32 to vector<18x288xf32>
    %63 = arith.maximumf %61, %62 : vector<18x288xf32>
    %c0_48 = arith.constant 0 : index
    %c0_49 = arith.constant 0 : index
    %c0_50 = arith.constant 0 : index
    %64 = vector.load %arg5[%c0_48, %c0_49, %c0_50] : memref<5x7x18xf32, #tpu.memory_space<vmem>>, vector<1x7x18xf32>
    %65 = vector.shape_cast %64 : vector<1x7x18xf32> to vector<7x18xf32>
    %cst_51 = arith.constant dense<0.000000e+00> : vector<7x288xf32>
    %66 = tpu.matmul %65, %63, %cst_51 {dimension_numbers = #tpu.dot_dimension_numbers<[1], [0], [0], [1], [0, 0, 1, 1], [], []>} : vector<7x18xf32>, vector<18x288xf32>, vector<7x288xf32> -> vector<7x288xf32>
    %c0_52 = arith.constant 0 : index
    %c0_53 = arith.constant 0 : index
    %c0_54 = arith.constant 0 : index
    %67 = vector.load %arg6[%c0_52, %c0_53, %c0_54] : memref<5x288x112xf32, #tpu.memory_space<vmem>>, vector<1x288x112xf32>
    %68 = vector.shape_cast %67 : vector<1x288x112xf32> to vector<288x112xf32>
    %cst_55 = arith.constant dense<0.000000e+00> : vector<7x112xf32>
    %69 = tpu.matmul %66, %68, %cst_55 {dimension_numbers = #tpu.dot_dimension_numbers<[1], [0], [0], [1], [0, 0, 1, 1], [], []>} : vector<7x288xf32>, vector<288x112xf32>, vector<7x112xf32> -> vector<7x112xf32>
    %c1_56 = arith.constant 1 : index
    %c0_57 = arith.constant 0 : index
    %c0_58 = arith.constant 0 : index
    %70 = vector.load %arg5[%c1_56, %c0_57, %c0_58] : memref<5x7x18xf32, #tpu.memory_space<vmem>>, vector<1x7x18xf32>
    %71 = vector.shape_cast %70 : vector<1x7x18xf32> to vector<7x18xf32>
    %cst_59 = arith.constant dense<0.000000e+00> : vector<7x288xf32>
    %72 = tpu.matmul %71, %63, %cst_59 {dimension_numbers = #tpu.dot_dimension_numbers<[1], [0], [0], [1], [0, 0, 1, 1], [], []>} : vector<7x18xf32>, vector<18x288xf32>, vector<7x288xf32> -> vector<7x288xf32>
    %c1_60 = arith.constant 1 : index
    %c0_61 = arith.constant 0 : index
    %c0_62 = arith.constant 0 : index
    %73 = vector.load %arg6[%c1_60, %c0_61, %c0_62] : memref<5x288x112xf32, #tpu.memory_space<vmem>>, vector<1x288x112xf32>
    %74 = vector.shape_cast %73 : vector<1x288x112xf32> to vector<288x112xf32>
    %cst_63 = arith.constant dense<0.000000e+00> : vector<7x112xf32>
    %75 = tpu.matmul %72, %74, %cst_63 {dimension_numbers = #tpu.dot_dimension_numbers<[1], [0], [0], [1], [0, 0, 1, 1], [], []>} : vector<7x288xf32>, vector<288x112xf32>, vector<7x112xf32> -> vector<7x112xf32>
    %76 = arith.addf %69, %75 : vector<7x112xf32>
    %c2_64 = arith.constant 2 : index
    %c0_65 = arith.constant 0 : index
    %c0_66 = arith.constant 0 : index
    %77 = vector.load %arg5[%c2_64, %c0_65, %c0_66] : memref<5x7x18xf32, #tpu.memory_space<vmem>>, vector<1x7x18xf32>
    %78 = vector.shape_cast %77 : vector<1x7x18xf32> to vector<7x18xf32>
    %cst_67 = arith.constant dense<0.000000e+00> : vector<7x288xf32>
    %79 = tpu.matmul %78, %63, %cst_67 {dimension_numbers = #tpu.dot_dimension_numbers<[1], [0], [0], [1], [0, 0, 1, 1], [], []>} : vector<7x18xf32>, vector<18x288xf32>, vector<7x288xf32> -> vector<7x288xf32>
    %c2_68 = arith.constant 2 : index
    %c0_69 = arith.constant 0 : index
    %c0_70 = arith.constant 0 : index
    %80 = vector.load %arg6[%c2_68, %c0_69, %c0_70] : memref<5x288x112xf32, #tpu.memory_space<vmem>>, vector<1x288x112xf32>
    %81 = vector.shape_cast %80 : vector<1x288x112xf32> to vector<288x112xf32>
    %cst_71 = arith.constant dense<0.000000e+00> : vector<7x112xf32>
    %82 = tpu.matmul %79, %81, %cst_71 {dimension_numbers = #tpu.dot_dimension_numbers<[1], [0], [0], [1], [0, 0, 1, 1], [], []>} : vector<7x288xf32>, vector<288x112xf32>, vector<7x112xf32> -> vector<7x112xf32>
    %83 = arith.addf %76, %82 : vector<7x112xf32>
    %c3_72 = arith.constant 3 : index
    %c0_73 = arith.constant 0 : index
    %c0_74 = arith.constant 0 : index
    %84 = vector.load %arg5[%c3_72, %c0_73, %c0_74] : memref<5x7x18xf32, #tpu.memory_space<vmem>>, vector<1x7x18xf32>
    %85 = vector.shape_cast %84 : vector<1x7x18xf32> to vector<7x18xf32>
    %cst_75 = arith.constant dense<0.000000e+00> : vector<7x288xf32>
    %86 = tpu.matmul %85, %63, %cst_75 {dimension_numbers = #tpu.dot_dimension_numbers<[1], [0], [0], [1], [0, 0, 1, 1], [], []>} : vector<7x18xf32>, vector<18x288xf32>, vector<7x288xf32> -> vector<7x288xf32>
    %c3_76 = arith.constant 3 : index
    %c0_77 = arith.constant 0 : index
    %c0_78 = arith.constant 0 : index
    %87 = vector.load %arg6[%c3_76, %c0_77, %c0_78] : memref<5x288x112xf32, #tpu.memory_space<vmem>>, vector<1x288x112xf32>
    %88 = vector.shape_cast %87 : vector<1x288x112xf32> to vector<288x112xf32>
    %cst_79 = arith.constant dense<0.000000e+00> : vector<7x112xf32>
    %89 = tpu.matmul %86, %88, %cst_79 {dimension_numbers = #tpu.dot_dimension_numbers<[1], [0], [0], [1], [0, 0, 1, 1], [], []>} : vector<7x288xf32>, vector<288x112xf32>, vector<7x112xf32> -> vector<7x112xf32>
    %90 = arith.addf %83, %89 : vector<7x112xf32>
    %c4_80 = arith.constant 4 : index
    %c0_81 = arith.constant 0 : index
    %c0_82 = arith.constant 0 : index
    %91 = vector.load %arg5[%c4_80, %c0_81, %c0_82] : memref<5x7x18xf32, #tpu.memory_space<vmem>>, vector<1x7x18xf32>
    %92 = vector.shape_cast %91 : vector<1x7x18xf32> to vector<7x18xf32>
    %cst_83 = arith.constant dense<0.000000e+00> : vector<7x288xf32>
    %93 = tpu.matmul %92, %63, %cst_83 {dimension_numbers = #tpu.dot_dimension_numbers<[1], [0], [0], [1], [0, 0, 1, 1], [], []>} : vector<7x18xf32>, vector<18x288xf32>, vector<7x288xf32> -> vector<7x288xf32>
    %c4_84 = arith.constant 4 : index
    %c0_85 = arith.constant 0 : index
    %c0_86 = arith.constant 0 : index
    %94 = vector.load %arg6[%c4_84, %c0_85, %c0_86] : memref<5x288x112xf32, #tpu.memory_space<vmem>>, vector<1x288x112xf32>
    %95 = vector.shape_cast %94 : vector<1x288x112xf32> to vector<288x112xf32>
    %cst_87 = arith.constant dense<0.000000e+00> : vector<7x112xf32>
    %96 = tpu.matmul %93, %95, %cst_87 {dimension_numbers = #tpu.dot_dimension_numbers<[1], [0], [0], [1], [0, 0, 1, 1], [], []>} : vector<7x288xf32>, vector<288x112xf32>, vector<7x112xf32> -> vector<7x112xf32>
    %97 = arith.addf %90, %96 : vector<7x112xf32>
    %cst_88 = arith.constant dense<0.000000e+00> : vector<112xf32>
    %98 = vector.multi_reduction <add>, %97, %cst_88 [0] : vector<7x112xf32> to vector<112xf32>
    %99 = vector.shape_cast %98 : vector<112xf32> to vector<1x112xf32>
    %100 = arith.mulf %97, %97 : vector<7x112xf32>
    %cst_89 = arith.constant dense<0.000000e+00> : vector<112xf32>
    %101 = vector.multi_reduction <add>, %100, %cst_89 [0] : vector<7x112xf32> to vector<112xf32>
    %102 = vector.shape_cast %101 : vector<112xf32> to vector<1x112xf32>
    %c0_90 = arith.constant 0 : index
    %c0_91 = arith.constant 0 : index
    %103 = vector.load %arg7[%c0_90, %c0_91] : memref<112x112xf32, #tpu.memory_space<vmem>>, vector<112x112xf32>
    %cst_92 = arith.constant dense<0.000000e+00> : vector<1x112xf32>
    %104 = tpu.matmul %99, %103, %cst_92 {dimension_numbers = #tpu.dot_dimension_numbers<[1], [0], [0], [1], [0, 0, 1, 1], [], []>} : vector<1x112xf32>, vector<112x112xf32>, vector<1x112xf32> -> vector<1x112xf32>
    %cst_93 = arith.constant 0.0204081628 : f32
    %105 = vector.broadcast %cst_93 : f32 to vector<1x112xf32>
    %106 = arith.mulf %104, %105 : vector<1x112xf32>
    %cst_94 = arith.constant dense<0.000000e+00> : vector<1x112xf32>
    %107 = tpu.matmul %102, %103, %cst_94 {dimension_numbers = #tpu.dot_dimension_numbers<[1], [0], [0], [1], [0, 0, 1, 1], [], []>} : vector<1x112xf32>, vector<112x112xf32>, vector<1x112xf32> -> vector<1x112xf32>
    %cst_95 = arith.constant 0.0204081628 : f32
    %108 = vector.broadcast %cst_95 : f32 to vector<1x112xf32>
    %109 = arith.mulf %107, %108 : vector<1x112xf32>
    %110 = arith.mulf %106, %106 : vector<1x112xf32>
    %111 = arith.subf %109, %110 : vector<1x112xf32>
    %c0_96 = arith.constant 0 : index
    %c0_97 = arith.constant 0 : index
    %112 = vector.load %arg8[%c0_96, %c0_97] : memref<2x112xf32, #tpu.memory_space<vmem>>, vector<2x112xf32>
    %113 = vector.extract_strided_slice %112 {offsets = [0, 0], sizes = [1, 112], strides = [1, 1]} : vector<2x112xf32> to vector<1x112xf32>
    %cst_98 = arith.constant 9.99999974E-6 : f32
    %114 = vector.broadcast %cst_98 : f32 to vector<1x112xf32>
    %115 = arith.addf %111, %114 : vector<1x112xf32>
    %116 = math.rsqrt %115 : vector<1x112xf32>
    %117 = arith.mulf %113, %116 : vector<1x112xf32>
    %118 = vector.extract_strided_slice %112 {offsets = [1, 0], sizes = [1, 112], strides = [1, 1]} : vector<2x112xf32> to vector<1x112xf32>
    %119 = arith.mulf %106, %117 : vector<1x112xf32>
    %120 = arith.subf %118, %119 : vector<1x112xf32>
    %121 = vector.broadcast %117 : vector<1x112xf32> to vector<7x112xf32>
    %122 = arith.mulf %97, %121 : vector<7x112xf32>
    %123 = vector.broadcast %120 : vector<1x112xf32> to vector<7x112xf32>
    %124 = arith.addf %122, %123 : vector<7x112xf32>
    %cst_99 = arith.constant 0.000000e+00 : f32
    %125 = vector.broadcast %cst_99 : f32 to vector<7x112xf32>
    %126 = arith.maximumf %124, %125 : vector<7x112xf32>
    %c0_100 = arith.constant 0 : index
    %c0_101 = arith.constant 0 : index
    %c0_102 = arith.constant 0 : index
    %127 = vector.load %arg9[%c0_100, %c0_101, %c0_102] : memref<5x2x7xf32, #tpu.memory_space<vmem>>, vector<1x2x7xf32>
    %128 = vector.shape_cast %127 : vector<1x2x7xf32> to vector<2x7xf32>
    %cst_103 = arith.constant dense<0.000000e+00> : vector<2x112xf32>
    %129 = tpu.matmul %128, %126, %cst_103 {dimension_numbers = #tpu.dot_dimension_numbers<[1], [0], [0], [1], [0, 0, 1, 1], [], []>} : vector<2x7xf32>, vector<7x112xf32>, vector<2x112xf32> -> vector<2x112xf32>
    %c0_104 = arith.constant 0 : index
    %c0_105 = arith.constant 0 : index
    %c0_106 = arith.constant 0 : index
    %130 = vector.load %arg10[%c0_104, %c0_105, %c0_106] : memref<5x112x32xf32, #tpu.memory_space<vmem>>, vector<1x112x32xf32>
    %131 = vector.shape_cast %130 : vector<1x112x32xf32> to vector<112x32xf32>
    %cst_107 = arith.constant dense<0.000000e+00> : vector<2x32xf32>
    %132 = tpu.matmul %129, %131, %cst_107 {dimension_numbers = #tpu.dot_dimension_numbers<[1], [0], [0], [1], [0, 0, 1, 1], [], []>} : vector<2x112xf32>, vector<112x32xf32>, vector<2x32xf32> -> vector<2x32xf32>
    %c1_108 = arith.constant 1 : index
    %c0_109 = arith.constant 0 : index
    %c0_110 = arith.constant 0 : index
    %133 = vector.load %arg9[%c1_108, %c0_109, %c0_110] : memref<5x2x7xf32, #tpu.memory_space<vmem>>, vector<1x2x7xf32>
    %134 = vector.shape_cast %133 : vector<1x2x7xf32> to vector<2x7xf32>
    %cst_111 = arith.constant dense<0.000000e+00> : vector<2x112xf32>
    %135 = tpu.matmul %134, %126, %cst_111 {dimension_numbers = #tpu.dot_dimension_numbers<[1], [0], [0], [1], [0, 0, 1, 1], [], []>} : vector<2x7xf32>, vector<7x112xf32>, vector<2x112xf32> -> vector<2x112xf32>
    %c1_112 = arith.constant 1 : index
    %c0_113 = arith.constant 0 : index
    %c0_114 = arith.constant 0 : index
    %136 = vector.load %arg10[%c1_112, %c0_113, %c0_114] : memref<5x112x32xf32, #tpu.memory_space<vmem>>, vector<1x112x32xf32>
    %137 = vector.shape_cast %136 : vector<1x112x32xf32> to vector<112x32xf32>
    %cst_115 = arith.constant dense<0.000000e+00> : vector<2x32xf32>
    %138 = tpu.matmul %135, %137, %cst_115 {dimension_numbers = #tpu.dot_dimension_numbers<[1], [0], [0], [1], [0, 0, 1, 1], [], []>} : vector<2x112xf32>, vector<112x32xf32>, vector<2x32xf32> -> vector<2x32xf32>
    %139 = arith.addf %132, %138 : vector<2x32xf32>
    %c2_116 = arith.constant 2 : index
    %c0_117 = arith.constant 0 : index
    %c0_118 = arith.constant 0 : index
    %140 = vector.load %arg9[%c2_116, %c0_117, %c0_118] : memref<5x2x7xf32, #tpu.memory_space<vmem>>, vector<1x2x7xf32>
    %141 = vector.shape_cast %140 : vector<1x2x7xf32> to vector<2x7xf32>
    %cst_119 = arith.constant dense<0.000000e+00> : vector<2x112xf32>
    %142 = tpu.matmul %141, %126, %cst_119 {dimension_numbers = #tpu.dot_dimension_numbers<[1], [0], [0], [1], [0, 0, 1, 1], [], []>} : vector<2x7xf32>, vector<7x112xf32>, vector<2x112xf32> -> vector<2x112xf32>
    %c2_120 = arith.constant 2 : index
    %c0_121 = arith.constant 0 : index
    %c0_122 = arith.constant 0 : index
    %143 = vector.load %arg10[%c2_120, %c0_121, %c0_122] : memref<5x112x32xf32, #tpu.memory_space<vmem>>, vector<1x112x32xf32>
    %144 = vector.shape_cast %143 : vector<1x112x32xf32> to vector<112x32xf32>
    %cst_123 = arith.constant dense<0.000000e+00> : vector<2x32xf32>
    %145 = tpu.matmul %142, %144, %cst_123 {dimension_numbers = #tpu.dot_dimension_numbers<[1], [0], [0], [1], [0, 0, 1, 1], [], []>} : vector<2x112xf32>, vector<112x32xf32>, vector<2x32xf32> -> vector<2x32xf32>
    %146 = arith.addf %139, %145 : vector<2x32xf32>
    %c3_124 = arith.constant 3 : index
    %c0_125 = arith.constant 0 : index
    %c0_126 = arith.constant 0 : index
    %147 = vector.load %arg9[%c3_124, %c0_125, %c0_126] : memref<5x2x7xf32, #tpu.memory_space<vmem>>, vector<1x2x7xf32>
    %148 = vector.shape_cast %147 : vector<1x2x7xf32> to vector<2x7xf32>
    %cst_127 = arith.constant dense<0.000000e+00> : vector<2x112xf32>
    %149 = tpu.matmul %148, %126, %cst_127 {dimension_numbers = #tpu.dot_dimension_numbers<[1], [0], [0], [1], [0, 0, 1, 1], [], []>} : vector<2x7xf32>, vector<7x112xf32>, vector<2x112xf32> -> vector<2x112xf32>
    %c3_128 = arith.constant 3 : index
    %c0_129 = arith.constant 0 : index
    %c0_130 = arith.constant 0 : index
    %150 = vector.load %arg10[%c3_128, %c0_129, %c0_130] : memref<5x112x32xf32, #tpu.memory_space<vmem>>, vector<1x112x32xf32>
    %151 = vector.shape_cast %150 : vector<1x112x32xf32> to vector<112x32xf32>
    %cst_131 = arith.constant dense<0.000000e+00> : vector<2x32xf32>
    %152 = tpu.matmul %149, %151, %cst_131 {dimension_numbers = #tpu.dot_dimension_numbers<[1], [0], [0], [1], [0, 0, 1, 1], [], []>} : vector<2x112xf32>, vector<112x32xf32>, vector<2x32xf32> -> vector<2x32xf32>
    %153 = arith.addf %146, %152 : vector<2x32xf32>
    %c4_132 = arith.constant 4 : index
    %c0_133 = arith.constant 0 : index
    %c0_134 = arith.constant 0 : index
    %154 = vector.load %arg9[%c4_132, %c0_133, %c0_134] : memref<5x2x7xf32, #tpu.memory_space<vmem>>, vector<1x2x7xf32>
    %155 = vector.shape_cast %154 : vector<1x2x7xf32> to vector<2x7xf32>
    %cst_135 = arith.constant dense<0.000000e+00> : vector<2x112xf32>
    %156 = tpu.matmul %155, %126, %cst_135 {dimension_numbers = #tpu.dot_dimension_numbers<[1], [0], [0], [1], [0, 0, 1, 1], [], []>} : vector<2x7xf32>, vector<7x112xf32>, vector<2x112xf32> -> vector<2x112xf32>
    %c4_136 = arith.constant 4 : index
    %c0_137 = arith.constant 0 : index
    %c0_138 = arith.constant 0 : index
    %157 = vector.load %arg10[%c4_136, %c0_137, %c0_138] : memref<5x112x32xf32, #tpu.memory_space<vmem>>, vector<1x112x32xf32>
    %158 = vector.shape_cast %157 : vector<1x112x32xf32> to vector<112x32xf32>
    %cst_139 = arith.constant dense<0.000000e+00> : vector<2x32xf32>
    %159 = tpu.matmul %156, %158, %cst_139 {dimension_numbers = #tpu.dot_dimension_numbers<[1], [0], [0], [1], [0, 0, 1, 1], [], []>} : vector<2x112xf32>, vector<112x32xf32>, vector<2x32xf32> -> vector<2x32xf32>
    %160 = arith.addf %153, %159 : vector<2x32xf32>
    %cst_140 = arith.constant dense<0.000000e+00> : vector<32xf32>
    %161 = vector.multi_reduction <add>, %160, %cst_140 [0] : vector<2x32xf32> to vector<32xf32>
    %162 = vector.shape_cast %161 : vector<32xf32> to vector<1x32xf32>
    %163 = arith.mulf %160, %160 : vector<2x32xf32>
    %cst_141 = arith.constant dense<0.000000e+00> : vector<32xf32>
    %164 = vector.multi_reduction <add>, %163, %cst_141 [0] : vector<2x32xf32> to vector<32xf32>
    %165 = vector.shape_cast %164 : vector<32xf32> to vector<1x32xf32>
    %c0_142 = arith.constant 0 : index
    %c0_143 = arith.constant 0 : index
    %166 = vector.load %arg11[%c0_142, %c0_143] : memref<32x32xf32, #tpu.memory_space<vmem>>, vector<32x32xf32>
    %cst_144 = arith.constant dense<0.000000e+00> : vector<1x32xf32>
    %167 = tpu.matmul %162, %166, %cst_144 {dimension_numbers = #tpu.dot_dimension_numbers<[1], [0], [0], [1], [0, 0, 1, 1], [], []>} : vector<1x32xf32>, vector<32x32xf32>, vector<1x32xf32> -> vector<1x32xf32>
    %cst_145 = arith.constant 2.500000e-01 : f32
    %168 = vector.broadcast %cst_145 : f32 to vector<1x32xf32>
    %169 = arith.mulf %167, %168 : vector<1x32xf32>
    %cst_146 = arith.constant dense<0.000000e+00> : vector<1x32xf32>
    %170 = tpu.matmul %165, %166, %cst_146 {dimension_numbers = #tpu.dot_dimension_numbers<[1], [0], [0], [1], [0, 0, 1, 1], [], []>} : vector<1x32xf32>, vector<32x32xf32>, vector<1x32xf32> -> vector<1x32xf32>
    %cst_147 = arith.constant 2.500000e-01 : f32
    %171 = vector.broadcast %cst_147 : f32 to vector<1x32xf32>
    %172 = arith.mulf %170, %171 : vector<1x32xf32>
    %173 = arith.mulf %169, %169 : vector<1x32xf32>
    %174 = arith.subf %172, %173 : vector<1x32xf32>
    %c0_148 = arith.constant 0 : index
    %c0_149 = arith.constant 0 : index
    %175 = vector.load %arg12[%c0_148, %c0_149] : memref<2x32xf32, #tpu.memory_space<vmem>>, vector<2x32xf32>
    %176 = vector.extract_strided_slice %175 {offsets = [0, 0], sizes = [1, 32], strides = [1, 1]} : vector<2x32xf32> to vector<1x32xf32>
    %cst_150 = arith.constant 9.99999974E-6 : f32
    %177 = vector.broadcast %cst_150 : f32 to vector<1x32xf32>
    %178 = arith.addf %174, %177 : vector<1x32xf32>
    %179 = math.rsqrt %178 : vector<1x32xf32>
    %180 = arith.mulf %176, %179 : vector<1x32xf32>
    %181 = vector.extract_strided_slice %175 {offsets = [1, 0], sizes = [1, 32], strides = [1, 1]} : vector<2x32xf32> to vector<1x32xf32>
    %182 = arith.mulf %169, %180 : vector<1x32xf32>
    %183 = arith.subf %181, %182 : vector<1x32xf32>
    %184 = vector.broadcast %180 : vector<1x32xf32> to vector<2x32xf32>
    %185 = arith.mulf %160, %184 : vector<2x32xf32>
    %186 = vector.broadcast %183 : vector<1x32xf32> to vector<2x32xf32>
    %187 = arith.addf %185, %186 : vector<2x32xf32>
    %cst_151 = arith.constant 0.000000e+00 : f32
    %188 = vector.broadcast %cst_151 : f32 to vector<2x32xf32>
    %189 = arith.maximumf %187, %188 : vector<2x32xf32>
    %c0_152 = arith.constant 0 : index
    %c0_153 = arith.constant 0 : index
    %190 = vector.load %arg14[%c0_152, %c0_153] : memref<1x3xf32, #tpu.memory_space<vmem>>, vector<1x3xf32>
    %191 = vector.extract_strided_slice %189 {offsets = [0, 0], sizes = [1, 32], strides = [1, 1]} : vector<2x32xf32> to vector<1x32xf32>
    %c0_154 = arith.constant 0 : index
    %c0_155 = arith.constant 0 : index
    %c0_156 = arith.constant 0 : index
    %192 = vector.load %arg13[%c0_154, %c0_155, %c0_156] : memref<2x32x3xf32, #tpu.memory_space<vmem>>, vector<1x32x3xf32>
    %193 = vector.shape_cast %192 : vector<1x32x3xf32> to vector<32x3xf32>
    %cst_157 = arith.constant dense<0.000000e+00> : vector<1x3xf32>
    %194 = tpu.matmul %191, %193, %cst_157 {dimension_numbers = #tpu.dot_dimension_numbers<[1], [0], [0], [1], [0, 0, 1, 1], [], []>} : vector<1x32xf32>, vector<32x3xf32>, vector<1x3xf32> -> vector<1x3xf32>
    %195 = arith.addf %190, %194 : vector<1x3xf32>
    %196 = vector.extract_strided_slice %189 {offsets = [1, 0], sizes = [1, 32], strides = [1, 1]} : vector<2x32xf32> to vector<1x32xf32>
    %c1_158 = arith.constant 1 : index
    %c0_159 = arith.constant 0 : index
    %c0_160 = arith.constant 0 : index
    %197 = vector.load %arg13[%c1_158, %c0_159, %c0_160] : memref<2x32x3xf32, #tpu.memory_space<vmem>>, vector<1x32x3xf32>
    %198 = vector.shape_cast %197 : vector<1x32x3xf32> to vector<32x3xf32>
    %cst_161 = arith.constant dense<0.000000e+00> : vector<1x3xf32>
    %199 = tpu.matmul %196, %198, %cst_161 {dimension_numbers = #tpu.dot_dimension_numbers<[1], [0], [0], [1], [0, 0, 1, 1], [], []>} : vector<1x32xf32>, vector<32x3xf32>, vector<1x3xf32> -> vector<1x3xf32>
    %200 = arith.addf %195, %199 : vector<1x3xf32>
    %cst_162 = arith.constant dense<0xFF800000> : vector<1xf32>
    %201 = vector.multi_reduction <maximumf>, %200, %cst_162 [1] : vector<1x3xf32> to vector<1xf32>
    %202 = vector.shape_cast %201 : vector<1xf32> to vector<1x1xf32>
    %203 = vector.broadcast %202 : vector<1x1xf32> to vector<1x3xf32>
    %204 = arith.subf %200, %203 : vector<1x3xf32>
    %205 = math.exp %204 : vector<1x3xf32>
    %cst_163 = arith.constant dense<0.000000e+00> : vector<1xf32>
    %206 = vector.multi_reduction <add>, %205, %cst_163 [1] : vector<1x3xf32> to vector<1xf32>
    %207 = vector.shape_cast %206 : vector<1xf32> to vector<1x1xf32>
    %208 = vector.broadcast %207 : vector<1x1xf32> to vector<1x3xf32>
    %209 = arith.divf %205, %208 : vector<1x3xf32>
    %c0_164 = arith.constant 0 : index
    %c0_165 = arith.constant 0 : index
    %210 = vector.load %arg15[%c0_164, %c0_165] : memref<1x3xf32, #tpu.memory_space<vmem>>, vector<1x3xf32>
    tpu.vector_store %arg15[%c0_164, %c0_165], %209 {strides = array<i32>} : memref<1x3xf32, #tpu.memory_space<vmem>>, vector<1x3xf32>,
    return
  }
}

</mosaic_0001>

<llo_original>
// kernel: forward.1
$region0: #{forward.1}
  #allocation0 [shape = 'u32[]', space=smem, size = 0x4, offset = 0x4, fixed_abs, tag = 'smem constant byte address 0x4 - core index']
  #allocation1 [shape = 'u32[144,128]{1,0:T(1,128)}', space=vmem, size = 0x12000, scoped, tag = 'internal scratch']
  %s0 = inlined_call_operand.hbm [shape: f32[40,40], index: 0, kind: input, shape index: {}]
  %s1 = inlined_call_operand.hbm [shape: f32[5,18,40], index: 1, kind: input, shape index: {}]
  %s2 = inlined_call_operand.hbm [shape: f32[5,40,288], index: 2, kind: input, shape index: {}]
  %s3 = inlined_call_operand.hbm [shape: f32[288,288], index: 3, kind: input, shape index: {}]
  %s4 = inlined_call_operand.hbm [shape: f32[2,288], index: 4, kind: input, shape index: {}]
  %s5 = inlined_call_operand.hbm [shape: f32[5,7,18], index: 5, kind: input, shape index: {}]
  %s6 = inlined_call_operand.hbm [shape: f32[5,288,112], index: 6, kind: input, shape index: {}]
  %s7 = inlined_call_operand.hbm [shape: f32[112,112], index: 7, kind: input, shape index: {}]
  %s8 = inlined_call_operand.hbm [shape: f32[2,112], index: 8, kind: input, shape index: {}]
  %s9 = inlined_call_operand.vmem [shape: f32[5,2,7], index: 9, kind: input, shape index: {}]
  %s10 = inlined_call_operand.hbm [shape: f32[5,112,32], index: 10, kind: input, shape index: {}]
  %s11 = inlined_call_operand.vmem [shape: f32[32,32], index: 11, kind: input, shape index: {}]
  %s12 = inlined_call_operand.vmem [shape: f32[2,32], index: 12, kind: input, shape index: {}]
  %s13 = inlined_call_operand.hbm [shape: f32[2,32,3], index: 13, kind: input, shape index: {}]
  %s14 = inlined_call_operand.vmem [shape: f32[1,3], index: 14, kind: input, shape index: {}]
  %s15 = inlined_call_operand.hbm [shape: f32[1,3], index: 15, kind: output, shape index: {}]
  %s16 = sld [smem:[#allocation0]]
  $region114: #{forward.1} parent=0
    _
  %s18 = ssub.s32 1, %s16
  %s19 = scalar_select 0, %s18, %s16
  $region1: #{forward.1} parent=0
    #allocation2 [shape = 'u8[20480]{0}', space=vmem, size = 0x5000, scoped, tag = 'input window, operand 0, single buffered']
    #allocation3 [shape = 's32[1]{0}', space=sflag, size = 0x4, scoped, tag = 'scoped memory for forward.1']
    #allocation4 [shape = 's32[1]{0}', space=sflag, size = 0x4, scoped, tag = 'scoped memory for forward.1']
    #allocation5 [shape = 'u8[61440]{0}', space=vmem, size = 0xf000, scoped, tag = 'input window, operand 1, single buffered']
    #allocation6 [shape = 's32[1]{0}', space=sflag, size = 0x4, scoped, tag = 'scoped memory for forward.1']
    #allocation7 [shape = 'u8[307200]{0}', space=vmem, size = 0x4b000, scoped, tag = 'input window, operand 2, single buffered']
    #allocation8 [shape = 'u8[442368]{0}', space=vmem, size = 0x6c000, scoped, tag = 'input window, operand 3, single buffered']
    #allocation9 [shape = 's32[1]{0}', space=sflag, size = 0x4, scoped, tag = 'scoped memory for forward.1']
    #allocation10 [shape = 'u8[3072]{0}', space=vmem, size = 0xc00, scoped, tag = 'input window, operand 4, single buffered']
    #allocation11 [shape = 'u8[20480]{0}', space=vmem, size = 0x5000, scoped, tag = 'input window, operand 5, single buffered']
    #allocation12 [shape = 's32[1]{0}', space=sflag, size = 0x4, scoped, tag = 'scoped memory for forward.1']
    #allocation13 [shape = 'u8[737280]{0}', space=vmem, size = 0xb4000, scoped, tag = 'input window, operand 6, single buffered']
    #allocation14 [shape = 'u8[57344]{0}', space=vmem, size = 0xe000, scoped, tag = 'input window, operand 7, single buffered']
    #allocation15 [shape = 's32[1]{0}', space=sflag, size = 0x4, scoped, tag = 'scoped memory for forward.1']
    #allocation16 [shape = 'u8[1024]{0}', space=vmem, size = 0x400, scoped, tag = 'input window, operand 8, single buffered']
    #allocation17 [shape = 'u8[286720]{0}', space=vmem, size = 0x46000, scoped, tag = 'input window, operand 10, single buffered']
    #allocation18 [shape = 's32[1]{0}', space=sflag, size = 0x4, scoped, tag = 'scoped memory for forward.1']
    #allocation19 [shape = 'u8[32768]{0}', space=vmem, size = 0x8000, scoped, tag = 'input window, operand 13, single buffered']
    #allocation20 [shape = 'u8[512]{0}', space=vmem, size = 0x400, scoped, tag = 'output window, operand 0, single buffered']
    %20 = vsyncpa [#allocation3], 0
    %21 = vsyncpa [#allocation6], 0
    %22 = vsyncpa [#allocation9], 0
    %23 = vsyncpa [#allocation12], 0
    %24 = vsyncpa [#allocation15], 0
    %25 = vsyncpa [#allocation18], 0
    %26 = vsyncpa [#allocation4], 0
    // Predicated region
    $region2: #{forward.1} parent=1 // pred_check
      _
    $region3: #{forward.1} parent=1 // pred_check_branch
      %28 = sbr.rel (0) target = $region5
    $region4: #{forward.1} parent=1 // pred_region
      %s30 = ssub.s32 640, 640
      %31 = vsyncadd [#allocation3], %s30
      %s32 = sshll.u32 [#allocation2], 4
      %s33 = int_to_ptr.vmem [resolvable:$true] %s32
      %38 = dma.hbm_to_vmem [thread:$0]  %s0, 640, %s33, [#allocation3], 128, 128, 8
    $region5: #{forward.1} parent=1 // pred_fallthru
      _
    // Predicated region
    $region6: #{forward.1} parent=1 // pred_check
      _
    $region7: #{forward.1} parent=1 // pred_check_branch
      %40 = sbr.rel (0) target = $region9
    $region8: #{forward.1} parent=1 // pred_region
      %s42 = ssub.s32 1920, 1920
      %43 = vsyncadd [#allocation6], %s42
      %s44 = sshll.u32 [#allocation5], 4
      %s45 = int_to_ptr.vmem [resolvable:$true] %s44
      %50 = dma.hbm_to_vmem [thread:$0]  %s1, 1920, %s45, [#allocation6], 128, 128, 8
    $region9: #{forward.1} parent=1 // pred_fallthru
      _
    // Predicated region
    $region10: #{forward.1} parent=1 // pred_check
      _
    $region11: #{forward.1} parent=1 // pred_check_branch
      %52 = sbr.rel (0) target = $region13
    $region12: #{forward.1} parent=1 // pred_region
      %s54 = ssub.s32 9600, 9600
      %55 = vsyncadd [#allocation6], %s54
      %s56 = sshll.u32 [#allocation7], 4
      %s57 = int_to_ptr.vmem [resolvable:$true] %s56
      %62 = dma.hbm_to_vmem [thread:$0]  %s2, 9600, %s57, [#allocation6], 384, 384, 24
    $region13: #{forward.1} parent=1 // pred_fallthru
      _
    // Predicated region
    $region14: #{forward.1} parent=1 // pred_check
      _
    $region15: #{forward.1} parent=1 // pred_check_branch
      %64 = sbr.rel (0) target = $region17
    $region16: #{forward.1} parent=1 // pred_region
      %s66 = ssub.s32 13824, 13824
      %67 = vsyncadd [#allocation9], %s66
      %s68 = sshll.u32 [#allocation8], 4
      %s69 = int_to_ptr.vmem [resolvable:$true] %s68
      %74 = dma.hbm_to_vmem [thread:$0]  %s3, 13824, %s69, [#allocation9], 384, 384, 24
    $region17: #{forward.1} parent=1 // pred_fallthru
      _
    // Predicated region
    $region18: #{forward.1} parent=1 // pred_check
      _
    $region19: #{forward.1} parent=1 // pred_check_branch
      %76 = sbr.rel (0) target = $region21
    $region20: #{forward.1} parent=1 // pred_region
      %s78 = ssub.s32 96, 96
      %79 = vsyncadd [#allocation9], %s78
      %s81 = sshll.u32 [#allocation10], 4
      %s82 = int_to_ptr.vmem [resolvable:$true] %s81
      %84 = dma.hbm_to_vmem [thread:$0]  %s4, 96, %s82, [#allocation9]
    $region21: #{forward.1} parent=1 // pred_fallthru
      _
    // Predicated region
    $region22: #{forward.1} parent=1 // pred_check
      _
    $region23: #{forward.1} parent=1 // pred_check_branch
      %86 = sbr.rel (0) target = $region25
    $region24: #{forward.1} parent=1 // pred_region
      %s88 = ssub.s32 640, 640
      %89 = vsyncadd [#allocation12], %s88
      %s90 = sshll.u32 [#allocation11], 4
      %s91 = int_to_ptr.vmem [resolvable:$true] %s90
      %96 = dma.hbm_to_vmem [thread:$0]  %s5, 640, %s91, [#allocation12], 128, 128, 8
    $region25: #{forward.1} parent=1 // pred_fallthru
      _
    // Predicated region
    $region26: #{forward.1} parent=1 // pred_check
      _
    $region27: #{forward.1} parent=1 // pred_check_branch
      %98 = sbr.rel (0) target = $region29
    $region28: #{forward.1} parent=1 // pred_region
      %s100 = ssub.s32 23040, 23040
      %101 = vsyncadd [#allocation12], %s100
      %s102 = sshll.u32 [#allocation13], 4
      %s103 = int_to_ptr.vmem [resolvable:$true] %s102
      %108 = dma.hbm_to_vmem [thread:$0]  %s6, 23040, %s103, [#allocation12], 128, 128, 8
    $region29: #{forward.1} parent=1 // pred_fallthru
      _
    // Predicated region
    $region30: #{forward.1} parent=1 // pred_check
      _
    $region31: #{forward.1} parent=1 // pred_check_branch
      %110 = sbr.rel (0) target = $region33
    $region32: #{forward.1} parent=1 // pred_region
      %s112 = ssub.s32 1792, 1792
      %113 = vsyncadd [#allocation15], %s112
      %s114 = sshll.u32 [#allocation14], 4
      %s115 = int_to_ptr.vmem [resolvable:$true] %s114
      %120 = dma.hbm_to_vmem [thread:$0]  %s7, 1792, %s115, [#allocation15], 128, 128, 8
    $region33: #{forward.1} parent=1 // pred_fallthru
      _
    // Predicated region
    $region34: #{forward.1} parent=1 // pred_check
      _
    $region35: #{forward.1} parent=1 // pred_check_branch
      %122 = sbr.rel (0) target = $region37
    $region36: #{forward.1} parent=1 // pred_region
      %s124 = ssub.s32 32, 32
      %125 = vsyncadd [#allocation15], %s124
      %s127 = sshll.u32 [#allocation16], 4
      %s128 = int_to_ptr.vmem [resolvable:$true] %s127
      %130 = dma.hbm_to_vmem [thread:$0]  %s8, 32, %s128, [#allocation15]
    $region37: #{forward.1} parent=1 // pred_fallthru
      _
    // Predicated region
    $region38: #{forward.1} parent=1 // pred_check
      _
    $region39: #{forward.1} parent=1 // pred_check_branch
      %132 = sbr.rel (0) target = $region41
    $region40: #{forward.1} parent=1 // pred_region
      _
    $region41: #{forward.1} parent=1 // pred_fallthru
      _
    // Predicated region
    $region42: #{forward.1} parent=1 // pred_check
      _
    $region43: #{forward.1} parent=1 // pred_check_branch
      %134 = sbr.rel (0) target = $region45
    $region44: #{forward.1} parent=1 // pred_region
      %s136 = ssub.s32 8960, 8960
      %137 = vsyncadd [#allocation18], %s136
      %s138 = sshll.u32 [#allocation17], 4
      %s139 = int_to_ptr.vmem [resolvable:$true] %s138
      %144 = dma.hbm_to_vmem [thread:$0]  %s10, 8960, %s139, [#allocation18], 128, 128, 8
    $region45: #{forward.1} parent=1 // pred_fallthru
      _
    // Predicated region
    $region46: #{forward.1} parent=1 // pred_check
      _
    $region47: #{forward.1} parent=1 // pred_check_branch
      %146 = sbr.rel (0) target = $region49
    $region48: #{forward.1} parent=1 // pred_region
      _
    $region49: #{forward.1} parent=1 // pred_fallthru
      _
    // Predicated region
    $region50: #{forward.1} parent=1 // pred_check
      _
    $region51: #{forward.1} parent=1 // pred_check_branch
      %148 = sbr.rel (0) target = $region53
    $region52: #{forward.1} parent=1 // pred_region
      _
    $region53: #{forward.1} parent=1 // pred_fallthru
      _
    // Predicated region
    $region54: #{forward.1} parent=1 // pred_check
      _
    $region55: #{forward.1} parent=1 // pred_check_branch
      %150 = sbr.rel (0) target = $region57
    $region56: #{forward.1} parent=1 // pred_region
      %s152 = ssub.s32 1024, 1024
      %153 = vsyncadd [#allocation18], %s152
      %s154 = sshll.u32 [#allocation19], 4
      %s155 = int_to_ptr.vmem [resolvable:$true] %s154
      %160 = dma.hbm_to_vmem [thread:$0]  %s13, 1024, %s155, [#allocation18], 128, 128, 8
    $region57: #{forward.1} parent=1 // pred_fallthru
      _
    // Predicated region
    $region58: #{forward.1} parent=1 // pred_check
      _
    $region59: #{forward.1} parent=1 // pred_check_branch
      %162 = sbr.rel (0) target = $region61
    $region60: #{forward.1} parent=1 // pred_region
      _
    $region61: #{forward.1} parent=1 // pred_fallthru
      _
    // Predicated region
    $region62: #{forward.1} parent=1 // pred_check
      _
    $region63: #{forward.1} parent=1 // pred_check_branch
      %164 = sbr.rel (0) target = $region65
    $region64: #{forward.1} parent=1 // pred_region
      %165 = dma.done [#allocation3], 640
    $region65: #{forward.1} parent=1 // pred_fallthru
      _
    // Predicated region
    $region66: #{forward.1} parent=1 // pred_check
      _
    $region67: #{forward.1} parent=1 // pred_check_branch
      %167 = sbr.rel (0) target = $region69
    $region68: #{forward.1} parent=1 // pred_region
      %168 = dma.done [#allocation6], 1920
    $region69: #{forward.1} parent=1 // pred_fallthru
      _
    // Predicated region
    $region70: #{forward.1} parent=1 // pred_check
      _
    $region71: #{forward.1} parent=1 // pred_check_branch
      %170 = sbr.rel (0) target = $region73
    $region72: #{forward.1} parent=1 // pred_region
      %171 = dma.done [#allocation6], 9600
    $region73: #{forward.1} parent=1 // pred_fallthru
      _
    // Predicated region
    $region74: #{forward.1} parent=1 // pred_check
      _
    $region75: #{forward.1} parent=1 // pred_check_branch
      %173 = sbr.rel (0) target = $region77
    $region76: #{forward.1} parent=1 // pred_region
      %174 = dma.done [#allocation9], 13824
    $region77: #{forward.1} parent=1 // pred_fallthru
      _
    // Predicated region
    $region78: #{forward.1} parent=1 // pred_check
      _
    $region79: #{forward.1} parent=1 // pred_check_branch
      %176 = sbr.rel (0) target = $region81
    $region80: #{forward.1} parent=1 // pred_region
      %177 = dma.done [#allocation9], 96
    $region81: #{forward.1} parent=1 // pred_fallthru
      _
    // Predicated region
    $region82: #{forward.1} parent=1 // pred_check
      _
    $region83: #{forward.1} parent=1 // pred_check_branch
      %179 = sbr.rel (0) target = $region85
    $region84: #{forward.1} parent=1 // pred_region
      %180 = dma.done [#allocation12], 640
    $region85: #{forward.1} parent=1 // pred_fallthru
      _
    // Predicated region
    $region86: #{forward.1} parent=1 // pred_check
      _
    $region87: #{forward.1} parent=1 // pred_check_branch
      %182 = sbr.rel (0) target = $region89
    $region88: #{forward.1} parent=1 // pred_region
      %183 = dma.done [#allocation12], 23040
    $region89: #{forward.1} parent=1 // pred_fallthru
      _
    // Predicated region
    $region90: #{forward.1} parent=1 // pred_check
      _
    $region91: #{forward.1} parent=1 // pred_check_branch
      %185 = sbr.rel (0) target = $region93
    $region92: #{forward.1} parent=1 // pred_region
      %186 = dma.done [#allocation15], 1792
    $region93: #{forward.1} parent=1 // pred_fallthru
      _
    // Predicated region
    $region94: #{forward.1} parent=1 // pred_check
      _
    $region95: #{forward.1} parent=1 // pred_check_branch
      %188 = sbr.rel (0) target = $region97
    $region96: #{forward.1} parent=1 // pred_region
      %189 = dma.done [#allocation15], 32
    $region97: #{forward.1} parent=1 // pred_fallthru
      _
    // Predicated region
    $region98: #{forward.1} parent=1 // pred_check
      _
    $region99: #{forward.1} parent=1 // pred_check_branch
      %191 = sbr.rel (0) target = $region101
    $region100: #{forward.1} parent=1 // pred_region
      %192 = dma.done [#allocation18], 8960
    $region101: #{forward.1} parent=1 // pred_fallthru
      _
    // Predicated region
    $region102: #{forward.1} parent=1 // pred_check
      _
    $region103: #{forward.1} parent=1 // pred_check_branch
      %194 = sbr.rel (0) target = $region105
    $region104: #{forward.1} parent=1 // pred_region
      %195 = dma.done [#allocation18], 1024
    $region105: #{forward.1} parent=1 // pred_fallthru
      _
    %v196 = vld [vmem:[#allocation2] sm:$0xff]
    %v197 = vld [vmem:[#allocation2 + $0x8] sm:$0xff]
    %v198 = vld [vmem:[#allocation2 + $0x10] sm:$0xff]
    %v199 = vld [vmem:[#allocation2 + $0x18] sm:$0xff]
    %v200 = vld [vmem:[#allocation2 + $0x20] sm:$0xff]
    %v201 = vld [vmem:[#allocation5] sm:$0xff]
    %v202 = vld [vmem:[#allocation5 + $0x8] sm:$0xff]
    %v203 = vld [vmem:[#allocation5 + $0x10] sm:$0x3]
    %vm204 = vcmask 326656
    %v206 = vsel %vm204, %v201, 0
    %v209 = vsel %vm204, %v202, 0
    %v212 = vsel %vm204, %v203, 0
    %214 = vmatprep.subr.mxu0 0.0
    %215 = vmatpush1.msra.mxu0 %v196
    %216 = vmatprep.subr.mxu0 0.0
    %217 = vmatpush1.msra.mxu0 %v197
    %218 = vmatprep.subr.mxu0 0.0
    %219 = vmatpush1.msra.mxu0 %v198
    %220 = vmatprep.subr.mxu0 0.0
    %221 = vmatpush1.msra.mxu0 %v199
    %222 = vmatprep.subr.mxu0 0.0
    %223 = vmatpush1.msra.mxu0 %v200
    %224 = vmatprep.subr.mxu0 0.0
    %225 = vmatpush1.msra.mxu0 0.0
    %226 = vmatprep.subr.mxu0 0.0
    %227 = vmatpush1.msra.mxu0 0.0
    %228 = vmatprep.subr.mxu0 0.0
    %229 = vmatpush1.msra.mxu0 0.0
    %230 = vmatprep.subr.mxu0 0.0
    %231 = vmatpush1.msra.mxu0 0.0
    %232 = vmatprep.subr.mxu0 0.0
    %233 = vmatpush1.msra.mxu0 0.0
    %234 = vmatprep.subr.mxu0 0.0
    %235 = vmatpush1.msra.mxu0 0.0
    %236 = vmatprep.subr.mxu0 0.0
    %237 = vmatpush1.msra.mxu0 0.0
    %238 = vmatprep.subr.mxu0 0.0
    %239 = vmatpush1.msra.mxu0 0.0
    %240 = vmatprep.subr.mxu0 0.0
    %241 = vmatpush1.msra.mxu0 0.0
    %242 = vmatprep.subr.mxu0 0.0
    %243 = vmatpush1.msra.mxu0 0.0
    %244 = vmatprep.subr.mxu0 0.0
    %245 = vmatpush1.msra.mxu0 0.0
    %246 = vmatprep.subr.mxu0 0.0
    %247 = vmatpush1.msra.mxu0 0.0
    %248 = vmatprep.subr.mxu0 0.0
    %249 = vmatpush1.msra.mxu0 0.0
    %250 = vmatprep.subr.mxu0 0.0
    %251 = vmatpush1.msra.mxu0 0.0
    %252 = vmatprep.subr.mxu0 0.0
    %253 = vmatpush1.msra.mxu0 0.0
    %254 = vmatprep.subr.mxu0 0.0
    %255 = vmatpush1.msra.mxu0 0.0
    %256 = vmatprep.subr.mxu0 0.0
    %257 = vmatpush1.msra.mxu0 0.0
    %258 = vmatprep.subr.mxu0 0.0
    %259 = vmatpush1.msra.mxu0 0.0
    %260 = vmatprep.subr.mxu0 0.0
    %261 = vmatpush1.msra.mxu0 0.0
    %262 = vmatprep.subr.mxu0 0.0
    %263 = vmatpush1.msra.mxu0 0.0
    %264 = vmatprep.subr.mxu0 0.0
    %265 = vmatpush1.msra.mxu0 0.0
    %266 = vmatprep.subr.mxu0 0.0
    %267 = vmatpush1.msra.mxu0 0.0
    %268 = vmatprep.subr.mxu0 0.0
    %269 = vmatpush1.msra.mxu0 0.0
    %270 = vmatprep.subr.mxu0 0.0
    %271 = vmatpush1.msra.mxu0 0.0
    %272 = vmatprep.subr.mxu0 0.0
    %273 = vmatpush1.msra.mxu0 0.0
    %274 = vmatprep.subr.mxu0 0.0
    %275 = vmatpush1.msra.mxu0 0.0
    %276 = vmatprep.subr.mxu0 0.0
    %277 = vmatpush1.msra.mxu0 0.0
    %278 = vmatprep.mubr.f32.mxu0 0.0
    %279 = vmatmul.mubr.f32.gmra.mrb[0].mxu0 %v206
    %v280 = vpop.f32.mrb[0].mxu0
    %v281 = vadd.f32 0.0, %v280
    %v282 = vpop.f32.mrb[0].mxu0
    %283 = vmatprep.mubr.f32.mxu0 0.0
    %284 = vmatmul.mubr.f32.gmra.mrb[0].mxu0 %v209
    %v285 = vpop.f32.mrb[0].mxu0
    %v286 = vadd.f32 0.0, %v285
    %v287 = vpop.f32.mrb[0].mxu0
    %288 = vmatprep.mubr.f32.mxu0 0.0
    %289 = vmatmul.mubr.f32.gmra.mrb[0].mxu0 %v212
    %v290 = vpop.f32.mrb[0].mxu0
    %v291 = vadd.f32 0.0, %v290
    %v292 = vpop.f32.mrb[0].mxu0
    %293 = vdwg.mxu0
    %v294 = vld [vmem:[#allocation7] sm:$0xff]
    %v295 = vld [vmem:[#allocation7 + $0x8] sm:$0xff]
    %v296 = vld [vmem:[#allocation7 + $0x10] sm:$0xff]
    %v297 = vld [vmem:[#allocation7 + $0x18] sm:$0xff]
    %v298 = vld [vmem:[#allocation7 + $0x20] sm:$0xff]
    %v299 = vld [vmem:[#allocation7 + $0x28] sm:$0xff]
    %v300 = vld [vmem:[#allocation7 + $0x30] sm:$0xff]
    %v301 = vld [vmem:[#allocation7 + $0x38] sm:$0xff]
    %v302 = vld [vmem:[#allocation7 + $0x40] sm:$0xff]
    %v303 = vld [vmem:[#allocation7 + $0x48] sm:$0xff]
    %v304 = vld [vmem:[#allocation7 + $0x50] sm:$0xff]
    %v305 = vld [vmem:[#allocation7 + $0x58] sm:$0xff]
    %v306 = vld [vmem:[#allocation7 + $0x60] sm:$0xff]
    %v307 = vld [vmem:[#allocation7 + $0x68] sm:$0xff]
    %v308 = vld [vmem:[#allocation7 + $0x70] sm:$0xff]
    %s309 = scalar_lea.vmem [#allocation5], 24
    %v310 = vld [vmem:[%s309] sm:$0xff]
    %v311 = vld [vmem:[%s309 + $0x8] sm:$0xff]
    %v312 = vld [vmem:[%s309 + $0x10] sm:$0x3]
    %v314 = vsel %vm204, %v310, 0
    %v317 = vsel %vm204, %v311, 0
    %v320 = vsel %vm204, %v312, 0
    %322 = vmatprep.subr.mxu0 0.0
    %323 = vmatpush1.msra.mxu0 %v196
    %324 = vmatprep.subr.mxu0 0.0
    %325 = vmatpush1.msra.mxu0 %v197
    %326 = vmatprep.subr.mxu0 0.0
    %327 = vmatpush1.msra.mxu0 %v198
    %328 = vmatprep.subr.mxu0 0.0
    %329 = vmatpush1.msra.mxu0 %v199
    %330 = vmatprep.subr.mxu0 0.0
    %331 = vmatpush1.msra.mxu0 %v200
    %332 = vmatprep.subr.mxu0 0.0
    %333 = vmatpush1.msra.mxu0 0.0
    %334 = vmatprep.subr.mxu0 0.0
    %335 = vmatpush1.msra.mxu0 0.0
    %336 = vmatprep.subr.mxu0 0.0
    %337 = vmatpush1.msra.mxu0 0.0
    %338 = vmatprep.subr.mxu0 0.0
    %339 = vmatpush1.msra.mxu0 0.0
    %340 = vmatprep.subr.mxu0 0.0
    %341 = vmatpush1.msra.mxu0 0.0
    %342 = vmatprep.subr.mxu0 0.0
    %343 = vmatpush1.msra.mxu0 0.0
    %344 = vmatprep.subr.mxu0 0.0
    %345 = vmatpush1.msra.mxu0 0.0
    %346 = vmatprep.subr.mxu0 0.0
    %347 = vmatpush1.msra.mxu0 0.0
    %348 = vmatprep.subr.mxu0 0.0
    %349 = vmatpush1.msra.mxu0 0.0
    %350 = vmatprep.subr.mxu0 0.0
    %351 = vmatpush1.msra.mxu0 0.0
    %352 = vmatprep.subr.mxu0 0.0
    %353 = vmatpush1.msra.mxu0 0.0
    %354 = vmatprep.subr.mxu0 0.0
    %355 = vmatpush1.msra.mxu0 0.0
    %356 = vmatprep.subr.mxu0 0.0
    %357 = vmatpush1.msra.mxu0 0.0
    %358 = vmatprep.subr.mxu0 0.0
    %359 = vmatpush1.msra.mxu0 0.0
    %360 = vmatprep.subr.mxu0 0.0
    %361 = vmatpush1.msra.mxu0 0.0
    %362 = vmatprep.subr.mxu0 0.0
    %363 = vmatpush1.msra.mxu0 0.0
    %364 = vmatprep.subr.mxu0 0.0
    %365 = vmatpush1.msra.mxu0 0.0
    %366 = vmatprep.subr.mxu0 0.0
    %367 = vmatpush1.msra.mxu0 0.0
    %368 = vmatprep.subr.mxu0 0.0
    %369 = vmatpush1.msra.mxu0 0.0
    %370 = vmatprep.subr.mxu0 0.0
    %371 = vmatpush1.msra.mxu0 0.0
    %372 = vmatprep.subr.mxu0 0.0
    %373 = vmatpush1.msra.mxu0 0.0
    %374 = vmatprep.subr.mxu0 0.0
    %375 = vmatpush1.msra.mxu0 0.0
    %376 = vmatprep.subr.mxu0 0.0
    %377 = vmatpush1.msra.mxu0 0.0
    %378 = vmatprep.subr.mxu0 0.0
    %379 = vmatpush1.msra.mxu0 0.0
    %380 = vmatprep.subr.mxu0 0.0
    %381 = vmatpush1.msra.mxu0 0.0
    %382 = vmatprep.subr.mxu0 0.0
    %383 = vmatpush1.msra.mxu0 0.0
    %384 = vmatprep.subr.mxu0 0.0
    %385 = vmatpush1.msra.mxu0 0.0
    %386 = vmatprep.mubr.f32.mxu0 0.0
    %387 = vmatmul.mubr.f32.gmra.mrb[0].mxu0 %v314
    %v388 = vpop.f32.mrb[0].mxu0
    %v389 = vadd.f32 0.0, %v388
    %v390 = vpop.f32.mrb[0].mxu0
    %391 = vmatprep.mubr.f32.mxu0 0.0
    %392 = vmatmul.mubr.f32.gmra.mrb[0].mxu0 %v317
    %v393 = vpop.f32.mrb[0].mxu0
    %v394 = vadd.f32 0.0, %v393
    %v395 = vpop.f32.mrb[0].mxu0
    %396 = vmatprep.mubr.f32.mxu0 0.0
    %397 = vmatmul.mubr.f32.gmra.mrb[0].mxu0 %v320
    %v398 = vpop.f32.mrb[0].mxu0
    %v399 = vadd.f32 0.0, %v398
    %v400 = vpop.f32.mrb[0].mxu0
    %401 = vdwg.mxu0
    %s402 = scalar_lea.vmem [#allocation7], 120
    %v403 = vld [vmem:[%s402] sm:$0xff]
    %v404 = vld [vmem:[%s402 + $0x8] sm:$0xff]
    %v405 = vld [vmem:[%s402 + $0x10] sm:$0xff]
    %v406 = vld [vmem:[%s402 + $0x18] sm:$0xff]
    %v407 = vld [vmem:[%s402 + $0x20] sm:$0xff]
    %v408 = vld [vmem:[%s402 + $0x28] sm:$0xff]
    %v409 = vld [vmem:[%s402 + $0x30] sm:$0xff]
    %v410 = vld [vmem:[%s402 + $0x38] sm:$0xff]
    %v411 = vld [vmem:[%s402 + $0x40] sm:$0xff]
    %v412 = vld [vmem:[%s402 + $0x48] sm:$0xff]
    %v413 = vld [vmem:[%s402 + $0x50] sm:$0xff]
    %v414 = vld [vmem:[%s402 + $0x58] sm:$0xff]
    %v415 = vld [vmem:[%s402 + $0x60] sm:$0xff]
    %v416 = vld [vmem:[%s402 + $0x68] sm:$0xff]
    %v417 = vld [vmem:[%s402 + $0x70] sm:$0xff]
    %v419 = vsel %vm204, %v389, 0
    %v422 = vsel %vm204, %v394, 0
    %v425 = vsel %vm204, %v399, 0
    %427 = vmatprep.subr.mxu0 %v404
    %428 = vmatpush1.msra.mxu0 %v403
    %429 = vmatprep.subr.mxu0 %v407
    %430 = vmatpush1.msra.mxu0 %v406
    %431 = vmatprep.subr.mxu0 %v410
    %432 = vmatpush1.msra.mxu0 %v409
    %433 = vmatprep.subr.mxu0 %v413
    %434 = vmatpush1.msra.mxu0 %v412
    %435 = vmatprep.subr.mxu0 %v416
    %436 = vmatpush1.msra.mxu0 %v415
    %437 = vmatprep.subr.mxu0 0.0
    %438 = vmatpush1.msra.mxu0 0.0
    %439 = vmatprep.subr.mxu0 0.0
    %440 = vmatpush1.msra.mxu0 0.0
    %441 = vmatprep.subr.mxu0 0.0
    %442 = vmatpush1.msra.mxu0 0.0
    %443 = vmatprep.subr.mxu0 0.0
    %444 = vmatpush1.msra.mxu0 0.0
    %445 = vmatprep.subr.mxu0 0.0
    %446 = vmatpush1.msra.mxu0 0.0
    %447 = vmatprep.subr.mxu0 0.0
    %448 = vmatpush1.msra.mxu0 0.0
    %449 = vmatprep.subr.mxu0 0.0
    %450 = vmatpush1.msra.mxu0 0.0
    %451 = vmatprep.subr.mxu0 0.0
    %452 = vmatpush1.msra.mxu0 0.0
    %453 = vmatprep.subr.mxu0 0.0
    %454 = vmatpush1.msra.mxu0 0.0
    %455 = vmatprep.subr.mxu0 0.0
    %456 = vmatpush1.msra.mxu0 0.0
    %457 = vmatprep.subr.mxu0 0.0
    %458 = vmatpush1.msra.mxu0 0.0
    %459 = vmatprep.subr.mxu0 0.0
    %460 = vmatpush1.msra.mxu0 0.0
    %461 = vmatprep.subr.mxu0 0.0
    %462 = vmatpush1.msra.mxu0 0.0
    %463 = vmatprep.subr.mxu0 0.0
    %464 = vmatpush1.msra.mxu0 0.0
    %465 = vmatprep.subr.mxu0 0.0
    %466 = vmatpush1.msra.mxu0 0.0
    %467 = vmatprep.subr.mxu0 0.0
    %468 = vmatpush1.msra.mxu0 0.0
    %469 = vmatprep.subr.mxu0 0.0
    %470 = vmatpush1.msra.mxu0 0.0
    %471 = vmatprep.subr.mxu0 0.0
    %472 = vmatpush1.msra.mxu0 0.0
    %473 = vmatprep.subr.mxu0 0.0
    %474 = vmatpush1.msra.mxu0 0.0
    %475 = vmatprep.subr.mxu0 0.0
    %476 = vmatpush1.msra.mxu0 0.0
    %477 = vmatprep.subr.mxu0 0.0
    %478 = vmatpush1.msra.mxu0 0.0
    %479 = vmatprep.subr.mxu0 0.0
    %480 = vmatpush1.msra.mxu0 0.0
    %481 = vmatprep.subr.mxu0 0.0
    %482 = vmatpush1.msra.mxu0 0.0
    %483 = vmatprep.subr.mxu0 0.0
    %484 = vmatpush1.msra.mxu0 0.0
    %485 = vmatprep.subr.mxu0 0.0
    %486 = vmatpush1.msra.mxu0 0.0
    %487 = vmatprep.subr.mxu0 0.0
    %488 = vmatpush1.msra.mxu0 0.0
    %489 = vmatprep.subr.mxu0 0.0
    %490 = vmatpush1.msra.mxu0 0.0
    %491 = vmatprep.mubr.f32.mxu0 0.0
    %492 = vmatmul.mubr.f32.gmra.mrb[0].mxu0 %v419
    %v493 = vpop.f32.mrb[0].mxu0
    %v494 = vadd.f32 0.0, %v493
    %v495 = vpop.f32.mrb[0].mxu0
    %v496 = vadd.f32 0.0, %v495
    %497 = vmatprep.mubr.f32.mxu0 0.0
    %498 = vmatmul.mubr.f32.gmra.mrb[0].mxu0 %v422
    %v499 = vpop.f32.mrb[0].mxu0
    %v500 = vadd.f32 0.0, %v499
    %v501 = vpop.f32.mrb[0].mxu0
    %v502 = vadd.f32 0.0, %v501
    %503 = vmatprep.mubr.f32.mxu0 0.0
    %504 = vmatmul.mubr.f32.gmra.mrb[0].mxu0 %v425
    %v505 = vpop.f32.mrb[0].mxu0
    %v506 = vadd.f32 0.0, %v505
    %v507 = vpop.f32.mrb[0].mxu0
    %v508 = vadd.f32 0.0, %v507
    %509 = vdwg.mxu0
    %510 = vmatprep.subr.mxu0 0.0
    %511 = vmatpush1.msra.mxu0 %v405
    %512 = vmatprep.subr.mxu0 0.0
    %513 = vmatpush1.msra.mxu0 %v408
    %514 = vmatprep.subr.mxu0 0.0
    %515 = vmatpush1.msra.mxu0 %v411
    %516 = vmatprep.subr.mxu0 0.0
    %517 = vmatpush1.msra.mxu0 %v414
    %518 = vmatprep.subr.mxu0 0.0
    %519 = vmatpush1.msra.mxu0 %v417
    %520 = vmatprep.subr.mxu0 0.0
    %521 = vmatpush1.msra.mxu0 0.0
    %522 = vmatprep.subr.mxu0 0.0
    %523 = vmatpush1.msra.mxu0 0.0
    %524 = vmatprep.subr.mxu0 0.0
    %525 = vmatpush1.msra.mxu0 0.0
    %526 = vmatprep.subr.mxu0 0.0
    %527 = vmatpush1.msra.mxu0 0.0
    %528 = vmatprep.subr.mxu0 0.0
    %529 = vmatpush1.msra.mxu0 0.0
    %530 = vmatprep.subr.mxu0 0.0
    %531 = vmatpush1.msra.mxu0 0.0
    %532 = vmatprep.subr.mxu0 0.0
    %533 = vmatpush1.msra.mxu0 0.0
    %534 = vmatprep.subr.mxu0 0.0
    %535 = vmatpush1.msra.mxu0 0.0
    %536 = vmatprep.subr.mxu0 0.0
    %537 = vmatpush1.msra.mxu0 0.0
    %538 = vmatprep.subr.mxu0 0.0
    %539 = vmatpush1.msra.mxu0 0.0
    %540 = vmatprep.subr.mxu0 0.0
    %541 = vmatpush1.msra.mxu0 0.0
    %542 = vmatprep.subr.mxu0 0.0
    %543 = vmatpush1.msra.mxu0 0.0
    %544 = vmatprep.subr.mxu0 0.0
    %545 = vmatpush1.msra.mxu0 0.0
    %546 = vmatprep.subr.mxu0 0.0
    %547 = vmatpush1.msra.mxu0 0.0
    %548 = vmatprep.subr.mxu0 0.0
    %549 = vmatpush1.msra.mxu0 0.0
    %550 = vmatprep.subr.mxu0 0.0
    %551 = vmatpush1.msra.mxu0 0.0
    %552 = vmatprep.subr.mxu0 0.0
    %553 = vmatpush1.msra.mxu0 0.0
    %554 = vmatprep.subr.mxu0 0.0
    %555 = vmatpush1.msra.mxu0 0.0
    %556 = vmatprep.subr.mxu0 0.0
    %557 = vmatpush1.msra.mxu0 0.0
    %558 = vmatprep.subr.mxu0 0.0
    %559 = vmatpush1.msra.mxu0 0.0
    %560 = vmatprep.subr.mxu0 0.0
    %561 = vmatpush1.msra.mxu0 0.0
    %562 = vmatprep.subr.mxu0 0.0
    %563 = vmatpush1.msra.mxu0 0.0
    %564 = vmatprep.subr.mxu0 0.0
    %565 = vmatpush1.msra.mxu0 0.0
    %566 = vmatprep.subr.mxu0 0.0
    %567 = vmatpush1.msra.mxu0 0.0
    %568 = vmatprep.subr.mxu0 0.0
    %569 = vmatpush1.msra.mxu0 0.0
    %570 = vmatprep.subr.mxu0 0.0
    %571 = vmatpush1.msra.mxu0 0.0
    %572 = vmatprep.subr.mxu0 0.0
    %573 = vmatpush1.msra.mxu0 0.0
    %574 = vmatprep.mubr.f32.mxu0 0.0
    %575 = vmatmul.mubr.f32.gmra.mrb[0].mxu0 %v419
    %v576 = vpop.f32.mrb[0].mxu0
    %v577 = vadd.f32 0.0, %v576
    %v578 = vpop.f32.mrb[0].mxu0
    %579 = vmatprep.mubr.f32.mxu0 0.0
    %580 = vmatmul.mubr.f32.gmra.mrb[0].mxu0 %v422
    %v581 = vpop.f32.mrb[0].mxu0
    %v582 = vadd.f32 0.0, %v581
    %v583 = vpop.f32.mrb[0].mxu0
    %584 = vmatprep.mubr.f32.mxu0 0.0
    %585 = vmatmul.mubr.f32.gmra.mrb[0].mxu0 %v425
    %v586 = vpop.f32.mrb[0].mxu0
    %v587 = vadd.f32 0.0, %v586
    %v588 = vpop.f32.mrb[0].mxu0
    %589 = vdwg.mxu0
    %v591 = vsel %vm204, %v281, 0
    %v594 = vsel %vm204, %v286, 0
    %v597 = vsel %vm204, %v291, 0
    %599 = vmatprep.subr.mxu0 %v295
    %600 = vmatpush1.msra.mxu0 %v294
    %601 = vmatprep.subr.mxu0 %v298
    %602 = vmatpush1.msra.mxu0 %v297
    %603 = vmatprep.subr.mxu0 %v301
    %604 = vmatpush1.msra.mxu0 %v300
    %605 = vmatprep.subr.mxu0 %v304
    %606 = vmatpush1.msra.mxu0 %v303
    %607 = vmatprep.subr.mxu0 %v307
    %608 = vmatpush1.msra.mxu0 %v306
    %609 = vmatprep.subr.mxu0 0.0
    %610 = vmatpush1.msra.mxu0 0.0
    %611 = vmatprep.subr.mxu0 0.0
    %612 = vmatpush1.msra.mxu0 0.0
    %613 = vmatprep.subr.mxu0 0.0
    %614 = vmatpush1.msra.mxu0 0.0
    %615 = vmatprep.subr.mxu0 0.0
    %616 = vmatpush1.msra.mxu0 0.0
    %617 = vmatprep.subr.mxu0 0.0
    %618 = vmatpush1.msra.mxu0 0.0
    %619 = vmatprep.subr.mxu0 0.0
    %620 = vmatpush1.msra.mxu0 0.0
    %621 = vmatprep.subr.mxu0 0.0
    %622 = vmatpush1.msra.mxu0 0.0
    %623 = vmatprep.subr.mxu0 0.0
    %624 = vmatpush1.msra.mxu0 0.0
    %625 = vmatprep.subr.mxu0 0.0
    %626 = vmatpush1.msra.mxu0 0.0
    %627 = vmatprep.subr.mxu0 0.0
    %628 = vmatpush1.msra.mxu0 0.0
    %629 = vmatprep.subr.mxu0 0.0
    %630 = vmatpush1.msra.mxu0 0.0
    %631 = vmatprep.subr.mxu0 0.0
    %632 = vmatpush1.msra.mxu0 0.0
    %633 = vmatprep.subr.mxu0 0.0
    %634 = vmatpush1.msra.mxu0 0.0
    %635 = vmatprep.subr.mxu0 0.0
    %636 = vmatpush1.msra.mxu0 0.0
    %637 = vmatprep.subr.mxu0 0.0
    %638 = vmatpush1.msra.mxu0 0.0
    %639 = vmatprep.subr.mxu0 0.0
    %640 = vmatpush1.msra.mxu0 0.0
    %641 = vmatprep.subr.mxu0 0.0
    %642 = vmatpush1.msra.mxu0 0.0
    %643 = vmatprep.subr.mxu0 0.0
    %644 = vmatpush1.msra.mxu0 0.0
    %645 = vmatprep.subr.mxu0 0.0
    %646 = vmatpush1.msra.mxu0 0.0
    %647 = vmatprep.subr.mxu0 0.0
    %648 = vmatpush1.msra.mxu0 0.0
    %649 = vmatprep.subr.mxu0 0.0
    %650 = vmatpush1.msra.mxu0 0.0
    %651 = vmatprep.subr.mxu0 0.0
    %652 = vmatpush1.msra.mxu0 0.0
    %653 = vmatprep.subr.mxu0 0.0
    %654 = vmatpush1.msra.mxu0 0.0
    %655 = vmatprep.subr.mxu0 0.0
    %656 = vmatpush1.msra.mxu0 0.0
    %657 = vmatprep.subr.mxu0 0.0
    %658 = vmatpush1.msra.mxu0 0.0
    %659 = vmatprep.subr.mxu0 0.0
    %660 = vmatpush1.msra.mxu0 0.0
    %661 = vmatprep.subr.mxu0 0.0
    %662 = vmatpush1.msra.mxu0 0.0
    %663 = vmatprep.mubr.f32.mxu0 0.0
    %664 = vmatmul.mubr.f32.gmra.mrb[0].mxu0 %v591
    %v665 = vpop.f32.mrb[0].mxu0
    %v666 = vadd.f32 %v494, %v665
    %v667 = vpop.f32.mrb[0].mxu0
    %v668 = vadd.f32 %v496, %v667
    %669 = vmatprep.mubr.f32.mxu0 0.0
    %670 = vmatmul.mubr.f32.gmra.mrb[0].mxu0 %v594
    %v671 = vpop.f32.mrb[0].mxu0
    %v672 = vadd.f32 %v500, %v671
    %v673 = vpop.f32.mrb[0].mxu0
    %v674 = vadd.f32 %v502, %v673
    %675 = vmatprep.mubr.f32.mxu0 0.0
    %676 = vmatmul.mubr.f32.gmra.mrb[0].mxu0 %v597
    %v677 = vpop.f32.mrb[0].mxu0
    %v678 = vadd.f32 %v506, %v677
    %v679 = vpop.f32.mrb[0].mxu0
    %v680 = vadd.f32 %v508, %v679
    %681 = vdwg.mxu0
    %682 = vmatprep.subr.mxu0 0.0
    %683 = vmatpush1.msra.mxu0 %v296
    %684 = vmatprep.subr.mxu0 0.0
    %685 = vmatpush1.msra.mxu0 %v299
    %686 = vmatprep.subr.mxu0 0.0
    %687 = vmatpush1.msra.mxu0 %v302
    %688 = vmatprep.subr.mxu0 0.0
    %689 = vmatpush1.msra.mxu0 %v305
    %690 = vmatprep.subr.mxu0 0.0
    %691 = vmatpush1.msra.mxu0 %v308
    %692 = vmatprep.subr.mxu0 0.0
    %693 = vmatpush1.msra.mxu0 0.0
    %694 = vmatprep.subr.mxu0 0.0
    %695 = vmatpush1.msra.mxu0 0.0
    %696 = vmatprep.subr.mxu0 0.0
    %697 = vmatpush1.msra.mxu0 0.0
    %698 = vmatprep.subr.mxu0 0.0
    %699 = vmatpush1.msra.mxu0 0.0
    %700 = vmatprep.subr.mxu0 0.0
    %701 = vmatpush1.msra.mxu0 0.0
    %702 = vmatprep.subr.mxu0 0.0
    %703 = vmatpush1.msra.mxu0 0.0
    %704 = vmatprep.subr.mxu0 0.0
    %705 = vmatpush1.msra.mxu0 0.0
    %706 = vmatprep.subr.mxu0 0.0
    %707 = vmatpush1.msra.mxu0 0.0
    %708 = vmatprep.subr.mxu0 0.0
    %709 = vmatpush1.msra.mxu0 0.0
    %710 = vmatprep.subr.mxu0 0.0
    %711 = vmatpush1.msra.mxu0 0.0
    %712 = vmatprep.subr.mxu0 0.0
    %713 = vmatpush1.msra.mxu0 0.0
    %714 = vmatprep.subr.mxu0 0.0
    %715 = vmatpush1.msra.mxu0 0.0
    %716 = vmatprep.subr.mxu0 0.0
    %717 = vmatpush1.msra.mxu0 0.0
    %718 = vmatprep.subr.mxu0 0.0
    %719 = vmatpush1.msra.mxu0 0.0
    %720 = vmatprep.subr.mxu0 0.0
    %721 = vmatpush1.msra.mxu0 0.0
    %722 = vmatprep.subr.mxu0 0.0
    %723 = vmatpush1.msra.mxu0 0.0
    %724 = vmatprep.subr.mxu0 0.0
    %725 = vmatpush1.msra.mxu0 0.0
    %726 = vmatprep.subr.mxu0 0.0
    %727 = vmatpush1.msra.mxu0 0.0
    %728 = vmatprep.subr.mxu0 0.0
    %729 = vmatpush1.msra.mxu0 0.0
    %730 = vmatprep.subr.mxu0 0.0
    %731 = vmatpush1.msra.mxu0 0.0
    %732 = vmatprep.subr.mxu0 0.0
    %733 = vmatpush1.msra.mxu0 0.0
    %734 = vmatprep.subr.mxu0 0.0
    %735 = vmatpush1.msra.mxu0 0.0
    %736 = vmatprep.subr.mxu0 0.0
    %737 = vmatpush1.msra.mxu0 0.0
    %738 = vmatprep.subr.mxu0 0.0
    %739 = vmatpush1.msra.mxu0 0.0
    %740 = vmatprep.subr.mxu0 0.0
    %741 = vmatpush1.msra.mxu0 0.0
    %742 = vmatprep.subr.mxu0 0.0
    %743 = vmatpush1.msra.mxu0 0.0
    %744 = vmatprep.subr.mxu0 0.0
    %745 = vmatpush1.msra.mxu0 0.0
    %746 = vmatprep.mubr.f32.mxu0 0.0
    %747 = vmatmul.mubr.f32.gmra.mrb[0].mxu0 %v591
    %v748 = vpop.f32.mrb[0].mxu0
    %v749 = vadd.f32 %v577, %v748
    %v750 = vpop.f32.mrb[0].mxu0
    %751 = vmatprep.mubr.f32.mxu0 0.0
    %752 = vmatmul.mubr.f32.gmra.mrb[0].mxu0 %v594
    %v753 = vpop.f32.mrb[0].mxu0
    %v754 = vadd.f32 %v582, %v753
    %v755 = vpop.f32.mrb[0].mxu0
    %756 = vmatprep.mubr.f32.mxu0 0.0
    %757 = vmatmul.mubr.f32.gmra.mrb[0].mxu0 %v597
    %v758 = vpop.f32.mrb[0].mxu0
    %v759 = vadd.f32 %v587, %v758
    %v760 = vpop.f32.mrb[0].mxu0
    %761 = vdwg.mxu0
    %s762 = scalar_lea.vmem [#allocation5], 48
    %v763 = vld [vmem:[%s762] sm:$0xff]
    %v764 = vld [vmem:[%s762 + $0x8] sm:$0xff]
    %v765 = vld [vmem:[%s762 + $0x10] sm:$0x3]
    %v767 = vsel %vm204, %v763, 0
    %v770 = vsel %vm204, %v764, 0
    %v773 = vsel %vm204, %v765, 0
    %775 = vmatprep.subr.mxu0 0.0
    %776 = vmatpush1.msra.mxu0 %v196
    %777 = vmatprep.subr.mxu0 0.0
    %778 = vmatpush1.msra.mxu0 %v197
    %779 = vmatprep.subr.mxu0 0.0
    %780 = vmatpush1.msra.mxu0 %v198
    %781 = vmatprep.subr.mxu0 0.0
    %782 = vmatpush1.msra.mxu0 %v199
    %783 = vmatprep.subr.mxu0 0.0
    %784 = vmatpush1.msra.mxu0 %v200
    %785 = vmatprep.subr.mxu0 0.0
    %786 = vmatpush1.msra.mxu0 0.0
    %787 = vmatprep.subr.mxu0 0.0
    %788 = vmatpush1.msra.mxu0 0.0
    %789 = vmatprep.subr.mxu0 0.0
    %790 = vmatpush1.msra.mxu0 0.0
    %791 = vmatprep.subr.mxu0 0.0
    %792 = vmatpush1.msra.mxu0 0.0
    %793 = vmatprep.subr.mxu0 0.0
    %794 = vmatpush1.msra.mxu0 0.0
    %795 = vmatprep.subr.mxu0 0.0
    %796 = vmatpush1.msra.mxu0 0.0
    %797 = vmatprep.subr.mxu0 0.0
    %798 = vmatpush1.msra.mxu0 0.0
    %799 = vmatprep.subr.mxu0 0.0
    %800 = vmatpush1.msra.mxu0 0.0
    %801 = vmatprep.subr.mxu0 0.0
    %802 = vmatpush1.msra.mxu0 0.0
    %803 = vmatprep.subr.mxu0 0.0
    %804 = vmatpush1.msra.mxu0 0.0
    %805 = vmatprep.subr.mxu0 0.0
    %806 = vmatpush1.msra.mxu0 0.0
    %807 = vmatprep.subr.mxu0 0.0
    %808 = vmatpush1.msra.mxu0 0.0
    %809 = vmatprep.subr.mxu0 0.0
    %810 = vmatpush1.msra.mxu0 0.0
    %811 = vmatprep.subr.mxu0 0.0
    %812 = vmatpush1.msra.mxu0 0.0
    %813 = vmatprep.subr.mxu0 0.0
    %814 = vmatpush1.msra.mxu0 0.0
    %815 = vmatprep.subr.mxu0 0.0
    %816 = vmatpush1.msra.mxu0 0.0
    %817 = vmatprep.subr.mxu0 0.0
    %818 = vmatpush1.msra.mxu0 0.0
    %819 = vmatprep.subr.mxu0 0.0
    %820 = vmatpush1.msra.mxu0 0.0
    %821 = vmatprep.subr.mxu0 0.0
    %822 = vmatpush1.msra.mxu0 0.0
    %823 = vmatprep.subr.mxu0 0.0
    %824 = vmatpush1.msra.mxu0 0.0
    %825 = vmatprep.subr.mxu0 0.0
    %826 = vmatpush1.msra.mxu0 0.0
    %827 = vmatprep.subr.mxu0 0.0
    %828 = vmatpush1.msra.mxu0 0.0
    %829 = vmatprep.subr.mxu0 0.0
    %830 = vmatpush1.msra.mxu0 0.0
    %831 = vmatprep.subr.mxu0 0.0
    %832 = vmatpush1.msra.mxu0 0.0
    %833 = vmatprep.subr.mxu0 0.0
    %834 = vmatpush1.msra.mxu0 0.0
    %835 = vmatprep.subr.mxu0 0.0
    %836 = vmatpush1.msra.mxu0 0.0
    %837 = vmatprep.subr.mxu0 0.0
    %838 = vmatpush1.msra.mxu0 0.0
    %839 = vmatprep.mubr.f32.mxu0 0.0
    %840 = vmatmul.mubr.f32.gmra.mrb[0].mxu0 %v767
    %v841 = vpop.f32.mrb[0].mxu0
    %v842 = vadd.f32 0.0, %v841
    %v843 = vpop.f32.mrb[0].mxu0
    %844 = vmatprep.mubr.f32.mxu0 0.0
    %845 = vmatmul.mubr.f32.gmra.mrb[0].mxu0 %v770
    %v846 = vpop.f32.mrb[0].mxu0
    %v847 = vadd.f32 0.0, %v846
    %v848 = vpop.f32.mrb[0].mxu0
    %849 = vmatprep.mubr.f32.mxu0 0.0
    %850 = vmatmul.mubr.f32.gmra.mrb[0].mxu0 %v773
    %v851 = vpop.f32.mrb[0].mxu0
    %v852 = vadd.f32 0.0, %v851
    %v853 = vpop.f32.mrb[0].mxu0
    %854 = vdwg.mxu0
    %s855 = scalar_lea.vmem [#allocation7], 240
    %v856 = vld [vmem:[%s855] sm:$0xff]
    %v857 = vld [vmem:[%s855 + $0x8] sm:$0xff]
    %v858 = vld [vmem:[%s855 + $0x10] sm:$0xff]
    %v859 = vld [vmem:[%s855 + $0x18] sm:$0xff]
    %v860 = vld [vmem:[%s855 + $0x20] sm:$0xff]
    %v861 = vld [vmem:[%s855 + $0x28] sm:$0xff]
    %v862 = vld [vmem:[%s855 + $0x30] sm:$0xff]
    %v863 = vld [vmem:[%s855 + $0x38] sm:$0xff]
    %v864 = vld [vmem:[%s855 + $0x40] sm:$0xff]
    %v865 = vld [vmem:[%s855 + $0x48] sm:$0xff]
    %v866 = vld [vmem:[%s855 + $0x50] sm:$0xff]
    %v867 = vld [vmem:[%s855 + $0x58] sm:$0xff]
    %v868 = vld [vmem:[%s855 + $0x60] sm:$0xff]
    %v869 = vld [vmem:[%s855 + $0x68] sm:$0xff]
    %v870 = vld [vmem:[%s855 + $0x70] sm:$0xff]
    %v872 = vsel %vm204, %v842, 0
    %v875 = vsel %vm204, %v847, 0
    %v878 = vsel %vm204, %v852, 0
    %880 = vmatprep.subr.mxu0 %v857
    %881 = vmatpush1.msra.mxu0 %v856
    %882 = vmatprep.subr.mxu0 %v860
    %883 = vmatpush1.msra.mxu0 %v859
    %884 = vmatprep.subr.mxu0 %v863
    %885 = vmatpush1.msra.mxu0 %v862
    %886 = vmatprep.subr.mxu0 %v866
    %887 = vmatpush1.msra.mxu0 %v865
    %888 = vmatprep.subr.mxu0 %v869
    %889 = vmatpush1.msra.mxu0 %v868
    %890 = vmatprep.subr.mxu0 0.0
    %891 = vmatpush1.msra.mxu0 0.0
    %892 = vmatprep.subr.mxu0 0.0
    %893 = vmatpush1.msra.mxu0 0.0
    %894 = vmatprep.subr.mxu0 0.0
    %895 = vmatpush1.msra.mxu0 0.0
    %896 = vmatprep.subr.mxu0 0.0
    %897 = vmatpush1.msra.mxu0 0.0
    %898 = vmatprep.subr.mxu0 0.0
    %899 = vmatpush1.msra.mxu0 0.0
    %900 = vmatprep.subr.mxu0 0.0
    %901 = vmatpush1.msra.mxu0 0.0
    %902 = vmatprep.subr.mxu0 0.0
    %903 = vmatpush1.msra.mxu0 0.0
    %904 = vmatprep.subr.mxu0 0.0
    %905 = vmatpush1.msra.mxu0 0.0
    %906 = vmatprep.subr.mxu0 0.0
    %907 = vmatpush1.msra.mxu0 0.0
    %908 = vmatprep.subr.mxu0 0.0
    %909 = vmatpush1.msra.mxu0 0.0
    %910 = vmatprep.subr.mxu0 0.0
    %911 = vmatpush1.msra.mxu0 0.0
    %912 = vmatprep.subr.mxu0 0.0
    %913 = vmatpush1.msra.mxu0 0.0
    %914 = vmatprep.subr.mxu0 0.0
    %915 = vmatpush1.msra.mxu0 0.0
    %916 = vmatprep.subr.mxu0 0.0
    %917 = vmatpush1.msra.mxu0 0.0
    %918 = vmatprep.subr.mxu0 0.0
    %919 = vmatpush1.msra.mxu0 0.0
    %920 = vmatprep.subr.mxu0 0.0
    %921 = vmatpush1.msra.mxu0 0.0
    %922 = vmatprep.subr.mxu0 0.0
    %923 = vmatpush1.msra.mxu0 0.0
    %924 = vmatprep.subr.mxu0 0.0
    %925 = vmatpush1.msra.mxu0 0.0
    %926 = vmatprep.subr.mxu0 0.0
    %927 = vmatpush1.msra.mxu0 0.0
    %928 = vmatprep.subr.mxu0 0.0
    %929 = vmatpush1.msra.mxu0 0.0
    %930 = vmatprep.subr.mxu0 0.0
    %931 = vmatpush1.msra.mxu0 0.0
    %932 = vmatprep.subr.mxu0 0.0
    %933 = vmatpush1.msra.mxu0 0.0
    %934 = vmatprep.subr.mxu0 0.0
    %935 = vmatpush1.msra.mxu0 0.0
    %936 = vmatprep.subr.mxu0 0.0
    %937 = vmatpush1.msra.mxu0 0.0
    %938 = vmatprep.subr.mxu0 0.0
    %939 = vmatpush1.msra.mxu0 0.0
    %940 = vmatprep.subr.mxu0 0.0
    %941 = vmatpush1.msra.mxu0 0.0
    %942 = vmatprep.subr.mxu0 0.0
    %943 = vmatpush1.msra.mxu0 0.0
    %944 = vmatprep.mubr.f32.mxu0 0.0
    %945 = vmatmul.mubr.f32.gmra.mrb[0].mxu0 %v872
    %v946 = vpop.f32.mrb[0].mxu0
    %v947 = vadd.f32 0.0, %v946
    %v948 = vpop.f32.mrb[0].mxu0
    %v949 = vadd.f32 0.0, %v948
    %950 = vmatprep.mubr.f32.mxu0 0.0
    %951 = vmatmul.mubr.f32.gmra.mrb[0].mxu0 %v875
    %v952 = vpop.f32.mrb[0].mxu0
    %v953 = vadd.f32 0.0, %v952
    %v954 = vpop.f32.mrb[0].mxu0
    %v955 = vadd.f32 0.0, %v954
    %956 = vmatprep.mubr.f32.mxu0 0.0
    %957 = vmatmul.mubr.f32.gmra.mrb[0].mxu0 %v878
    %v958 = vpop.f32.mrb[0].mxu0
    %v959 = vadd.f32 0.0, %v958
    %v960 = vpop.f32.mrb[0].mxu0
    %v961 = vadd.f32 0.0, %v960
    %962 = vdwg.mxu0
    %963 = vmatprep.subr.mxu0 0.0
    %964 = vmatpush1.msra.mxu0 %v858
    %965 = vmatprep.subr.mxu0 0.0
    %966 = vmatpush1.msra.mxu0 %v861
    %967 = vmatprep.subr.mxu0 0.0
    %968 = vmatpush1.msra.mxu0 %v864
    %969 = vmatprep.subr.mxu0 0.0
    %970 = vmatpush1.msra.mxu0 %v867
    %971 = vmatprep.subr.mxu0 0.0
    %972 = vmatpush1.msra.mxu0 %v870
    %973 = vmatprep.subr.mxu0 0.0
    %974 = vmatpush1.msra.mxu0 0.0
    %975 = vmatprep.subr.mxu0 0.0
    %976 = vmatpush1.msra.mxu0 0.0
    %977 = vmatprep.subr.mxu0 0.0
    %978 = vmatpush1.msra.mxu0 0.0
    %979 = vmatprep.subr.mxu0 0.0
    %980 = vmatpush1.msra.mxu0 0.0
    %981 = vmatprep.subr.mxu0 0.0
    %982 = vmatpush1.msra.mxu0 0.0
    %983 = vmatprep.subr.mxu0 0.0
    %984 = vmatpush1.msra.mxu0 0.0
    %985 = vmatprep.subr.mxu0 0.0
    %986 = vmatpush1.msra.mxu0 0.0
    %987 = vmatprep.subr.mxu0 0.0
    %988 = vmatpush1.msra.mxu0 0.0
    %989 = vmatprep.subr.mxu0 0.0
    %990 = vmatpush1.msra.mxu0 0.0
    %991 = vmatprep.subr.mxu0 0.0
    %992 = vmatpush1.msra.mxu0 0.0
    %993 = vmatprep.subr.mxu0 0.0
    %994 = vmatpush1.msra.mxu0 0.0
    %995 = vmatprep.subr.mxu0 0.0
    %996 = vmatpush1.msra.mxu0 0.0
    %997 = vmatprep.subr.mxu0 0.0
    %998 = vmatpush1.msra.mxu0 0.0
    %999 = vmatprep.subr.mxu0 0.0
    %1000 = vmatpush1.msra.mxu0 0.0
    %1001 = vmatprep.subr.mxu0 0.0
    %1002 = vmatpush1.msra.mxu0 0.0
    %1003 = vmatprep.subr.mxu0 0.0
    %1004 = vmatpush1.msra.mxu0 0.0
    %1005 = vmatprep.subr.mxu0 0.0
    %1006 = vmatpush1.msra.mxu0 0.0
    %1007 = vmatprep.subr.mxu0 0.0
    %1008 = vmatpush1.msra.mxu0 0.0
    %1009 = vmatprep.subr.mxu0 0.0
    %1010 = vmatpush1.msra.mxu0 0.0
    %1011 = vmatprep.subr.mxu0 0.0
    %1012 = vmatpush1.msra.mxu0 0.0
    %1013 = vmatprep.subr.mxu0 0.0
    %1014 = vmatpush1.msra.mxu0 0.0
    %1015 = vmatprep.subr.mxu0 0.0
    %1016 = vmatpush1.msra.mxu0 0.0
    %1017 = vmatprep.subr.mxu0 0.0
    %1018 = vmatpush1.msra.mxu0 0.0
    %1019 = vmatprep.subr.mxu0 0.0
    %1020 = vmatpush1.msra.mxu0 0.0
    %1021 = vmatprep.subr.mxu0 0.0
    %1022 = vmatpush1.msra.mxu0 0.0
    %1023 = vmatprep.subr.mxu0 0.0
    %1024 = vmatpush1.msra.mxu0 0.0
    %1025 = vmatprep.subr.mxu0 0.0
    %1026 = vmatpush1.msra.mxu0 0.0
    %1027 = vmatprep.mubr.f32.mxu0 0.0
    %1028 = vmatmul.mubr.f32.gmra.mrb[0].mxu0 %v872
    %v1029 = vpop.f32.mrb[0].mxu0
    %v1030 = vadd.f32 0.0, %v1029
    %v1031 = vpop.f32.mrb[0].mxu0
    %1032 = vmatprep.mubr.f32.mxu0 0.0
    %1033 = vmatmul.mubr.f32.gmra.mrb[0].mxu0 %v875
    %v1034 = vpop.f32.mrb[0].mxu0
    %v1035 = vadd.f32 0.0, %v1034
    %v1036 = vpop.f32.mrb[0].mxu0
    %1037 = vmatprep.mubr.f32.mxu0 0.0
    %1038 = vmatmul.mubr.f32.gmra.mrb[0].mxu0 %v878
    %v1039 = vpop.f32.mrb[0].mxu0
    %v1040 = vadd.f32 0.0, %v1039
    %v1041 = vpop.f32.mrb[0].mxu0
    %1042 = vdwg.mxu0
    %v1043 = vadd.f32 %v666, %v947
    %v1044 = vadd.f32 %v668, %v949
    %v1045 = vadd.f32 %v749, %v1030
    %v1046 = vadd.f32 %v672, %v953
    %v1047 = vadd.f32 %v674, %v955
    %v1048 = vadd.f32 %v754, %v1035
    %v1049 = vadd.f32 %v678, %v959
    %v1050 = vadd.f32 %v680, %v961
    %v1051 = vadd.f32 %v759, %v1040
    %s1052 = scalar_lea.vmem [#allocation5], 72
    %v1053 = vld [vmem:[%s1052] sm:$0xff]
    %v1054 = vld [vmem:[%s1052 + $0x8] sm:$0xff]
    %v1055 = vld [vmem:[%s1052 + $0x10] sm:$0x3]
    %v1057 = vsel %vm204, %v1053, 0
    %v1060 = vsel %vm204, %v1054, 0
    %v1063 = vsel %vm204, %v1055, 0
    %1065 = vmatprep.subr.mxu0 0.0
    %1066 = vmatpush1.msra.mxu0 %v196
    %1067 = vmatprep.subr.mxu0 0.0
    %1068 = vmatpush1.msra.mxu0 %v197
    %1069 = vmatprep.subr.mxu0 0.0
    %1070 = vmatpush1.msra.mxu0 %v198
    %1071 = vmatprep.subr.mxu0 0.0
    %1072 = vmatpush1.msra.mxu0 %v199
    %1073 = vmatprep.subr.mxu0 0.0
    %1074 = vmatpush1.msra.mxu0 %v200
    %1075 = vmatprep.subr.mxu0 0.0
    %1076 = vmatpush1.msra.mxu0 0.0
    %1077 = vmatprep.subr.mxu0 0.0
    %1078 = vmatpush1.msra.mxu0 0.0
    %1079 = vmatprep.subr.mxu0 0.0
    %1080 = vmatpush1.msra.mxu0 0.0
    %1081 = vmatprep.subr.mxu0 0.0
    %1082 = vmatpush1.msra.mxu0 0.0
    %1083 = vmatprep.subr.mxu0 0.0
    %1084 = vmatpush1.msra.mxu0 0.0
    %1085 = vmatprep.subr.mxu0 0.0
    %1086 = vmatpush1.msra.mxu0 0.0
    %1087 = vmatprep.subr.mxu0 0.0
    %1088 = vmatpush1.msra.mxu0 0.0
    %1089 = vmatprep.subr.mxu0 0.0
    %1090 = vmatpush1.msra.mxu0 0.0
    %1091 = vmatprep.subr.mxu0 0.0
    %1092 = vmatpush1.msra.mxu0 0.0
    %1093 = vmatprep.subr.mxu0 0.0
    %1094 = vmatpush1.msra.mxu0 0.0
    %1095 = vmatprep.subr.mxu0 0.0
    %1096 = vmatpush1.msra.mxu0 0.0
    %1097 = vmatprep.subr.mxu0 0.0
    %1098 = vmatpush1.msra.mxu0 0.0
    %1099 = vmatprep.subr.mxu0 0.0
    %1100 = vmatpush1.msra.mxu0 0.0
    %1101 = vmatprep.subr.mxu0 0.0
    %1102 = vmatpush1.msra.mxu0 0.0
    %1103 = vmatprep.subr.mxu0 0.0
    %1104 = vmatpush1.msra.mxu0 0.0
    %1105 = vmatprep.subr.mxu0 0.0
    %1106 = vmatpush1.msra.mxu0 0.0
    %1107 = vmatprep.subr.mxu0 0.0
    %1108 = vmatpush1.msra.mxu0 0.0
    %1109 = vmatprep.subr.mxu0 0.0
    %1110 = vmatpush1.msra.mxu0 0.0
    %1111 = vmatprep.subr.mxu0 0.0
    %1112 = vmatpush1.msra.mxu0 0.0
    %1113 = vmatprep.subr.mxu0 0.0
    %1114 = vmatpush1.msra.mxu0 0.0
    %1115 = vmatprep.subr.mxu0 0.0
    %1116 = vmatpush1.msra.mxu0 0.0
    %1117 = vmatprep.subr.mxu0 0.0
    %1118 = vmatpush1.msra.mxu0 0.0
    %1119 = vmatprep.subr.mxu0 0.0
    %1120 = vmatpush1.msra.mxu0 0.0
    %1121 = vmatprep.subr.mxu0 0.0
    %1122 = vmatpush1.msra.mxu0 0.0
    %1123 = vmatprep.subr.mxu0 0.0
    %1124 = vmatpush1.msra.mxu0 0.0
    %1125 = vmatprep.subr.mxu0 0.0
    %1126 = vmatpush1.msra.mxu0 0.0
    %1127 = vmatprep.subr.mxu0 0.0
    %1128 = vmatpush1.msra.mxu0 0.0
    %1129 = vmatprep.mubr.f32.mxu0 0.0
    %1130 = vmatmul.mubr.f32.gmra.mrb[0].mxu0 %v1057
    %v1131 = vpop.f32.mrb[0].mxu0
    %v1132 = vadd.f32 0.0, %v1131
    %v1133 = vpop.f32.mrb[0].mxu0
    %1134 = vmatprep.mubr.f32.mxu0 0.0
    %1135 = vmatmul.mubr.f32.gmra.mrb[0].mxu0 %v1060
    %v1136 = vpop.f32.mrb[0].mxu0
    %v1137 = vadd.f32 0.0, %v1136
    %v1138 = vpop.f32.mrb[0].mxu0
    %1139 = vmatprep.mubr.f32.mxu0 0.0
    %1140 = vmatmul.mubr.f32.gmra.mrb[0].mxu0 %v1063
    %v1141 = vpop.f32.mrb[0].mxu0
    %v1142 = vadd.f32 0.0, %v1141
    %v1143 = vpop.f32.mrb[0].mxu0
    %1144 = vdwg.mxu0
    %s1145 = scalar_lea.vmem [#allocation7], 360
    %v1146 = vld [vmem:[%s1145] sm:$0xff]
    %v1147 = vld [vmem:[%s1145 + $0x8] sm:$0xff]
    %v1148 = vld [vmem:[%s1145 + $0x10] sm:$0xff]
    %v1149 = vld [vmem:[%s1145 + $0x18] sm:$0xff]
    %v1150 = vld [vmem:[%s1145 + $0x20] sm:$0xff]
    %v1151 = vld [vmem:[%s1145 + $0x28] sm:$0xff]
    %v1152 = vld [vmem:[%s1145 + $0x30] sm:$0xff]
    %v1153 = vld [vmem:[%s1145 + $0x38] sm:$0xff]
    %v1154 = vld [vmem:[%s1145 + $0x40] sm:$0xff]
    %v1155 = vld [vmem:[%s1145 + $0x48] sm:$0xff]
    %v1156 = vld [vmem:[%s1145 + $0x50] sm:$0xff]
    %v1157 = vld [vmem:[%s1145 + $0x58] sm:$0xff]
    %v1158 = vld [vmem:[%s1145 + $0x60] sm:$0xff]
    %v1159 = vld [vmem:[%s1145 + $0x68] sm:$0xff]
    %v1160 = vld [vmem:[%s1145 + $0x70] sm:$0xff]
    %v1162 = vsel %vm204, %v1132, 0
    %v1165 = vsel %vm204, %v1137, 0
    %v1168 = vsel %vm204, %v1142, 0
    %1170 = vmatprep.subr.mxu0 %v1147
    %1171 = vmatpush1.msra.mxu0 %v1146
    %1172 = vmatprep.subr.mxu0 %v1150
    %1173 = vmatpush1.msra.mxu0 %v1149
    %1174 = vmatprep.subr.mxu0 %v1153
    %1175 = vmatpush1.msra.mxu0 %v1152
    %1176 = vmatprep.subr.mxu0 %v1156
    %1177 = vmatpush1.msra.mxu0 %v1155
    %1178 = vmatprep.subr.mxu0 %v1159
    %1179 = vmatpush1.msra.mxu0 %v1158
    %1180 = vmatprep.subr.mxu0 0.0
    %1181 = vmatpush1.msra.mxu0 0.0
    %1182 = vmatprep.subr.mxu0 0.0
    %1183 = vmatpush1.msra.mxu0 0.0
    %1184 = vmatprep.subr.mxu0 0.0
    %1185 = vmatpush1.msra.mxu0 0.0
    %1186 = vmatprep.subr.mxu0 0.0
    %1187 = vmatpush1.msra.mxu0 0.0
    %1188 = vmatprep.subr.mxu0 0.0
    %1189 = vmatpush1.msra.mxu0 0.0
    %1190 = vmatprep.subr.mxu0 0.0
    %1191 = vmatpush1.msra.mxu0 0.0
    %1192 = vmatprep.subr.mxu0 0.0
    %1193 = vmatpush1.msra.mxu0 0.0
    %1194 = vmatprep.subr.mxu0 0.0
    %1195 = vmatpush1.msra.mxu0 0.0
    %1196 = vmatprep.subr.mxu0 0.0
    %1197 = vmatpush1.msra.mxu0 0.0
    %1198 = vmatprep.subr.mxu0 0.0
    %1199 = vmatpush1.msra.mxu0 0.0
    %1200 = vmatprep.subr.mxu0 0.0
    %1201 = vmatpush1.msra.mxu0 0.0
    %1202 = vmatprep.subr.mxu0 0.0
    %1203 = vmatpush1.msra.mxu0 0.0
    %1204 = vmatprep.subr.mxu0 0.0
    %1205 = vmatpush1.msra.mxu0 0.0
    %1206 = vmatprep.subr.mxu0 0.0
    %1207 = vmatpush1.msra.mxu0 0.0
    %1208 = vmatprep.subr.mxu0 0.0
    %1209 = vmatpush1.msra.mxu0 0.0
    %1210 = vmatprep.subr.mxu0 0.0
    %1211 = vmatpush1.msra.mxu0 0.0
    %1212 = vmatprep.subr.mxu0 0.0
    %1213 = vmatpush1.msra.mxu0 0.0
    %1214 = vmatprep.subr.mxu0 0.0
    %1215 = vmatpush1.msra.mxu0 0.0
    %1216 = vmatprep.subr.mxu0 0.0
    %1217 = vmatpush1.msra.mxu0 0.0
    %1218 = vmatprep.subr.mxu0 0.0
    %1219 = vmatpush1.msra.mxu0 0.0
    %1220 = vmatprep.subr.mxu0 0.0
    %1221 = vmatpush1.msra.mxu0 0.0
    %1222 = vmatprep.subr.mxu0 0.0
    %1223 = vmatpush1.msra.mxu0 0.0
    %1224 = vmatprep.subr.mxu0 0.0
    %1225 = vmatpush1.msra.mxu0 0.0
    %1226 = vmatprep.subr.mxu0 0.0
    %1227 = vmatpush1.msra.mxu0 0.0
    %1228 = vmatprep.subr.mxu0 0.0
    %1229 = vmatpush1.msra.mxu0 0.0
    %1230 = vmatprep.subr.mxu0 0.0
    %1231 = vmatpush1.msra.mxu0 0.0
    %1232 = vmatprep.subr.mxu0 0.0
    %1233 = vmatpush1.msra.mxu0 0.0
    %1234 = vmatprep.mubr.f32.mxu0 0.0
    %1235 = vmatmul.mubr.f32.gmra.mrb[0].mxu0 %v1162
    %v1236 = vpop.f32.mrb[0].mxu0
    %v1237 = vadd.f32 0.0, %v1236
    %v1238 = vpop.f32.mrb[0].mxu0
    %v1239 = vadd.f32 0.0, %v1238
    %1240 = vmatprep.mubr.f32.mxu0 0.0
    %1241 = vmatmul.mubr.f32.gmra.mrb[0].mxu0 %v1165
    %v1242 = vpop.f32.mrb[0].mxu0
    %v1243 = vadd.f32 0.0, %v1242
    %v1244 = vpop.f32.mrb[0].mxu0
    %v1245 = vadd.f32 0.0, %v1244
    %1246 = vmatprep.mubr.f32.mxu0 0.0
    %1247 = vmatmul.mubr.f32.gmra.mrb[0].mxu0 %v1168
    %v1248 = vpop.f32.mrb[0].mxu0
    %v1249 = vadd.f32 0.0, %v1248
    %v1250 = vpop.f32.mrb[0].mxu0
    %v1251 = vadd.f32 0.0, %v1250
    %1252 = vdwg.mxu0
    %1253 = vmatprep.subr.mxu0 0.0
    %1254 = vmatpush1.msra.mxu0 %v1148
    %1255 = vmatprep.subr.mxu0 0.0
    %1256 = vmatpush1.msra.mxu0 %v1151
    %1257 = vmatprep.subr.mxu0 0.0
    %1258 = vmatpush1.msra.mxu0 %v1154
    %1259 = vmatprep.subr.mxu0 0.0
    %1260 = vmatpush1.msra.mxu0 %v1157
    %1261 = vmatprep.subr.mxu0 0.0
    %1262 = vmatpush1.msra.mxu0 %v1160
    %1263 = vmatprep.subr.mxu0 0.0
    %1264 = vmatpush1.msra.mxu0 0.0
    %1265 = vmatprep.subr.mxu0 0.0
    %1266 = vmatpush1.msra.mxu0 0.0
    %1267 = vmatprep.subr.mxu0 0.0
    %1268 = vmatpush1.msra.mxu0 0.0
    %1269 = vmatprep.subr.mxu0 0.0
    %1270 = vmatpush1.msra.mxu0 0.0
    %1271 = vmatprep.subr.mxu0 0.0
    %1272 = vmatpush1.msra.mxu0 0.0
    %1273 = vmatprep.subr.mxu0 0.0
    %1274 = vmatpush1.msra.mxu0 0.0
    %1275 = vmatprep.subr.mxu0 0.0
    %1276 = vmatpush1.msra.mxu0 0.0
    %1277 = vmatprep.subr.mxu0 0.0
    %1278 = vmatpush1.msra.mxu0 0.0
    %1279 = vmatprep.subr.mxu0 0.0
    %1280 = vmatpush1.msra.mxu0 0.0
    %1281 = vmatprep.subr.mxu0 0.0
    %1282 = vmatpush1.msra.mxu0 0.0
    %1283 = vmatprep.subr.mxu0 0.0
    %1284 = vmatpush1.msra.mxu0 0.0
    %1285 = vmatprep.subr.mxu0 0.0
    %1286 = vmatpush1.msra.mxu0 0.0
    %1287 = vmatprep.subr.mxu0 0.0
    %1288 = vmatpush1.msra.mxu0 0.0
    %1289 = vmatprep.subr.mxu0 0.0
    %1290 = vmatpush1.msra.mxu0 0.0
    %1291 = vmatprep.subr.mxu0 0.0
    %1292 = vmatpush1.msra.mxu0 0.0
    %1293 = vmatprep.subr.mxu0 0.0
    %1294 = vmatpush1.msra.mxu0 0.0
    %1295 = vmatprep.subr.mxu0 0.0
    %1296 = vmatpush1.msra.mxu0 0.0
    %1297 = vmatprep.subr.mxu0 0.0
    %1298 = vmatpush1.msra.mxu0 0.0
    %1299 = vmatprep.subr.mxu0 0.0
    %1300 = vmatpush1.msra.mxu0 0.0
    %1301 = vmatprep.subr.mxu0 0.0
    %1302 = vmatpush1.msra.mxu0 0.0
    %1303 = vmatprep.subr.mxu0 0.0
    %1304 = vmatpush1.msra.mxu0 0.0
    %1305 = vmatprep.subr.mxu0 0.0
    %1306 = vmatpush1.msra.mxu0 0.0
    %1307 = vmatprep.subr.mxu0 0.0
    %1308 = vmatpush1.msra.mxu0 0.0
    %1309 = vmatprep.subr.mxu0 0.0
    %1310 = vmatpush1.msra.mxu0 0.0
    %1311 = vmatprep.subr.mxu0 0.0
    %1312 = vmatpush1.msra.mxu0 0.0
    %1313 = vmatprep.subr.mxu0 0.0
    %1314 = vmatpush1.msra.mxu0 0.0
    %1315 = vmatprep.subr.mxu0 0.0
    %1316 = vmatpush1.msra.mxu0 0.0
    %1317 = vmatprep.mubr.f32.mxu0 0.0
    %1318 = vmatmul.mubr.f32.gmra.mrb[0].mxu0 %v1162
    %v1319 = vpop.f32.mrb[0].mxu0
    %v1320 = vadd.f32 0.0, %v1319
    %v1321 = vpop.f32.mrb[0].mxu0
    %1322 = vmatprep.mubr.f32.mxu0 0.0
    %1323 = vmatmul.mubr.f32.gmra.mrb[0].mxu0 %v1165
    %v1324 = vpop.f32.mrb[0].mxu0
    %v1325 = vadd.f32 0.0, %v1324
    %v1326 = vpop.f32.mrb[0].mxu0
    %1327 = vmatprep.mubr.f32.mxu0 0.0
    %1328 = vmatmul.mubr.f32.gmra.mrb[0].mxu0 %v1168
    %v1329 = vpop.f32.mrb[0].mxu0
    %v1330 = vadd.f32 0.0, %v1329
    %v1331 = vpop.f32.mrb[0].mxu0
    %1332 = vdwg.mxu0
    %v1333 = vadd.f32 %v1043, %v1237
    %v1334 = vadd.f32 %v1044, %v1239
    %v1335 = vadd.f32 %v1045, %v1320
    %v1336 = vadd.f32 %v1046, %v1243
    %v1337 = vadd.f32 %v1047, %v1245
    %v1338 = vadd.f32 %v1048, %v1325
    %v1339 = vadd.f32 %v1049, %v1249
    %v1340 = vadd.f32 %v1050, %v1251
    %v1341 = vadd.f32 %v1051, %v1330
    %s1342 = scalar_lea.vmem [#allocation5], 96
    %v1343 = vld [vmem:[%s1342] sm:$0xff]
    %v1344 = vld [vmem:[%s1342 + $0x8] sm:$0xff]
    %v1345 = vld [vmem:[%s1342 + $0x10] sm:$0x3]
    %v1347 = vsel %vm204, %v1343, 0
    %v1350 = vsel %vm204, %v1344, 0
    %v1353 = vsel %vm204, %v1345, 0
    %1355 = vmatprep.subr.mxu0 0.0
    %1356 = vmatpush1.msra.mxu0 %v196
    %1357 = vmatprep.subr.mxu0 0.0
    %1358 = vmatpush1.msra.mxu0 %v197
    %1359 = vmatprep.subr.mxu0 0.0
    %1360 = vmatpush1.msra.mxu0 %v198
    %1361 = vmatprep.subr.mxu0 0.0
    %1362 = vmatpush1.msra.mxu0 %v199
    %1363 = vmatprep.subr.mxu0 0.0
    %1364 = vmatpush1.msra.mxu0 %v200
    %1365 = vmatprep.subr.mxu0 0.0
    %1366 = vmatpush1.msra.mxu0 0.0
    %1367 = vmatprep.subr.mxu0 0.0
    %1368 = vmatpush1.msra.mxu0 0.0
    %1369 = vmatprep.subr.mxu0 0.0
    %1370 = vmatpush1.msra.mxu0 0.0
    %1371 = vmatprep.subr.mxu0 0.0
    %1372 = vmatpush1.msra.mxu0 0.0
    %1373 = vmatprep.subr.mxu0 0.0
    %1374 = vmatpush1.msra.mxu0 0.0
    %1375 = vmatprep.subr.mxu0 0.0
    %1376 = vmatpush1.msra.mxu0 0.0
    %1377 = vmatprep.subr.mxu0 0.0
    %1378 = vmatpush1.msra.mxu0 0.0
    %1379 = vmatprep.subr.mxu0 0.0
    %1380 = vmatpush1.msra.mxu0 0.0
    %1381 = vmatprep.subr.mxu0 0.0
    %1382 = vmatpush1.msra.mxu0 0.0
    %1383 = vmatprep.subr.mxu0 0.0
    %1384 = vmatpush1.msra.mxu0 0.0
    %1385 = vmatprep.subr.mxu0 0.0
    %1386 = vmatpush1.msra.mxu0 0.0
    %1387 = vmatprep.subr.mxu0 0.0
    %1388 = vmatpush1.msra.mxu0 0.0
    %1389 = vmatprep.subr.mxu0 0.0
    %1390 = vmatpush1.msra.mxu0 0.0
    %1391 = vmatprep.subr.mxu0 0.0
    %1392 = vmatpush1.msra.mxu0 0.0
    %1393 = vmatprep.subr.mxu0 0.0
    %1394 = vmatpush1.msra.mxu0 0.0
    %1395 = vmatprep.subr.mxu0 0.0
    %1396 = vmatpush1.msra.mxu0 0.0
    %1397 = vmatprep.subr.mxu0 0.0
    %1398 = vmatpush1.msra.mxu0 0.0
    %1399 = vmatprep.subr.mxu0 0.0
    %1400 = vmatpush1.msra.mxu0 0.0
    %1401 = vmatprep.subr.mxu0 0.0
    %1402 = vmatpush1.msra.mxu0 0.0
    %1403 = vmatprep.subr.mxu0 0.0
    %1404 = vmatpush1.msra.mxu0 0.0
    %1405 = vmatprep.subr.mxu0 0.0
    %1406 = vmatpush1.msra.mxu0 0.0
    %1407 = vmatprep.subr.mxu0 0.0
    %1408 = vmatpush1.msra.mxu0 0.0
    %1409 = vmatprep.subr.mxu0 0.0
    %1410 = vmatpush1.msra.mxu0 0.0
    %1411 = vmatprep.subr.mxu0 0.0
    %1412 = vmatpush1.msra.mxu0 0.0
    %1413 = vmatprep.subr.mxu0 0.0
    %1414 = vmatpush1.msra.mxu0 0.0
    %1415 = vmatprep.subr.mxu0 0.0
    %1416 = vmatpush1.msra.mxu0 0.0
    %1417 = vmatprep.subr.mxu0 0.0
    %1418 = vmatpush1.msra.mxu0 0.0
    %1419 = vmatprep.mubr.f32.mxu0 0.0
    %1420 = vmatmul.mubr.f32.gmra.mrb[0].mxu0 %v1347
    %v1421 = vpop.f32.mrb[0].mxu0
    %v1422 = vadd.f32 0.0, %v1421
    %v1423 = vpop.f32.mrb[0].mxu0
    %1424 = vmatprep.mubr.f32.mxu0 0.0
    %1425 = vmatmul.mubr.f32.gmra.mrb[0].mxu0 %v1350
    %v1426 = vpop.f32.mrb[0].mxu0
    %v1427 = vadd.f32 0.0, %v1426
    %v1428 = vpop.f32.mrb[0].mxu0
    %1429 = vmatprep.mubr.f32.mxu0 0.0
    %1430 = vmatmul.mubr.f32.gmra.mrb[0].mxu0 %v1353
    %v1431 = vpop.f32.mrb[0].mxu0
    %v1432 = vadd.f32 0.0, %v1431
    %v1433 = vpop.f32.mrb[0].mxu0
    %1434 = vdwg.mxu0
    %s1435 = scalar_lea.vmem [#allocation7], 480
    %v1436 = vld [vmem:[%s1435] sm:$0xff]
    %v1437 = vld [vmem:[%s1435 + $0x8] sm:$0xff]
    %v1438 = vld [vmem:[%s1435 + $0x10] sm:$0xff]
    %v1439 = vld [vmem:[%s1435 + $0x18] sm:$0xff]
    %v1440 = vld [vmem:[%s1435 + $0x20] sm:$0xff]
    %v1441 = vld [vmem:[%s1435 + $0x28] sm:$0xff]
    %v1442 = vld [vmem:[%s1435 + $0x30] sm:$0xff]
    %v1443 = vld [vmem:[%s1435 + $0x38] sm:$0xff]
    %v1444 = vld [vmem:[%s1435 + $0x40] sm:$0xff]
    %v1445 = vld [vmem:[%s1435 + $0x48] sm:$0xff]
    %v1446 = vld [vmem:[%s1435 + $0x50] sm:$0xff]
    %v1447 = vld [vmem:[%s1435 + $0x58] sm:$0xff]
    %v1448 = vld [vmem:[%s1435 + $0x60] sm:$0xff]
    %v1449 = vld [vmem:[%s1435 + $0x68] sm:$0xff]
    %v1450 = vld [vmem:[%s1435 + $0x70] sm:$0xff]
    %v1452 = vsel %vm204, %v1422, 0
    %v1455 = vsel %vm204, %v1427, 0
    %v1458 = vsel %vm204, %v1432, 0
    %1460 = vmatprep.subr.mxu0 %v1437
    %1461 = vmatpush1.msra.mxu0 %v1436
    %1462 = vmatprep.subr.mxu0 %v1440
    %1463 = vmatpush1.msra.mxu0 %v1439
    %1464 = vmatprep.subr.mxu0 %v1443
    %1465 = vmatpush1.msra.mxu0 %v1442
    %1466 = vmatprep.subr.mxu0 %v1446
    %1467 = vmatpush1.msra.mxu0 %v1445
    %1468 = vmatprep.subr.mxu0 %v1449
    %1469 = vmatpush1.msra.mxu0 %v1448
    %1470 = vmatprep.subr.mxu0 0.0
    %1471 = vmatpush1.msra.mxu0 0.0
    %1472 = vmatprep.subr.mxu0 0.0
    %1473 = vmatpush1.msra.mxu0 0.0
    %1474 = vmatprep.subr.mxu0 0.0
    %1475 = vmatpush1.msra.mxu0 0.0
    %1476 = vmatprep.subr.mxu0 0.0
    %1477 = vmatpush1.msra.mxu0 0.0
    %1478 = vmatprep.subr.mxu0 0.0
    %1479 = vmatpush1.msra.mxu0 0.0
    %1480 = vmatprep.subr.mxu0 0.0
    %1481 = vmatpush1.msra.mxu0 0.0
    %1482 = vmatprep.subr.mxu0 0.0
    %1483 = vmatpush1.msra.mxu0 0.0
    %1484 = vmatprep.subr.mxu0 0.0
    %1485 = vmatpush1.msra.mxu0 0.0
    %1486 = vmatprep.subr.mxu0 0.0
    %1487 = vmatpush1.msra.mxu0 0.0
    %1488 = vmatprep.subr.mxu0 0.0
    %1489 = vmatpush1.msra.mxu0 0.0
    %1490 = vmatprep.subr.mxu0 0.0
    %1491 = vmatpush1.msra.mxu0 0.0
    %1492 = vmatprep.subr.mxu0 0.0
    %1493 = vmatpush1.msra.mxu0 0.0
    %1494 = vmatprep.subr.mxu0 0.0
    %1495 = vmatpush1.msra.mxu0 0.0
    %1496 = vmatprep.subr.mxu0 0.0
    %1497 = vmatpush1.msra.mxu0 0.0
    %1498 = vmatprep.subr.mxu0 0.0
    %1499 = vmatpush1.msra.mxu0 0.0
    %1500 = vmatprep.subr.mxu0 0.0
    %1501 = vmatpush1.msra.mxu0 0.0
    %1502 = vmatprep.subr.mxu0 0.0
    %1503 = vmatpush1.msra.mxu0 0.0
    %1504 = vmatprep.subr.mxu0 0.0
    %1505 = vmatpush1.msra.mxu0 0.0
    %1506 = vmatprep.subr.mxu0 0.0
    %1507 = vmatpush1.msra.mxu0 0.0
    %1508 = vmatprep.subr.mxu0 0.0
    %1509 = vmatpush1.msra.mxu0 0.0
    %1510 = vmatprep.subr.mxu0 0.0
    %1511 = vmatpush1.msra.mxu0 0.0
    %1512 = vmatprep.subr.mxu0 0.0
    %1513 = vmatpush1.msra.mxu0 0.0
    %1514 = vmatprep.subr.mxu0 0.0
    %1515 = vmatpush1.msra.mxu0 0.0
    %1516 = vmatprep.subr.mxu0 0.0
    %1517 = vmatpush1.msra.mxu0 0.0
    %1518 = vmatprep.subr.mxu0 0.0
    %1519 = vmatpush1.msra.mxu0 0.0
    %1520 = vmatprep.subr.mxu0 0.0
    %1521 = vmatpush1.msra.mxu0 0.0
    %1522 = vmatprep.subr.mxu0 0.0
    %1523 = vmatpush1.msra.mxu0 0.0
    %1524 = vmatprep.mubr.f32.mxu0 0.0
    %1525 = vmatmul.mubr.f32.gmra.mrb[0].mxu0 %v1452
    %v1526 = vpop.f32.mrb[0].mxu0
    %v1527 = vadd.f32 0.0, %v1526
    %v1528 = vpop.f32.mrb[0].mxu0
    %v1529 = vadd.f32 0.0, %v1528
    %1530 = vmatprep.mubr.f32.mxu0 0.0
    %1531 = vmatmul.mubr.f32.gmra.mrb[0].mxu0 %v1455
    %v1532 = vpop.f32.mrb[0].mxu0
    %v1533 = vadd.f32 0.0, %v1532
    %v1534 = vpop.f32.mrb[0].mxu0
    %v1535 = vadd.f32 0.0, %v1534
    %1536 = vmatprep.mubr.f32.mxu0 0.0
    %1537 = vmatmul.mubr.f32.gmra.mrb[0].mxu0 %v1458
    %v1538 = vpop.f32.mrb[0].mxu0
    %v1539 = vadd.f32 0.0, %v1538
    %v1540 = vpop.f32.mrb[0].mxu0
    %v1541 = vadd.f32 0.0, %v1540
    %1542 = vdwg.mxu0
    %1543 = vmatprep.subr.mxu0 0.0
    %1544 = vmatpush1.msra.mxu0 %v1438
    %1545 = vmatprep.subr.mxu0 0.0
    %1546 = vmatpush1.msra.mxu0 %v1441
    %1547 = vmatprep.subr.mxu0 0.0
    %1548 = vmatpush1.msra.mxu0 %v1444
    %1549 = vmatprep.subr.mxu0 0.0
    %1550 = vmatpush1.msra.mxu0 %v1447
    %1551 = vmatprep.subr.mxu0 0.0
    %1552 = vmatpush1.msra.mxu0 %v1450
    %1553 = vmatprep.subr.mxu0 0.0
    %1554 = vmatpush1.msra.mxu0 0.0
    %1555 = vmatprep.subr.mxu0 0.0
    %1556 = vmatpush1.msra.mxu0 0.0
    %1557 = vmatprep.subr.mxu0 0.0
    %1558 = vmatpush1.msra.mxu0 0.0
    %1559 = vmatprep.subr.mxu0 0.0
    %1560 = vmatpush1.msra.mxu0 0.0
    %1561 = vmatprep.subr.mxu0 0.0
    %1562 = vmatpush1.msra.mxu0 0.0
    %1563 = vmatprep.subr.mxu0 0.0
    %1564 = vmatpush1.msra.mxu0 0.0
    %1565 = vmatprep.subr.mxu0 0.0
    %1566 = vmatpush1.msra.mxu0 0.0
    %1567 = vmatprep.subr.mxu0 0.0
    %1568 = vmatpush1.msra.mxu0 0.0
    %1569 = vmatprep.subr.mxu0 0.0
    %1570 = vmatpush1.msra.mxu0 0.0
    %1571 = vmatprep.subr.mxu0 0.0
    %1572 = vmatpush1.msra.mxu0 0.0
    %1573 = vmatprep.subr.mxu0 0.0
    %1574 = vmatpush1.msra.mxu0 0.0
    %1575 = vmatprep.subr.mxu0 0.0
    %1576 = vmatpush1.msra.mxu0 0.0
    %1577 = vmatprep.subr.mxu0 0.0
    %1578 = vmatpush1.msra.mxu0 0.0
    %1579 = vmatprep.subr.mxu0 0.0
    %1580 = vmatpush1.msra.mxu0 0.0
    %1581 = vmatprep.subr.mxu0 0.0
    %1582 = vmatpush1.msra.mxu0 0.0
    %1583 = vmatprep.subr.mxu0 0.0
    %1584 = vmatpush1.msra.mxu0 0.0
    %1585 = vmatprep.subr.mxu0 0.0
    %1586 = vmatpush1.msra.mxu0 0.0
    %1587 = vmatprep.subr.mxu0 0.0
    %1588 = vmatpush1.msra.mxu0 0.0
    %1589 = vmatprep.subr.mxu0 0.0
    %1590 = vmatpush1.msra.mxu0 0.0
    %1591 = vmatprep.subr.mxu0 0.0
    %1592 = vmatpush1.msra.mxu0 0.0
    %1593 = vmatprep.subr.mxu0 0.0
    %1594 = vmatpush1.msra.mxu0 0.0
    %1595 = vmatprep.subr.mxu0 0.0
    %1596 = vmatpush1.msra.mxu0 0.0
    %1597 = vmatprep.subr.mxu0 0.0
    %1598 = vmatpush1.msra.mxu0 0.0
    %1599 = vmatprep.subr.mxu0 0.0
    %1600 = vmatpush1.msra.mxu0 0.0
    %1601 = vmatprep.subr.mxu0 0.0
    %1602 = vmatpush1.msra.mxu0 0.0
    %1603 = vmatprep.subr.mxu0 0.0
    %1604 = vmatpush1.msra.mxu0 0.0
    %1605 = vmatprep.subr.mxu0 0.0
    %1606 = vmatpush1.msra.mxu0 0.0
    %1607 = vmatprep.mubr.f32.mxu0 0.0
    %1608 = vmatmul.mubr.f32.gmra.mrb[0].mxu0 %v1452
    %v1609 = vpop.f32.mrb[0].mxu0
    %v1610 = vadd.f32 0.0, %v1609
    %v1611 = vpop.f32.mrb[0].mxu0
    %1612 = vmatprep.mubr.f32.mxu0 0.0
    %1613 = vmatmul.mubr.f32.gmra.mrb[0].mxu0 %v1455
    %v1614 = vpop.f32.mrb[0].mxu0
    %v1615 = vadd.f32 0.0, %v1614
    %v1616 = vpop.f32.mrb[0].mxu0
    %1617 = vmatprep.mubr.f32.mxu0 0.0
    %1618 = vmatmul.mubr.f32.gmra.mrb[0].mxu0 %v1458
    %v1619 = vpop.f32.mrb[0].mxu0
    %v1620 = vadd.f32 0.0, %v1619
    %v1621 = vpop.f32.mrb[0].mxu0
    %1622 = vdwg.mxu0
    %v1623 = vadd.f32 %v1333, %v1527
    %v1624 = vadd.f32 %v1334, %v1529
    %v1625 = vadd.f32 %v1335, %v1610
    %v1626 = vadd.f32 %v1336, %v1533
    %v1627 = vadd.f32 %v1337, %v1535
    %v1628 = vadd.f32 %v1338, %v1615
    %v1629 = vadd.f32 %v1339, %v1539
    %v1630 = vadd.f32 %v1340, %v1541
    %v1631 = vadd.f32 %v1341, %v1620
    %v1632 = vadd.f32 %v1623, %v1626
    %vm1633 = vcmask 1041408
    %v1634 = vsel %vm1633, %v1629, 0.0
    %v1635 = vadd.f32 %v1632, %v1634
    %v1636 = vrot.slane %v1635, 4
    %v1637 = vadd.f32 %v1635, %v1636
    %v1638 = vrot.slane %v1637, 2
    %v1639 = vadd.f32 %v1637, %v1638
    %v1640 = vrot.slane %v1639, 1
    %v1641 = vadd.f32 %v1639, %v1640
    %v1642 = vadd.f32 %v1624, %v1627
    %v1643 = vsel %vm1633, %v1630, 0.0
    %v1644 = vadd.f32 %v1642, %v1643
    %v1645 = vrot.slane %v1644, 4
    %v1646 = vadd.f32 %v1644, %v1645
    %v1647 = vrot.slane %v1646, 2
    %v1648 = vadd.f32 %v1646, %v1647
    %v1649 = vrot.slane %v1648, 1
    %v1650 = vadd.f32 %v1648, %v1649
    %vm1651 = vcmask 261120
    %v1652 = vsel %vm1651, %v1625, 0.0
    %v1653 = vsel %vm1651, %v1628, 0.0
    %v1654 = vadd.f32 %v1652, %v1653
    %vm1655 = vcmask 254976
    %v1656 = vsel %vm1655, %v1631, 0.0
    %v1657 = vadd.f32 %v1654, %v1656
    %v1658 = vrot.slane %v1657, 4
    %v1659 = vadd.f32 %v1657, %v1658
    %v1660 = vrot.slane %v1659, 2
    %v1661 = vadd.f32 %v1659, %v1660
    %v1662 = vrot.slane %v1661, 1
    %v1663 = vadd.f32 %v1661, %v1662
    %v1664 = vmul.f32 %v1623, %v1623
    %v1665 = vmul.f32 %v1624, %v1624
    %v1666 = vmul.f32 %v1625, %v1625
    %v1667 = vmul.f32 %v1626, %v1626
    %v1668 = vmul.f32 %v1627, %v1627
    %v1669 = vmul.f32 %v1628, %v1628
    %v1670 = vmul.f32 %v1629, %v1629
    %v1671 = vmul.f32 %v1630, %v1630
    %v1672 = vmul.f32 %v1631, %v1631
    %v1673 = vadd.f32 %v1664, %v1667
    %v1674 = vsel %vm1633, %v1670, 0.0
    %v1675 = vadd.f32 %v1673, %v1674
    %v1676 = vrot.slane %v1675, 4
    %v1677 = vadd.f32 %v1675, %v1676
    %v1678 = vrot.slane %v1677, 2
    %v1679 = vadd.f32 %v1677, %v1678
    %v1680 = vrot.slane %v1679, 1
    %v1681 = vadd.f32 %v1679, %v1680
    %v1682 = vadd.f32 %v1665, %v1668
    %v1683 = vsel %vm1633, %v1671, 0.0
    %v1684 = vadd.f32 %v1682, %v1683
    %v1685 = vrot.slane %v1684, 4
    %v1686 = vadd.f32 %v1684, %v1685
    %v1687 = vrot.slane %v1686, 2
    %v1688 = vadd.f32 %v1686, %v1687
    %v1689 = vrot.slane %v1688, 1
    %v1690 = vadd.f32 %v1688, %v1689
    %v1691 = vsel %vm1651, %v1666, 0.0
    %v1692 = vsel %vm1651, %v1669, 0.0
    %v1693 = vadd.f32 %v1691, %v1692
    %v1694 = vsel %vm1655, %v1672, 0.0
    %v1695 = vadd.f32 %v1693, %v1694
    %v1696 = vrot.slane %v1695, 4
    %v1697 = vadd.f32 %v1695, %v1696
    %v1698 = vrot.slane %v1697, 2
    %v1699 = vadd.f32 %v1697, %v1698
    %v1700 = vrot.slane %v1699, 1
    %v1701 = vadd.f32 %v1699, %v1700
    %v1702 = vld [vmem:[#allocation8] sm:$0xff]
    %v1703 = vld [vmem:[#allocation8 + $0x8] sm:$0xff]
    %v1704 = vld [vmem:[#allocation8 + $0x10] sm:$0xff]
    %v1705 = vld [vmem:[#allocation8 + $0x18] sm:$0xff]
    %v1706 = vld [vmem:[#allocation8 + $0x20] sm:$0xff]
    %v1707 = vld [vmem:[#allocation8 + $0x28] sm:$0xff]
    %v1708 = vld [vmem:[#allocation8 + $0x30] sm:$0xff]
    %v1709 = vld [vmem:[#allocation8 + $0x38] sm:$0xff]
    %v1710 = vld [vmem:[#allocation8 + $0x40] sm:$0xff]
    %v1711 = vld [vmem:[#allocation8 + $0x48] sm:$0xff]
    %v1712 = vld [vmem:[#allocation8 + $0x50] sm:$0xff]
    %v1713 = vld [vmem:[#allocation8 + $0x58] sm:$0xff]
    %v1714 = vld [vmem:[#allocation8 + $0x60] sm:$0xff]
    %v1715 = vld [vmem:[#allocation8 + $0x68] sm:$0xff]
    %v1716 = vld [vmem:[#allocation8 + $0x70] sm:$0xff]
    %v1717 = vld [vmem:[#allocation8 + $0x78] sm:$0xff]
    %v1718 = vld [vmem:[#allocation8 + $0x80] sm:$0xff]
    %v1719 = vld [vmem:[#allocation8 + $0x88] sm:$0xff]
    %v1720 = vld [vmem:[#allocation8 + $0x90] sm:$0xff]
    %v1721 = vld [vmem:[#allocation8 + $0x98] sm:$0xff]
    %v1722 = vld [vmem:[#allocation8 + $0xa0] sm:$0xff]
    %v1723 = vld [vmem:[#allocation8 + $0xa8] sm:$0xff]
    %v1724 = vld [vmem:[#allocation8 + $0xb0] sm:$0xff]
    %v1725 = vld [vmem:[#allocation8 + $0xb8] sm:$0xff]
    %v1726 = vld [vmem:[#allocation8 + $0xc0] sm:$0xff]
    %v1727 = vld [vmem:[#allocation8 + $0xc8] sm:$0xff]
    %v1728 = vld [vmem:[#allocation8 + $0xd0] sm:$0xff]
    %v1729 = vld [vmem:[#allocation8 + $0xd8] sm:$0xff]
    %v1730 = vld [vmem:[#allocation8 + $0xe0] sm:$0xff]
    %v1731 = vld [vmem:[#allocation8 + $0xe8] sm:$0xff]
    %v1732 = vld [vmem:[#allocation8 + $0xf0] sm:$0xff]
    %v1733 = vld [vmem:[#allocation8 + $0xf8] sm:$0xff]
    %v1734 = vld [vmem:[#allocation8 + $0x100] sm:$0xff]
    %v1735 = vld [vmem:[#allocation8 + $0x108] sm:$0xff]
    %v1736 = vld [vmem:[#allocation8 + $0x110] sm:$0xff]
    %v1737 = vld [vmem:[#allocation8 + $0x118] sm:$0xff]
    %v1738 = vld [vmem:[#allocation8 + $0x120] sm:$0xff]
    %v1739 = vld [vmem:[#allocation8 + $0x128] sm:$0xff]
    %v1740 = vld [vmem:[#allocation8 + $0x130] sm:$0xff]
    %v1741 = vld [vmem:[#allocation8 + $0x138] sm:$0xff]
    %v1742 = vld [vmem:[#allocation8 + $0x140] sm:$0xff]
    %v1743 = vld [vmem:[#allocation8 + $0x148] sm:$0xff]
    %v1744 = vld [vmem:[#allocation8 + $0x150] sm:$0xff]
    %v1745 = vld [vmem:[#allocation8 + $0x158] sm:$0xff]
    %v1746 = vld [vmem:[#allocation8 + $0x160] sm:$0xff]
    %v1747 = vld [vmem:[#allocation8 + $0x168] sm:$0xff]
    %v1748 = vld [vmem:[#allocation8 + $0x170] sm:$0xff]
    %v1749 = vld [vmem:[#allocation8 + $0x178] sm:$0xff]
    %v1750 = vld [vmem:[#allocation8 + $0x180] sm:$0xff]
    %v1751 = vld [vmem:[#allocation8 + $0x188] sm:$0xff]
    %v1752 = vld [vmem:[#allocation8 + $0x190] sm:$0xff]
    %v1753 = vld [vmem:[#allocation8 + $0x198] sm:$0xff]
    %v1754 = vld [vmem:[#allocation8 + $0x1a0] sm:$0xff]
    %v1755 = vld [vmem:[#allocation8 + $0x1a8] sm:$0xff]
    %v1756 = vld [vmem:[#allocation8 + $0x1b0] sm:$0xff]
    %v1757 = vld [vmem:[#allocation8 + $0x1b8] sm:$0xff]
    %v1758 = vld [vmem:[#allocation8 + $0x1c0] sm:$0xff]
    %v1759 = vld [vmem:[#allocation8 + $0x1c8] sm:$0xff]
    %v1760 = vld [vmem:[#allocation8 + $0x1d0] sm:$0xff]
    %v1761 = vld [vmem:[#allocation8 + $0x1d8] sm:$0xff]
    %v1762 = vld [vmem:[#allocation8 + $0x1e0] sm:$0xff]
    %v1763 = vld [vmem:[#allocation8 + $0x1e8] sm:$0xff]
    %v1764 = vld [vmem:[#allocation8 + $0x1f0] sm:$0xff]
    %v1765 = vld [vmem:[#allocation8 + $0x1f8] sm:$0xff]
    %v1766 = vld [vmem:[#allocation8 + $0x200] sm:$0xff]
    %v1767 = vld [vmem:[#allocation8 + $0x208] sm:$0xff]
    %v1768 = vld [vmem:[#allocation8 + $0x210] sm:$0xff]
    %v1769 = vld [vmem:[#allocation8 + $0x218] sm:$0xff]
    %v1770 = vld [vmem:[#allocation8 + $0x220] sm:$0xff]
    %v1771 = vld [vmem:[#allocation8 + $0x228] sm:$0xff]
    %v1772 = vld [vmem:[#allocation8 + $0x230] sm:$0xff]
    %v1773 = vld [vmem:[#allocation8 + $0x238] sm:$0xff]
    %v1774 = vld [vmem:[#allocation8 + $0x240] sm:$0xff]
    %v1775 = vld [vmem:[#allocation8 + $0x248] sm:$0xff]
    %v1776 = vld [vmem:[#allocation8 + $0x250] sm:$0xff]
    %v1777 = vld [vmem:[#allocation8 + $0x258] sm:$0xff]
    %v1778 = vld [vmem:[#allocation8 + $0x260] sm:$0xff]
    %v1779 = vld [vmem:[#allocation8 + $0x268] sm:$0xff]
    %v1780 = vld [vmem:[#allocation8 + $0x270] sm:$0xff]
    %v1781 = vld [vmem:[#allocation8 + $0x278] sm:$0xff]
    %v1782 = vld [vmem:[#allocation8 + $0x280] sm:$0xff]
    %v1783 = vld [vmem:[#allocation8 + $0x288] sm:$0xff]
    %v1784 = vld [vmem:[#allocation8 + $0x290] sm:$0xff]
    %v1785 = vld [vmem:[#allocation8 + $0x298] sm:$0xff]
    %v1786 = vld [vmem:[#allocation8 + $0x2a0] sm:$0xff]
    %v1787 = vld [vmem:[#allocation8 + $0x2a8] sm:$0xff]
    %v1788 = vld [vmem:[#allocation8 + $0x2b0] sm:$0xff]
    %v1789 = vld [vmem:[#allocation8 + $0x2b8] sm:$0xff]
    %v1790 = vld [vmem:[#allocation8 + $0x2c0] sm:$0xff]
    %v1791 = vld [vmem:[#allocation8 + $0x2c8] sm:$0xff]
    %v1792 = vld [vmem:[#allocation8 + $0x2d0] sm:$0xff]
    %v1793 = vld [vmem:[#allocation8 + $0x2d8] sm:$0xff]
    %v1794 = vld [vmem:[#allocation8 + $0x2e0] sm:$0xff]
    %v1795 = vld [vmem:[#allocation8 + $0x2e8] sm:$0xff]
    %v1796 = vld [vmem:[#allocation8 + $0x2f0] sm:$0xff]
    %v1797 = vld [vmem:[#allocation8 + $0x2f8] sm:$0xff]
    %v1798 = vld [vmem:[#allocation8 + $0x300] sm:$0xff]
    %v1799 = vld [vmem:[#allocation8 + $0x308] sm:$0xff]
    %v1800 = vld [vmem:[#allocation8 + $0x310] sm:$0xff]
    %v1801 = vld [vmem:[#allocation8 + $0x318] sm:$0xff]
    %v1802 = vld [vmem:[#allocation8 + $0x320] sm:$0xff]
    %v1803 = vld [vmem:[#allocation8 + $0x328] sm:$0xff]
    %v1804 = vld [vmem:[#allocation8 + $0x330] sm:$0xff]
    %v1805 = vld [vmem:[#allocation8 + $0x338] sm:$0xff]
    %v1806 = vld [vmem:[#allocation8 + $0x340] sm:$0xff]
    %v1807 = vld [vmem:[#allocation8 + $0x348] sm:$0xff]
    %v1808 = vld [vmem:[#allocation8 + $0x350] sm:$0xff]
    %v1809 = vld [vmem:[#allocation8 + $0x358] sm:$0xff]
    %v1811 = vsel %vm1651, %v1663, 0
    %1813 = vmatprep.subr.mxu0 %v1703
    %1814 = vmatpush1.msra.mxu0 %v1702
    %1815 = vmatprep.subr.mxu0 %v1706
    %1816 = vmatpush1.msra.mxu0 %v1705
    %1817 = vmatprep.subr.mxu0 %v1709
    %1818 = vmatpush1.msra.mxu0 %v1708
    %1819 = vmatprep.subr.mxu0 %v1712
    %1820 = vmatpush1.msra.mxu0 %v1711
    %1821 = vmatprep.subr.mxu0 %v1715
    %1822 = vmatpush1.msra.mxu0 %v1714
    %1823 = vmatprep.subr.mxu0 %v1718
    %1824 = vmatpush1.msra.mxu0 %v1717
    %1825 = vmatprep.subr.mxu0 %v1721
    %1826 = vmatpush1.msra.mxu0 %v1720
    %1827 = vmatprep.subr.mxu0 %v1724
    %1828 = vmatpush1.msra.mxu0 %v1723
    %1829 = vmatprep.subr.mxu0 %v1727
    %1830 = vmatpush1.msra.mxu0 %v1726
    %1831 = vmatprep.subr.mxu0 %v1730
    %1832 = vmatpush1.msra.mxu0 %v1729
    %1833 = vmatprep.subr.mxu0 %v1733
    %1834 = vmatpush1.msra.mxu0 %v1732
    %1835 = vmatprep.subr.mxu0 %v1736
    %1836 = vmatpush1.msra.mxu0 %v1735
    %1837 = vmatprep.subr.mxu0 %v1739
    %1838 = vmatpush1.msra.mxu0 %v1738
    %1839 = vmatprep.subr.mxu0 %v1742
    %1840 = vmatpush1.msra.mxu0 %v1741
    %1841 = vmatprep.subr.mxu0 %v1745
    %1842 = vmatpush1.msra.mxu0 %v1744
    %1843 = vmatprep.subr.mxu0 %v1748
    %1844 = vmatpush1.msra.mxu0 %v1747
    %1845 = vmatprep.subr.mxu0 %v1751
    %1846 = vmatpush1.msra.mxu0 %v1750
    %1847 = vmatprep.subr.mxu0 %v1754
    %1848 = vmatpush1.msra.mxu0 %v1753
    %1849 = vmatprep.subr.mxu0 %v1757
    %1850 = vmatpush1.msra.mxu0 %v1756
    %1851 = vmatprep.subr.mxu0 %v1760
    %1852 = vmatpush1.msra.mxu0 %v1759
    %1853 = vmatprep.subr.mxu0 %v1763
    %1854 = vmatpush1.msra.mxu0 %v1762
    %1855 = vmatprep.subr.mxu0 %v1766
    %1856 = vmatpush1.msra.mxu0 %v1765
    %1857 = vmatprep.subr.mxu0 %v1769
    %1858 = vmatpush1.msra.mxu0 %v1768
    %1859 = vmatprep.subr.mxu0 %v1772
    %1860 = vmatpush1.msra.mxu0 %v1771
    %1861 = vmatprep.subr.mxu0 %v1775
    %1862 = vmatpush1.msra.mxu0 %v1774
    %1863 = vmatprep.subr.mxu0 %v1778
    %1864 = vmatpush1.msra.mxu0 %v1777
    %1865 = vmatprep.subr.mxu0 %v1781
    %1866 = vmatpush1.msra.mxu0 %v1780
    %1867 = vmatprep.subr.mxu0 %v1784
    %1868 = vmatpush1.msra.mxu0 %v1783
    %1869 = vmatprep.subr.mxu0 %v1787
    %1870 = vmatpush1.msra.mxu0 %v1786
    %1871 = vmatprep.subr.mxu0 %v1790
    %1872 = vmatpush1.msra.mxu0 %v1789
    %1873 = vmatprep.subr.mxu0 %v1793
    %1874 = vmatpush1.msra.mxu0 %v1792
    %1875 = vmatprep.subr.mxu0 %v1796
    %1876 = vmatpush1.msra.mxu0 %v1795
    %1877 = vmatprep.mubr.f32.mxu0 %v1650
    %1878 = vmatmul.mubr.f32.gmra.mrb[0].mxu0 %v1641
    %v1879 = vpop.f32.mrb[0].mxu0
    %v1880 = vadd.f32 0.0, %v1879
    %v1881 = vpop.f32.mrb[0].mxu0
    %v1882 = vadd.f32 0.0, %v1881
    %1883 = vdwg.mxu0
    %1884 = vmatprep.subr.mxu0 %v1799
    %1885 = vmatpush1.msra.mxu0 %v1798
    %1886 = vmatprep.subr.mxu0 %v1802
    %1887 = vmatpush1.msra.mxu0 %v1801
    %1888 = vmatprep.subr.mxu0 %v1805
    %1889 = vmatpush1.msra.mxu0 %v1804
    %1890 = vmatprep.subr.mxu0 %v1808
    %1891 = vmatpush1.msra.mxu0 %v1807
    %1892 = vmatprep.subr.mxu0 0.0
    %1893 = vmatpush1.msra.mxu0 0.0
    %1894 = vmatprep.subr.mxu0 0.0
    %1895 = vmatpush1.msra.mxu0 0.0
    %1896 = vmatprep.subr.mxu0 0.0
    %1897 = vmatpush1.msra.mxu0 0.0
    %1898 = vmatprep.subr.mxu0 0.0
    %1899 = vmatpush1.msra.mxu0 0.0
    %1900 = vmatprep.subr.mxu0 0.0
    %1901 = vmatpush1.msra.mxu0 0.0
    %1902 = vmatprep.subr.mxu0 0.0
    %1903 = vmatpush1.msra.mxu0 0.0
    %1904 = vmatprep.subr.mxu0 0.0
    %1905 = vmatpush1.msra.mxu0 0.0
    %1906 = vmatprep.subr.mxu0 0.0
    %1907 = vmatpush1.msra.mxu0 0.0
    %1908 = vmatprep.subr.mxu0 0.0
    %1909 = vmatpush1.msra.mxu0 0.0
    %1910 = vmatprep.subr.mxu0 0.0
    %1911 = vmatpush1.msra.mxu0 0.0
    %1912 = vmatprep.subr.mxu0 0.0
    %1913 = vmatpush1.msra.mxu0 0.0
    %1914 = vmatprep.subr.mxu0 0.0
    %1915 = vmatpush1.msra.mxu0 0.0
    %1916 = vmatprep.subr.mxu0 0.0
    %1917 = vmatpush1.msra.mxu0 0.0
    %1918 = vmatprep.subr.mxu0 0.0
    %1919 = vmatpush1.msra.mxu0 0.0
    %1920 = vmatprep.subr.mxu0 0.0
    %1921 = vmatpush1.msra.mxu0 0.0
    %1922 = vmatprep.subr.mxu0 0.0
    %1923 = vmatpush1.msra.mxu0 0.0
    %1924 = vmatprep.subr.mxu0 0.0
    %1925 = vmatpush1.msra.mxu0 0.0
    %1926 = vmatprep.subr.mxu0 0.0
    %1927 = vmatpush1.msra.mxu0 0.0
    %1928 = vmatprep.subr.mxu0 0.0
    %1929 = vmatpush1.msra.mxu0 0.0
    %1930 = vmatprep.subr.mxu0 0.0
    %1931 = vmatpush1.msra.mxu0 0.0
    %1932 = vmatprep.subr.mxu0 0.0
    %1933 = vmatpush1.msra.mxu0 0.0
    %1934 = vmatprep.subr.mxu0 0.0
    %1935 = vmatpush1.msra.mxu0 0.0
    %1936 = vmatprep.subr.mxu0 0.0
    %1937 = vmatpush1.msra.mxu0 0.0
    %1938 = vmatprep.subr.mxu0 0.0
    %1939 = vmatpush1.msra.mxu0 0.0
    %1940 = vmatprep.subr.mxu0 0.0
    %1941 = vmatpush1.msra.mxu0 0.0
    %1942 = vmatprep.subr.mxu0 0.0
    %1943 = vmatpush1.msra.mxu0 0.0
    %1944 = vmatprep.subr.mxu0 0.0
    %1945 = vmatpush1.msra.mxu0 0.0
    %1946 = vmatprep.subr.mxu0 0.0
    %1947 = vmatpush1.msra.mxu0 0.0
    %1948 = vmatprep.mubr.f32.mxu0 0.0
    %1949 = vmatmul.mubr.f32.gmra.mrb[0].mxu0 %v1811
    %v1950 = vpop.f32.mrb[0].mxu0
    %v1951 = vadd.f32 %v1880, %v1950
    %v1952 = vpop.f32.mrb[0].mxu0
    %v1953 = vadd.f32 %v1882, %v1952
    %1954 = vdwg.mxu0
    %1955 = vmatprep.subr.mxu0 0.0
    %1956 = vmatpush1.msra.mxu0 %v1704
    %1957 = vmatprep.subr.mxu0 0.0
    %1958 = vmatpush1.msra.mxu0 %v1707
    %1959 = vmatprep.subr.mxu0 0.0
    %1960 = vmatpush1.msra.mxu0 %v1710
    %1961 = vmatprep.subr.mxu0 0.0
    %1962 = vmatpush1.msra.mxu0 %v1713
    %1963 = vmatprep.subr.mxu0 0.0
    %1964 = vmatpush1.msra.mxu0 %v1716
    %1965 = vmatprep.subr.mxu0 0.0
    %1966 = vmatpush1.msra.mxu0 %v1719
    %1967 = vmatprep.subr.mxu0 0.0
    %1968 = vmatpush1.msra.mxu0 %v1722
    %1969 = vmatprep.subr.mxu0 0.0
    %1970 = vmatpush1.msra.mxu0 %v1725
    %1971 = vmatprep.subr.mxu0 0.0
    %1972 = vmatpush1.msra.mxu0 %v1728
    %1973 = vmatprep.subr.mxu0 0.0
    %1974 = vmatpush1.msra.mxu0 %v1731
    %1975 = vmatprep.subr.mxu0 0.0
    %1976 = vmatpush1.msra.mxu0 %v1734
    %1977 = vmatprep.subr.mxu0 0.0
    %1978 = vmatpush1.msra.mxu0 %v1737
    %1979 = vmatprep.subr.mxu0 0.0
    %1980 = vmatpush1.msra.mxu0 %v1740
    %1981 = vmatprep.subr.mxu0 0.0
    %1982 = vmatpush1.msra.mxu0 %v1743
    %1983 = vmatprep.subr.mxu0 0.0
    %1984 = vmatpush1.msra.mxu0 %v1746
    %1985 = vmatprep.subr.mxu0 0.0
    %1986 = vmatpush1.msra.mxu0 %v1749
    %1987 = vmatprep.subr.mxu0 0.0
    %1988 = vmatpush1.msra.mxu0 %v1752
    %1989 = vmatprep.subr.mxu0 0.0
    %1990 = vmatpush1.msra.mxu0 %v1755
    %1991 = vmatprep.subr.mxu0 0.0
    %1992 = vmatpush1.msra.mxu0 %v1758
    %1993 = vmatprep.subr.mxu0 0.0
    %1994 = vmatpush1.msra.mxu0 %v1761
    %1995 = vmatprep.subr.mxu0 0.0
    %1996 = vmatpush1.msra.mxu0 %v1764
    %1997 = vmatprep.subr.mxu0 0.0
    %1998 = vmatpush1.msra.mxu0 %v1767
    %1999 = vmatprep.subr.mxu0 0.0
    %2000 = vmatpush1.msra.mxu0 %v1770
    %2001 = vmatprep.subr.mxu0 0.0
    %2002 = vmatpush1.msra.mxu0 %v1773
    %2003 = vmatprep.subr.mxu0 0.0
    %2004 = vmatpush1.msra.mxu0 %v1776
    %2005 = vmatprep.subr.mxu0 0.0
    %2006 = vmatpush1.msra.mxu0 %v1779
    %2007 = vmatprep.subr.mxu0 0.0
    %2008 = vmatpush1.msra.mxu0 %v1782
    %2009 = vmatprep.subr.mxu0 0.0
    %2010 = vmatpush1.msra.mxu0 %v1785
    %2011 = vmatprep.subr.mxu0 0.0
    %2012 = vmatpush1.msra.mxu0 %v1788
    %2013 = vmatprep.subr.mxu0 0.0
    %2014 = vmatpush1.msra.mxu0 %v1791
    %2015 = vmatprep.subr.mxu0 0.0
    %2016 = vmatpush1.msra.mxu0 %v1794
    %2017 = vmatprep.subr.mxu0 0.0
    %2018 = vmatpush1.msra.mxu0 %v1797
    %2019 = vmatprep.mubr.f32.mxu0 %v1650
    %2020 = vmatmul.mubr.f32.gmra.mrb[0].mxu0 %v1641
    %v2021 = vpop.f32.mrb[0].mxu0
    %v2022 = vadd.f32 0.0, %v2021
    %v2023 = vpop.f32.mrb[0].mxu0
    %2024 = vdwg.mxu0
    %2025 = vmatprep.subr.mxu0 0.0
    %2026 = vmatpush1.msra.mxu0 %v1800
    %2027 = vmatprep.subr.mxu0 0.0
    %2028 = vmatpush1.msra.mxu0 %v1803
    %2029 = vmatprep.subr.mxu0 0.0
    %2030 = vmatpush1.msra.mxu0 %v1806
    %2031 = vmatprep.subr.mxu0 0.0
    %2032 = vmatpush1.msra.mxu0 %v1809
    %2033 = vmatprep.subr.mxu0 0.0
    %2034 = vmatpush1.msra.mxu0 0.0
    %2035 = vmatprep.subr.mxu0 0.0
    %2036 = vmatpush1.msra.mxu0 0.0
    %2037 = vmatprep.subr.mxu0 0.0
    %2038 = vmatpush1.msra.mxu0 0.0
    %2039 = vmatprep.subr.mxu0 0.0
    %2040 = vmatpush1.msra.mxu0 0.0
    %2041 = vmatprep.subr.mxu0 0.0
    %2042 = vmatpush1.msra.mxu0 0.0
    %2043 = vmatprep.subr.mxu0 0.0
    %2044 = vmatpush1.msra.mxu0 0.0
    %2045 = vmatprep.subr.mxu0 0.0
    %2046 = vmatpush1.msra.mxu0 0.0
    %2047 = vmatprep.subr.mxu0 0.0
    %2048 = vmatpush1.msra.mxu0 0.0
    %2049 = vmatprep.subr.mxu0 0.0
    %2050 = vmatpush1.msra.mxu0 0.0
    %2051 = vmatprep.subr.mxu0 0.0
    %2052 = vmatpush1.msra.mxu0 0.0
    %2053 = vmatprep.subr.mxu0 0.0
    %2054 = vmatpush1.msra.mxu0 0.0
    %2055 = vmatprep.subr.mxu0 0.0
    %2056 = vmatpush1.msra.mxu0 0.0
    %2057 = vmatprep.subr.mxu0 0.0
    %2058 = vmatpush1.msra.mxu0 0.0
    %2059 = vmatprep.subr.mxu0 0.0
    %2060 = vmatpush1.msra.mxu0 0.0
    %2061 = vmatprep.subr.mxu0 0.0
    %2062 = vmatpush1.msra.mxu0 0.0
    %2063 = vmatprep.subr.mxu0 0.0
    %2064 = vmatpush1.msra.mxu0 0.0
    %2065 = vmatprep.subr.mxu0 0.0
    %2066 = vmatpush1.msra.mxu0 0.0
    %2067 = vmatprep.subr.mxu0 0.0
    %2068 = vmatpush1.msra.mxu0 0.0
    %2069 = vmatprep.subr.mxu0 0.0
    %2070 = vmatpush1.msra.mxu0 0.0
    %2071 = vmatprep.subr.mxu0 0.0
    %2072 = vmatpush1.msra.mxu0 0.0
    %2073 = vmatprep.subr.mxu0 0.0
    %2074 = vmatpush1.msra.mxu0 0.0
    %2075 = vmatprep.subr.mxu0 0.0
    %2076 = vmatpush1.msra.mxu0 0.0
    %2077 = vmatprep.subr.mxu0 0.0
    %2078 = vmatpush1.msra.mxu0 0.0
    %2079 = vmatprep.subr.mxu0 0.0
    %2080 = vmatpush1.msra.mxu0 0.0
    %2081 = vmatprep.subr.mxu0 0.0
    %2082 = vmatpush1.msra.mxu0 0.0
    %2083 = vmatprep.subr.mxu0 0.0
    %2084 = vmatpush1.msra.mxu0 0.0
    %2085 = vmatprep.subr.mxu0 0.0
    %2086 = vmatpush1.msra.mxu0 0.0
    %2087 = vmatprep.subr.mxu0 0.0
    %2088 = vmatpush1.msra.mxu0 0.0
    %2089 = vmatprep.mubr.f32.mxu0 0.0
    %2090 = vmatmul.mubr.f32.gmra.mrb[0].mxu0 %v1811
    %v2091 = vpop.f32.mrb[0].mxu0
    %v2092 = vadd.f32 %v2022, %v2091
    %v2093 = vpop.f32.mrb[0].mxu0
    %2094 = vdwg.mxu0
    %v2095 = vmul.f32 %v1951, 0.0030864198
    %v2096 = vmul.f32 %v1953, 0.0030864198
    %v2097 = vmul.f32 %v2092, 0.0030864198
    %v2099 = vsel %vm1651, %v1701, 0
    %2101 = vmatprep.subr.mxu0 %v1703
    %2102 = vmatpush1.msra.mxu0 %v1702
    %2103 = vmatprep.subr.mxu0 %v1706
    %2104 = vmatpush1.msra.mxu0 %v1705
    %2105 = vmatprep.subr.mxu0 %v1709
    %2106 = vmatpush1.msra.mxu0 %v1708
    %2107 = vmatprep.subr.mxu0 %v1712
    %2108 = vmatpush1.msra.mxu0 %v1711
    %2109 = vmatprep.subr.mxu0 %v1715
    %2110 = vmatpush1.msra.mxu0 %v1714
    %2111 = vmatprep.subr.mxu0 %v1718
    %2112 = vmatpush1.msra.mxu0 %v1717
    %2113 = vmatprep.subr.mxu0 %v1721
    %2114 = vmatpush1.msra.mxu0 %v1720
    %2115 = vmatprep.subr.mxu0 %v1724
    %2116 = vmatpush1.msra.mxu0 %v1723
    %2117 = vmatprep.subr.mxu0 %v1727
    %2118 = vmatpush1.msra.mxu0 %v1726
    %2119 = vmatprep.subr.mxu0 %v1730
    %2120 = vmatpush1.msra.mxu0 %v1729
    %2121 = vmatprep.subr.mxu0 %v1733
    %2122 = vmatpush1.msra.mxu0 %v1732
    %2123 = vmatprep.subr.mxu0 %v1736
    %2124 = vmatpush1.msra.mxu0 %v1735
    %2125 = vmatprep.subr.mxu0 %v1739
    %2126 = vmatpush1.msra.mxu0 %v1738
    %2127 = vmatprep.subr.mxu0 %v1742
    %2128 = vmatpush1.msra.mxu0 %v1741
    %2129 = vmatprep.subr.mxu0 %v1745
    %2130 = vmatpush1.msra.mxu0 %v1744
    %2131 = vmatprep.subr.mxu0 %v1748
    %2132 = vmatpush1.msra.mxu0 %v1747
    %2133 = vmatprep.subr.mxu0 %v1751
    %2134 = vmatpush1.msra.mxu0 %v1750
    %2135 = vmatprep.subr.mxu0 %v1754
    %2136 = vmatpush1.msra.mxu0 %v1753
    %2137 = vmatprep.subr.mxu0 %v1757
    %2138 = vmatpush1.msra.mxu0 %v1756
    %2139 = vmatprep.subr.mxu0 %v1760
    %2140 = vmatpush1.msra.mxu0 %v1759
    %2141 = vmatprep.subr.mxu0 %v1763
    %2142 = vmatpush1.msra.mxu0 %v1762
    %2143 = vmatprep.subr.mxu0 %v1766
    %2144 = vmatpush1.msra.mxu0 %v1765
    %2145 = vmatprep.subr.mxu0 %v1769
    %2146 = vmatpush1.msra.mxu0 %v1768
    %2147 = vmatprep.subr.mxu0 %v1772
    %2148 = vmatpush1.msra.mxu0 %v1771
    %2149 = vmatprep.subr.mxu0 %v1775
    %2150 = vmatpush1.msra.mxu0 %v1774
    %2151 = vmatprep.subr.mxu0 %v1778
    %2152 = vmatpush1.msra.mxu0 %v1777
    %2153 = vmatprep.subr.mxu0 %v1781
    %2154 = vmatpush1.msra.mxu0 %v1780
    %2155 = vmatprep.subr.mxu0 %v1784
    %2156 = vmatpush1.msra.mxu0 %v1783
    %2157 = vmatprep.subr.mxu0 %v1787
    %2158 = vmatpush1.msra.mxu0 %v1786
    %2159 = vmatprep.subr.mxu0 %v1790
    %2160 = vmatpush1.msra.mxu0 %v1789
    %2161 = vmatprep.subr.mxu0 %v1793
    %2162 = vmatpush1.msra.mxu0 %v1792
    %2163 = vmatprep.subr.mxu0 %v1796
    %2164 = vmatpush1.msra.mxu0 %v1795
    %2165 = vmatprep.mubr.f32.mxu0 %v1690
    %2166 = vmatmul.mubr.f32.gmra.mrb[0].mxu0 %v1681
    %v2167 = vpop.f32.mrb[0].mxu0
    %v2168 = vadd.f32 0.0, %v2167
    %v2169 = vpop.f32.mrb[0].mxu0
    %v2170 = vadd.f32 0.0, %v2169
    %2171 = vdwg.mxu0
    %2172 = vmatprep.subr.mxu0 %v1799
    %2173 = vmatpush1.msra.mxu0 %v1798
    %2174 = vmatprep.subr.mxu0 %v1802
    %2175 = vmatpush1.msra.mxu0 %v1801
    %2176 = vmatprep.subr.mxu0 %v1805
    %2177 = vmatpush1.msra.mxu0 %v1804
    %2178 = vmatprep.subr.mxu0 %v1808
    %2179 = vmatpush1.msra.mxu0 %v1807
    %2180 = vmatprep.subr.mxu0 0.0
    %2181 = vmatpush1.msra.mxu0 0.0
    %2182 = vmatprep.subr.mxu0 0.0
    %2183 = vmatpush1.msra.mxu0 0.0
    %2184 = vmatprep.subr.mxu0 0.0
    %2185 = vmatpush1.msra.mxu0 0.0
    %2186 = vmatprep.subr.mxu0 0.0
    %2187 = vmatpush1.msra.mxu0 0.0
    %2188 = vmatprep.subr.mxu0 0.0
    %2189 = vmatpush1.msra.mxu0 0.0
    %2190 = vmatprep.subr.mxu0 0.0
    %2191 = vmatpush1.msra.mxu0 0.0
    %2192 = vmatprep.subr.mxu0 0.0
    %2193 = vmatpush1.msra.mxu0 0.0
    %2194 = vmatprep.subr.mxu0 0.0
    %2195 = vmatpush1.msra.mxu0 0.0
    %2196 = vmatprep.subr.mxu0 0.0
    %2197 = vmatpush1.msra.mxu0 0.0
    %2198 = vmatprep.subr.mxu0 0.0
    %2199 = vmatpush1.msra.mxu0 0.0
    %2200 = vmatprep.subr.mxu0 0.0
    %2201 = vmatpush1.msra.mxu0 0.0
    %2202 = vmatprep.subr.mxu0 0.0
    %2203 = vmatpush1.msra.mxu0 0.0
    %2204 = vmatprep.subr.mxu0 0.0
    %2205 = vmatpush1.msra.mxu0 0.0
    %2206 = vmatprep.subr.mxu0 0.0
    %2207 = vmatpush1.msra.mxu0 0.0
    %2208 = vmatprep.subr.mxu0 0.0
    %2209 = vmatpush1.msra.mxu0 0.0
    %2210 = vmatprep.subr.mxu0 0.0
    %2211 = vmatpush1.msra.mxu0 0.0
    %2212 = vmatprep.subr.mxu0 0.0
    %2213 = vmatpush1.msra.mxu0 0.0
    %2214 = vmatprep.subr.mxu0 0.0
    %2215 = vmatpush1.msra.mxu0 0.0
    %2216 = vmatprep.subr.mxu0 0.0
    %2217 = vmatpush1.msra.mxu0 0.0
    %2218 = vmatprep.subr.mxu0 0.0
    %2219 = vmatpush1.msra.mxu0 0.0
    %2220 = vmatprep.subr.mxu0 0.0
    %2221 = vmatpush1.msra.mxu0 0.0
    %2222 = vmatprep.subr.mxu0 0.0
    %2223 = vmatpush1.msra.mxu0 0.0
    %2224 = vmatprep.subr.mxu0 0.0
    %2225 = vmatpush1.msra.mxu0 0.0
    %2226 = vmatprep.subr.mxu0 0.0
    %2227 = vmatpush1.msra.mxu0 0.0
    %2228 = vmatprep.subr.mxu0 0.0
    %2229 = vmatpush1.msra.mxu0 0.0
    %2230 = vmatprep.subr.mxu0 0.0
    %2231 = vmatpush1.msra.mxu0 0.0
    %2232 = vmatprep.subr.mxu0 0.0
    %2233 = vmatpush1.msra.mxu0 0.0
    %2234 = vmatprep.subr.mxu0 0.0
    %2235 = vmatpush1.msra.mxu0 0.0
    %2236 = vmatprep.mubr.f32.mxu0 0.0
    %2237 = vmatmul.mubr.f32.gmra.mrb[0].mxu0 %v2099
    %v2238 = vpop.f32.mrb[0].mxu0
    %v2239 = vadd.f32 %v2168, %v2238
    %v2240 = vpop.f32.mrb[0].mxu0
    %v2241 = vadd.f32 %v2170, %v2240
    %2242 = vdwg.mxu0
    %2243 = vmatprep.subr.mxu0 0.0
    %2244 = vmatpush1.msra.mxu0 %v1704
    %2245 = vmatprep.subr.mxu0 0.0
    %2246 = vmatpush1.msra.mxu0 %v1707
    %2247 = vmatprep.subr.mxu0 0.0
    %2248 = vmatpush1.msra.mxu0 %v1710
    %2249 = vmatprep.subr.mxu0 0.0
    %2250 = vmatpush1.msra.mxu0 %v1713
    %2251 = vmatprep.subr.mxu0 0.0
    %2252 = vmatpush1.msra.mxu0 %v1716
    %2253 = vmatprep.subr.mxu0 0.0
    %2254 = vmatpush1.msra.mxu0 %v1719
    %2255 = vmatprep.subr.mxu0 0.0
    %2256 = vmatpush1.msra.mxu0 %v1722
    %2257 = vmatprep.subr.mxu0 0.0
    %2258 = vmatpush1.msra.mxu0 %v1725
    %2259 = vmatprep.subr.mxu0 0.0
    %2260 = vmatpush1.msra.mxu0 %v1728
    %2261 = vmatprep.subr.mxu0 0.0
    %2262 = vmatpush1.msra.mxu0 %v1731
    %2263 = vmatprep.subr.mxu0 0.0
    %2264 = vmatpush1.msra.mxu0 %v1734
    %2265 = vmatprep.subr.mxu0 0.0
    %2266 = vmatpush1.msra.mxu0 %v1737
    %2267 = vmatprep.subr.mxu0 0.0
    %2268 = vmatpush1.msra.mxu0 %v1740
    %2269 = vmatprep.subr.mxu0 0.0
    %2270 = vmatpush1.msra.mxu0 %v1743
    %2271 = vmatprep.subr.mxu0 0.0
    %2272 = vmatpush1.msra.mxu0 %v1746
    %2273 = vmatprep.subr.mxu0 0.0
    %2274 = vmatpush1.msra.mxu0 %v1749
    %2275 = vmatprep.subr.mxu0 0.0
    %2276 = vmatpush1.msra.mxu0 %v1752
    %2277 = vmatprep.subr.mxu0 0.0
    %2278 = vmatpush1.msra.mxu0 %v1755
    %2279 = vmatprep.subr.mxu0 0.0
    %2280 = vmatpush1.msra.mxu0 %v1758
    %2281 = vmatprep.subr.mxu0 0.0
    %2282 = vmatpush1.msra.mxu0 %v1761
    %2283 = vmatprep.subr.mxu0 0.0
    %2284 = vmatpush1.msra.mxu0 %v1764
    %2285 = vmatprep.subr.mxu0 0.0
    %2286 = vmatpush1.msra.mxu0 %v1767
    %2287 = vmatprep.subr.mxu0 0.0
    %2288 = vmatpush1.msra.mxu0 %v1770
    %2289 = vmatprep.subr.mxu0 0.0
    %2290 = vmatpush1.msra.mxu0 %v1773
    %2291 = vmatprep.subr.mxu0 0.0
    %2292 = vmatpush1.msra.mxu0 %v1776
    %2293 = vmatprep.subr.mxu0 0.0
    %2294 = vmatpush1.msra.mxu0 %v1779
    %2295 = vmatprep.subr.mxu0 0.0
    %2296 = vmatpush1.msra.mxu0 %v1782
    %2297 = vmatprep.subr.mxu0 0.0
    %2298 = vmatpush1.msra.mxu0 %v1785
    %2299 = vmatprep.subr.mxu0 0.0
    %2300 = vmatpush1.msra.mxu0 %v1788
    %2301 = vmatprep.subr.mxu0 0.0
    %2302 = vmatpush1.msra.mxu0 %v1791
    %2303 = vmatprep.subr.mxu0 0.0
    %2304 = vmatpush1.msra.mxu0 %v1794
    %2305 = vmatprep.subr.mxu0 0.0
    %2306 = vmatpush1.msra.mxu0 %v1797
    %2307 = vmatprep.mubr.f32.mxu0 %v1690
    %2308 = vmatmul.mubr.f32.gmra.mrb[0].mxu0 %v1681
    %v2309 = vpop.f32.mrb[0].mxu0
    %v2310 = vadd.f32 0.0, %v2309
    %v2311 = vpop.f32.mrb[0].mxu0
    %2312 = vdwg.mxu0
    %2313 = vmatprep.subr.mxu0 0.0
    %2314 = vmatpush1.msra.mxu0 %v1800
    %2315 = vmatprep.subr.mxu0 0.0
    %2316 = vmatpush1.msra.mxu0 %v1803
    %2317 = vmatprep.subr.mxu0 0.0
    %2318 = vmatpush1.msra.mxu0 %v1806
    %2319 = vmatprep.subr.mxu0 0.0
    %2320 = vmatpush1.msra.mxu0 %v1809
    %2321 = vmatprep.subr.mxu0 0.0
    %2322 = vmatpush1.msra.mxu0 0.0
    %2323 = vmatprep.subr.mxu0 0.0
    %2324 = vmatpush1.msra.mxu0 0.0
    %2325 = vmatprep.subr.mxu0 0.0
    %2326 = vmatpush1.msra.mxu0 0.0
    %2327 = vmatprep.subr.mxu0 0.0
    %2328 = vmatpush1.msra.mxu0 0.0
    %2329 = vmatprep.subr.mxu0 0.0
    %2330 = vmatpush1.msra.mxu0 0.0
    %2331 = vmatprep.subr.mxu0 0.0
    %2332 = vmatpush1.msra.mxu0 0.0
    %2333 = vmatprep.subr.mxu0 0.0
    %2334 = vmatpush1.msra.mxu0 0.0
    %2335 = vmatprep.subr.mxu0 0.0
    %2336 = vmatpush1.msra.mxu0 0.0
    %2337 = vmatprep.subr.mxu0 0.0
    %2338 = vmatpush1.msra.mxu0 0.0
    %2339 = vmatprep.subr.mxu0 0.0
    %2340 = vmatpush1.msra.mxu0 0.0
    %2341 = vmatprep.subr.mxu0 0.0
    %2342 = vmatpush1.msra.mxu0 0.0
    %2343 = vmatprep.subr.mxu0 0.0
    %2344 = vmatpush1.msra.mxu0 0.0
    %2345 = vmatprep.subr.mxu0 0.0
    %2346 = vmatpush1.msra.mxu0 0.0
    %2347 = vmatprep.subr.mxu0 0.0
    %2348 = vmatpush1.msra.mxu0 0.0
    %2349 = vmatprep.subr.mxu0 0.0
    %2350 = vmatpush1.msra.mxu0 0.0
    %2351 = vmatprep.subr.mxu0 0.0
    %2352 = vmatpush1.msra.mxu0 0.0
    %2353 = vmatprep.subr.mxu0 0.0
    %2354 = vmatpush1.msra.mxu0 0.0
    %2355 = vmatprep.subr.mxu0 0.0
    %2356 = vmatpush1.msra.mxu0 0.0
    %2357 = vmatprep.subr.mxu0 0.0
    %2358 = vmatpush1.msra.mxu0 0.0
    %2359 = vmatprep.subr.mxu0 0.0
    %2360 = vmatpush1.msra.mxu0 0.0
    %2361 = vmatprep.subr.mxu0 0.0
    %2362 = vmatpush1.msra.mxu0 0.0
    %2363 = vmatprep.subr.mxu0 0.0
    %2364 = vmatpush1.msra.mxu0 0.0
    %2365 = vmatprep.subr.mxu0 0.0
    %2366 = vmatpush1.msra.mxu0 0.0
    %2367 = vmatprep.subr.mxu0 0.0
    %2368 = vmatpush1.msra.mxu0 0.0
    %2369 = vmatprep.subr.mxu0 0.0
    %2370 = vmatpush1.msra.mxu0 0.0
    %2371 = vmatprep.subr.mxu0 0.0
    %2372 = vmatpush1.msra.mxu0 0.0
    %2373 = vmatprep.subr.mxu0 0.0
    %2374 = vmatpush1.msra.mxu0 0.0
    %2375 = vmatprep.subr.mxu0 0.0
    %2376 = vmatpush1.msra.mxu0 0.0
    %2377 = vmatprep.mubr.f32.mxu0 0.0
    %2378 = vmatmul.mubr.f32.gmra.mrb[0].mxu0 %v2099
    %v2379 = vpop.f32.mrb[0].mxu0
    %v2380 = vadd.f32 %v2310, %v2379
    %v2381 = vpop.f32.mrb[0].mxu0
    %2382 = vdwg.mxu0
    %v2383 = vmul.f32 %v2239, 0.0030864198
    %v2384 = vmul.f32 %v2241, 0.0030864198
    %v2385 = vmul.f32 %v2380, 0.0030864198
    %v2386 = vmul.f32 %v2095, %v2095
    %v2387 = vmul.f32 %v2096, %v2096
    %v2388 = vmul.f32 %v2097, %v2097
    %v2389 = vsub.f32 %v2383, %v2386
    %v2390 = vsub.f32 %v2384, %v2387
    %v2391 = vsub.f32 %v2385, %v2388
    %v2392 = vld [vmem:[#allocation10] sm:$0x3f]
    %v2393 = vadd.f32 %v2389, 1e-05
    %v2394 = vadd.f32 %v2390, 1e-05
    %v2395 = vadd.f32 %v2391, 1e-05
    %v2396 = vrsqrt.pop %v2393
    %v2397 = vrsqrt.pop %v2394
    %v2398 = vrsqrt.pop %v2395
    %v2402 = vcombine.low %v2396, %v2397
    %v2404 = vunpack.c.l.s4 1983009808
    %v2405 = vunpack.c.0.s8 %v2404
    %v2406 = vlaneseq
    %v2407 = vshrl.u32 %v2406, 7
    %v2408 = vsub.s32 %v2405, %v2407
    %v2409 = vrot.slane %v2402, %v2408
    %v2411 = vunpack.c.l.s4 1983009808
    %v2412 = vunpack.c.0.s8 %v2411
    %v2413 = vlaneseq
    %v2414 = vshrl.u32 %v2413, 7
    %v2415 = vsub.s32 %v2412, %v2414
    %v2416 = vrot.slane %v2398, %v2415
    %v2417 = vcombine.low %v2409, %v2416
    %v2419 = vmul.f32 %v2392, %v2417
    %v2421 = vlaneseq
    %v2422 = vshrl.u32 %v2421, 7
    %v2423 = vsub.s32 0, %v2422
    %v2424 = vrot.slane %v2419, %v2423
    %v2425 = vlaneseq
    %v2426 = vshrl.u32 %v2425, 7
    %v2427 = vsub.s32 2, %v2426
    %v2428 = vrot.slane %v2419, %v2427
    %v2429 = vlaneseq
    %v2430 = vshrl.u32 %v2429, 7
    %v2431 = vsub.s32 4, %v2430
    %v2432 = vrot.slane %v2419, %v2431
    %v2436 = vmul.f32 %v2095, %v2424
    %v2437 = vmul.f32 %v2096, %v2428
    %v2438 = vmul.f32 %v2097, %v2432
    %v2442 = vcombine.low %v2436, %v2437
    %v2444 = vunpack.c.l.s4 1983009808
    %v2445 = vunpack.c.0.s8 %v2444
    %v2446 = vlaneseq
    %v2447 = vshrl.u32 %v2446, 7
    %v2448 = vsub.s32 %v2445, %v2447
    %v2449 = vrot.slane %v2442, %v2448
    %v2451 = vunpack.c.l.s4 1983009808
    %v2452 = vunpack.c.0.s8 %v2451
    %v2453 = vlaneseq
    %v2454 = vshrl.u32 %v2453, 7
    %v2455 = vsub.s32 %v2452, %v2454
    %v2456 = vrot.slane %v2438, %v2455
    %v2457 = vcombine.low %v2449, %v2456
    %v2458 = vrot.slane %v2457, 7
    %v2460 = vsub.f32 %v2392, %v2458
    %v2461 = vlaneseq
    %v2462 = vshrl.u32 %v2461, 7
    %v2463 = vsub.s32 0, %v2462
    %v2464 = vrot.slane %v2424, %v2463
    %v2465 = vlaneseq
    %v2466 = vshrl.u32 %v2465, 7
    %v2467 = vsub.s32 0, %v2466
    %v2468 = vrot.slane %v2428, %v2467
    %v2469 = vlaneseq
    %v2470 = vshrl.u32 %v2469, 7
    %v2471 = vsub.s32 0, %v2470
    %v2472 = vrot.slane %v2432, %v2471
    %v2473 = vmul.f32 %v1623, %v2464
    %v2474 = vmul.f32 %v1624, %v2468
    %v2475 = vmul.f32 %v1625, %v2472
    %v2476 = vmul.f32 %v1626, %v2464
    %v2477 = vmul.f32 %v1627, %v2468
    %v2478 = vmul.f32 %v1628, %v2472
    %v2479 = vmul.f32 %v1629, %v2464
    %v2480 = vmul.f32 %v1630, %v2468
    %v2481 = vmul.f32 %v1631, %v2472
    %v2483 = vlaneseq
    %v2484 = vshrl.u32 %v2483, 7
    %v2485 = vsub.s32 1, %v2484
    %v2486 = vrot.slane %v2460, %v2485
    %v2487 = vlaneseq
    %v2488 = vshrl.u32 %v2487, 7
    %v2489 = vsub.s32 3, %v2488
    %v2490 = vrot.slane %v2460, %v2489
    %v2491 = vlaneseq
    %v2492 = vshrl.u32 %v2491, 7
    %v2493 = vsub.s32 5, %v2492
    %v2494 = vrot.slane %v2460, %v2493
    %v2498 = vlaneseq
    %v2499 = vshrl.u32 %v2498, 7
    %v2500 = vsub.s32 1, %v2499
    %v2501 = vrot.slane %v2486, %v2500
    %v2502 = vlaneseq
    %v2503 = vshrl.u32 %v2502, 7
    %v2504 = vsub.s32 1, %v2503
    %v2505 = vrot.slane %v2490, %v2504
    %v2506 = vlaneseq
    %v2507 = vshrl.u32 %v2506, 7
    %v2508 = vsub.s32 1, %v2507
    %v2509 = vrot.slane %v2494, %v2508
    %v2510 = vadd.f32 %v2473, %v2501
    %v2511 = vadd.f32 %v2474, %v2505
    %v2512 = vadd.f32 %v2475, %v2509
    %v2513 = vadd.f32 %v2476, %v2501
    %v2514 = vadd.f32 %v2477, %v2505
    %v2515 = vadd.f32 %v2478, %v2509
    %v2516 = vadd.f32 %v2479, %v2501
    %v2517 = vadd.f32 %v2480, %v2505
    %v2518 = vadd.f32 %v2481, %v2509
    %v2519 = vmax.f32 %v2510, 0.0
    %v2520 = vmax.f32 %v2511, 0.0
    %v2521 = vmax.f32 %v2512, 0.0
    %v2522 = vmax.f32 %v2513, 0.0
    %v2523 = vmax.f32 %v2514, 0.0
    %v2524 = vmax.f32 %v2515, 0.0
    %v2525 = vmax.f32 %v2516, 0.0
    %v2526 = vmax.f32 %v2517, 0.0
    %v2527 = vmax.f32 %v2518, 0.0
    %v2528 = vld [vmem:[#allocation11] sm:$0x7f]
    %vm2529 = vcmask 146432
    %v2531 = vsel %vm2529, %v2528, 0
    %v2534 = vsel %vm1633, %v2525, 0
    %v2537 = vsel %vm1633, %v2526, 0
    %v2540 = vsel %vm1633, %v2527, 0
    %2542 = vmatprep.subr.mxu0 %v2520
    %2543 = vmatpush1.msra.mxu0 %v2519
    %2544 = vmatprep.subr.mxu0 %v2523
    %2545 = vmatpush1.msra.mxu0 %v2522
    %2546 = vmatprep.subr.mxu0 %v2537
    %2547 = vmatpush1.msra.mxu0 %v2534
    %2548 = vmatprep.subr.mxu0 0.0
    %2549 = vmatpush1.msra.mxu0 0.0
    %2550 = vmatprep.subr.mxu0 0.0
    %2551 = vmatpush1.msra.mxu0 0.0
    %2552 = vmatprep.subr.mxu0 0.0
    %2553 = vmatpush1.msra.mxu0 0.0
    %2554 = vmatprep.subr.mxu0 0.0
    %2555 = vmatpush1.msra.mxu0 0.0
    %2556 = vmatprep.subr.mxu0 0.0
    %2557 = vmatpush1.msra.mxu0 0.0
    %2558 = vmatprep.subr.mxu0 0.0
    %2559 = vmatpush1.msra.mxu0 0.0
    %2560 = vmatprep.subr.mxu0 0.0
    %2561 = vmatpush1.msra.mxu0 0.0
    %2562 = vmatprep.subr.mxu0 0.0
    %2563 = vmatpush1.msra.mxu0 0.0
    %2564 = vmatprep.subr.mxu0 0.0
    %2565 = vmatpush1.msra.mxu0 0.0
    %2566 = vmatprep.subr.mxu0 0.0
    %2567 = vmatpush1.msra.mxu0 0.0
    %2568 = vmatprep.subr.mxu0 0.0
    %2569 = vmatpush1.msra.mxu0 0.0
    %2570 = vmatprep.subr.mxu0 0.0
    %2571 = vmatpush1.msra.mxu0 0.0
    %2572 = vmatprep.subr.mxu0 0.0
    %2573 = vmatpush1.msra.mxu0 0.0
    %2574 = vmatprep.subr.mxu0 0.0
    %2575 = vmatpush1.msra.mxu0 0.0
    %2576 = vmatprep.subr.mxu0 0.0
    %2577 = vmatpush1.msra.mxu0 0.0
    %2578 = vmatprep.subr.mxu0 0.0
    %2579 = vmatpush1.msra.mxu0 0.0
    %2580 = vmatprep.subr.mxu0 0.0
    %2581 = vmatpush1.msra.mxu0 0.0
    %2582 = vmatprep.subr.mxu0 0.0
    %2583 = vmatpush1.msra.mxu0 0.0
    %2584 = vmatprep.subr.mxu0 0.0
    %2585 = vmatpush1.msra.mxu0 0.0
    %2586 = vmatprep.subr.mxu0 0.0
    %2587 = vmatpush1.msra.mxu0 0.0
    %2588 = vmatprep.subr.mxu0 0.0
    %2589 = vmatpush1.msra.mxu0 0.0
    %2590 = vmatprep.subr.mxu0 0.0
    %2591 = vmatpush1.msra.mxu0 0.0
    %2592 = vmatprep.subr.mxu0 0.0
    %2593 = vmatpush1.msra.mxu0 0.0
    %2594 = vmatprep.subr.mxu0 0.0
    %2595 = vmatpush1.msra.mxu0 0.0
    %2596 = vmatprep.subr.mxu0 0.0
    %2597 = vmatpush1.msra.mxu0 0.0
    %2598 = vmatprep.subr.mxu0 0.0
    %2599 = vmatpush1.msra.mxu0 0.0
    %2600 = vmatprep.subr.mxu0 0.0
    %2601 = vmatpush1.msra.mxu0 0.0
    %2602 = vmatprep.subr.mxu0 0.0
    %2603 = vmatpush1.msra.mxu0 0.0
    %2604 = vmatprep.subr.mxu0 0.0
    %2605 = vmatpush1.msra.mxu0 0.0
    %2606 = vmatprep.mubr.f32.mxu0 0.0
    %2607 = vmatmul.mubr.f32.gmra.mrb[0].mxu0 %v2531
    %v2608 = vpop.f32.mrb[0].mxu0
    %v2609 = vadd.f32 0.0, %v2608
    %v2610 = vpop.f32.mrb[0].mxu0
    %v2611 = vadd.f32 0.0, %v2610
    %2612 = vdwg.mxu0
    %2613 = vmatprep.subr.mxu0 0.0
    %2614 = vmatpush1.msra.mxu0 %v2521
    %2615 = vmatprep.subr.mxu0 0.0
    %2616 = vmatpush1.msra.mxu0 %v2524
    %2617 = vmatprep.subr.mxu0 0.0
    %2618 = vmatpush1.msra.mxu0 %v2540
    %2619 = vmatprep.subr.mxu0 0.0
    %2620 = vmatpush1.msra.mxu0 0.0
    %2621 = vmatprep.subr.mxu0 0.0
    %2622 = vmatpush1.msra.mxu0 0.0
    %2623 = vmatprep.subr.mxu0 0.0
    %2624 = vmatpush1.msra.mxu0 0.0
    %2625 = vmatprep.subr.mxu0 0.0
    %2626 = vmatpush1.msra.mxu0 0.0
    %2627 = vmatprep.subr.mxu0 0.0
    %2628 = vmatpush1.msra.mxu0 0.0
    %2629 = vmatprep.subr.mxu0 0.0
    %2630 = vmatpush1.msra.mxu0 0.0
    %2631 = vmatprep.subr.mxu0 0.0
    %2632 = vmatpush1.msra.mxu0 0.0
    %2633 = vmatprep.subr.mxu0 0.0
    %2634 = vmatpush1.msra.mxu0 0.0
    %2635 = vmatprep.subr.mxu0 0.0
    %2636 = vmatpush1.msra.mxu0 0.0
    %2637 = vmatprep.subr.mxu0 0.0
    %2638 = vmatpush1.msra.mxu0 0.0
    %2639 = vmatprep.subr.mxu0 0.0
    %2640 = vmatpush1.msra.mxu0 0.0
    %2641 = vmatprep.subr.mxu0 0.0
    %2642 = vmatpush1.msra.mxu0 0.0
    %2643 = vmatprep.subr.mxu0 0.0
    %2644 = vmatpush1.msra.mxu0 0.0
    %2645 = vmatprep.subr.mxu0 0.0
    %2646 = vmatpush1.msra.mxu0 0.0
    %2647 = vmatprep.subr.mxu0 0.0
    %2648 = vmatpush1.msra.mxu0 0.0
    %2649 = vmatprep.subr.mxu0 0.0
    %2650 = vmatpush1.msra.mxu0 0.0
    %2651 = vmatprep.subr.mxu0 0.0
    %2652 = vmatpush1.msra.mxu0 0.0
    %2653 = vmatprep.subr.mxu0 0.0
    %2654 = vmatpush1.msra.mxu0 0.0
    %2655 = vmatprep.subr.mxu0 0.0
    %2656 = vmatpush1.msra.mxu0 0.0
    %2657 = vmatprep.subr.mxu0 0.0
    %2658 = vmatpush1.msra.mxu0 0.0
    %2659 = vmatprep.subr.mxu0 0.0
    %2660 = vmatpush1.msra.mxu0 0.0
    %2661 = vmatprep.subr.mxu0 0.0
    %2662 = vmatpush1.msra.mxu0 0.0
    %2663 = vmatprep.subr.mxu0 0.0
    %2664 = vmatpush1.msra.mxu0 0.0
    %2665 = vmatprep.subr.mxu0 0.0
    %2666 = vmatpush1.msra.mxu0 0.0
    %2667 = vmatprep.subr.mxu0 0.0
    %2668 = vmatpush1.msra.mxu0 0.0
    %2669 = vmatprep.subr.mxu0 0.0
    %2670 = vmatpush1.msra.mxu0 0.0
    %2671 = vmatprep.subr.mxu0 0.0
    %2672 = vmatpush1.msra.mxu0 0.0
    %2673 = vmatprep.subr.mxu0 0.0
    %2674 = vmatpush1.msra.mxu0 0.0
    %2675 = vmatprep.subr.mxu0 0.0
    %2676 = vmatpush1.msra.mxu0 0.0
    %2677 = vmatprep.mubr.f32.mxu0 0.0
    %2678 = vmatmul.mubr.f32.gmra.mrb[0].mxu0 %v2531
    %v2679 = vpop.f32.mrb[0].mxu0
    %v2680 = vadd.f32 0.0, %v2679
    %v2681 = vpop.f32.mrb[0].mxu0
    %2682 = vdwg.mxu0
    %v2683 = vld [vmem:[#allocation13] sm:$0xff]
    %v2684 = vld [vmem:[#allocation13 + $0x8] sm:$0xff]
    %v2685 = vld [vmem:[#allocation13 + $0x10] sm:$0xff]
    %v2686 = vld [vmem:[#allocation13 + $0x18] sm:$0xff]
    %v2687 = vld [vmem:[#allocation13 + $0x20] sm:$0xff]
    %v2688 = vld [vmem:[#allocation13 + $0x28] sm:$0xff]
    %v2689 = vld [vmem:[#allocation13 + $0x30] sm:$0xff]
    %v2690 = vld [vmem:[#allocation13 + $0x38] sm:$0xff]
    %v2691 = vld [vmem:[#allocation13 + $0x40] sm:$0xff]
    %v2692 = vld [vmem:[#allocation13 + $0x48] sm:$0xff]
    %v2693 = vld [vmem:[#allocation13 + $0x50] sm:$0xff]
    %v2694 = vld [vmem:[#allocation13 + $0x58] sm:$0xff]
    %v2695 = vld [vmem:[#allocation13 + $0x60] sm:$0xff]
    %v2696 = vld [vmem:[#allocation13 + $0x68] sm:$0xff]
    %v2697 = vld [vmem:[#allocation13 + $0x70] sm:$0xff]
    %v2698 = vld [vmem:[#allocation13 + $0x78] sm:$0xff]
    %v2699 = vld [vmem:[#allocation13 + $0x80] sm:$0xff]
    %v2700 = vld [vmem:[#allocation13 + $0x88] sm:$0xff]
    %v2701 = vld [vmem:[#allocation13 + $0x90] sm:$0xff]
    %v2702 = vld [vmem:[#allocation13 + $0x98] sm:$0xff]
    %v2703 = vld [vmem:[#allocation13 + $0xa0] sm:$0xff]
    %v2704 = vld [vmem:[#allocation13 + $0xa8] sm:$0xff]
    %v2705 = vld [vmem:[#allocation13 + $0xb0] sm:$0xff]
    %v2706 = vld [vmem:[#allocation13 + $0xb8] sm:$0xff]
    %v2707 = vld [vmem:[#allocation13 + $0xc0] sm:$0xff]
    %v2708 = vld [vmem:[#allocation13 + $0xc8] sm:$0xff]
    %v2709 = vld [vmem:[#allocation13 + $0xd0] sm:$0xff]
    %v2710 = vld [vmem:[#allocation13 + $0xd8] sm:$0xff]
    %v2711 = vld [vmem:[#allocation13 + $0xe0] sm:$0xff]
    %v2712 = vld [vmem:[#allocation13 + $0xe8] sm:$0xff]
    %v2713 = vld [vmem:[#allocation13 + $0xf0] sm:$0xff]
    %v2714 = vld [vmem:[#allocation13 + $0xf8] sm:$0xff]
    %v2715 = vld [vmem:[#allocation13 + $0x100] sm:$0xff]
    %v2716 = vld [vmem:[#allocation13 + $0x108] sm:$0xff]
    %v2717 = vld [vmem:[#allocation13 + $0x110] sm:$0xff]
    %v2718 = vld [vmem:[#allocation13 + $0x118] sm:$0xff]
    %s2719 = scalar_lea.vmem [#allocation11], 8
    %v2720 = vld [vmem:[%s2719] sm:$0x7f]
    %v2722 = vsel %vm2529, %v2720, 0
    %2724 = vmatprep.subr.mxu0 %v2520
    %2725 = vmatpush1.msra.mxu0 %v2519
    %2726 = vmatprep.subr.mxu0 %v2523
    %2727 = vmatpush1.msra.mxu0 %v2522
    %2728 = vmatprep.subr.mxu0 %v2537
    %2729 = vmatpush1.msra.mxu0 %v2534
    %2730 = vmatprep.subr.mxu0 0.0
    %2731 = vmatpush1.msra.mxu0 0.0
    %2732 = vmatprep.subr.mxu0 0.0
    %2733 = vmatpush1.msra.mxu0 0.0
    %2734 = vmatprep.subr.mxu0 0.0
    %2735 = vmatpush1.msra.mxu0 0.0
    %2736 = vmatprep.subr.mxu0 0.0
    %2737 = vmatpush1.msra.mxu0 0.0
    %2738 = vmatprep.subr.mxu0 0.0
    %2739 = vmatpush1.msra.mxu0 0.0
    %2740 = vmatprep.subr.mxu0 0.0
    %2741 = vmatpush1.msra.mxu0 0.0
    %2742 = vmatprep.subr.mxu0 0.0
    %2743 = vmatpush1.msra.mxu0 0.0
    %2744 = vmatprep.subr.mxu0 0.0
    %2745 = vmatpush1.msra.mxu0 0.0
    %2746 = vmatprep.subr.mxu0 0.0
    %2747 = vmatpush1.msra.mxu0 0.0
    %2748 = vmatprep.subr.mxu0 0.0
    %2749 = vmatpush1.msra.mxu0 0.0
    %2750 = vmatprep.subr.mxu0 0.0
    %2751 = vmatpush1.msra.mxu0 0.0
    %2752 = vmatprep.subr.mxu0 0.0
    %2753 = vmatpush1.msra.mxu0 0.0
    %2754 = vmatprep.subr.mxu0 0.0
    %2755 = vmatpush1.msra.mxu0 0.0
    %2756 = vmatprep.subr.mxu0 0.0
    %2757 = vmatpush1.msra.mxu0 0.0
    %2758 = vmatprep.subr.mxu0 0.0
    %2759 = vmatpush1.msra.mxu0 0.0
    %2760 = vmatprep.subr.mxu0 0.0
    %2761 = vmatpush1.msra.mxu0 0.0
    %2762 = vmatprep.subr.mxu0 0.0
    %2763 = vmatpush1.msra.mxu0 0.0
    %2764 = vmatprep.subr.mxu0 0.0
    %2765 = vmatpush1.msra.mxu0 0.0
    %2766 = vmatprep.subr.mxu0 0.0
    %2767 = vmatpush1.msra.mxu0 0.0
    %2768 = vmatprep.subr.mxu0 0.0
    %2769 = vmatpush1.msra.mxu0 0.0
    %2770 = vmatprep.subr.mxu0 0.0
    %2771 = vmatpush1.msra.mxu0 0.0
    %2772 = vmatprep.subr.mxu0 0.0
    %2773 = vmatpush1.msra.mxu0 0.0
    %2774 = vmatprep.subr.mxu0 0.0
    %2775 = vmatpush1.msra.mxu0 0.0
    %2776 = vmatprep.subr.mxu0 0.0
    %2777 = vmatpush1.msra.mxu0 0.0
    %2778 = vmatprep.subr.mxu0 0.0
    %2779 = vmatpush1.msra.mxu0 0.0
    %2780 = vmatprep.subr.mxu0 0.0
    %2781 = vmatpush1.msra.mxu0 0.0
    %2782 = vmatprep.subr.mxu0 0.0
    %2783 = vmatpush1.msra.mxu0 0.0
    %2784 = vmatprep.subr.mxu0 0.0
    %2785 = vmatpush1.msra.mxu0 0.0
    %2786 = vmatprep.subr.mxu0 0.0
    %2787 = vmatpush1.msra.mxu0 0.0
    %2788 = vmatprep.mubr.f32.mxu0 0.0
    %2789 = vmatmul.mubr.f32.gmra.mrb[0].mxu0 %v2722
    %v2790 = vpop.f32.mrb[0].mxu0
    %v2791 = vadd.f32 0.0, %v2790
    %v2792 = vpop.f32.mrb[0].mxu0
    %v2793 = vadd.f32 0.0, %v2792
    %2794 = vdwg.mxu0
    %2795 = vmatprep.subr.mxu0 0.0
    %2796 = vmatpush1.msra.mxu0 %v2521
    %2797 = vmatprep.subr.mxu0 0.0
    %2798 = vmatpush1.msra.mxu0 %v2524
    %2799 = vmatprep.subr.mxu0 0.0
    %2800 = vmatpush1.msra.mxu0 %v2540
    %2801 = vmatprep.subr.mxu0 0.0
    %2802 = vmatpush1.msra.mxu0 0.0
    %2803 = vmatprep.subr.mxu0 0.0
    %2804 = vmatpush1.msra.mxu0 0.0
    %2805 = vmatprep.subr.mxu0 0.0
    %2806 = vmatpush1.msra.mxu0 0.0
    %2807 = vmatprep.subr.mxu0 0.0
    %2808 = vmatpush1.msra.mxu0 0.0
    %2809 = vmatprep.subr.mxu0 0.0
    %2810 = vmatpush1.msra.mxu0 0.0
    %2811 = vmatprep.subr.mxu0 0.0
    %2812 = vmatpush1.msra.mxu0 0.0
    %2813 = vmatprep.subr.mxu0 0.0
    %2814 = vmatpush1.msra.mxu0 0.0
    %2815 = vmatprep.subr.mxu0 0.0
    %2816 = vmatpush1.msra.mxu0 0.0
    %2817 = vmatprep.subr.mxu0 0.0
    %2818 = vmatpush1.msra.mxu0 0.0
    %2819 = vmatprep.subr.mxu0 0.0
    %2820 = vmatpush1.msra.mxu0 0.0
    %2821 = vmatprep.subr.mxu0 0.0
    %2822 = vmatpush1.msra.mxu0 0.0
    %2823 = vmatprep.subr.mxu0 0.0
    %2824 = vmatpush1.msra.mxu0 0.0
    %2825 = vmatprep.subr.mxu0 0.0
    %2826 = vmatpush1.msra.mxu0 0.0
    %2827 = vmatprep.subr.mxu0 0.0
    %2828 = vmatpush1.msra.mxu0 0.0
    %2829 = vmatprep.subr.mxu0 0.0
    %2830 = vmatpush1.msra.mxu0 0.0
    %2831 = vmatprep.subr.mxu0 0.0
    %2832 = vmatpush1.msra.mxu0 0.0
    %2833 = vmatprep.subr.mxu0 0.0
    %2834 = vmatpush1.msra.mxu0 0.0
    %2835 = vmatprep.subr.mxu0 0.0
    %2836 = vmatpush1.msra.mxu0 0.0
    %2837 = vmatprep.subr.mxu0 0.0
    %2838 = vmatpush1.msra.mxu0 0.0
    %2839 = vmatprep.subr.mxu0 0.0
    %2840 = vmatpush1.msra.mxu0 0.0
    %2841 = vmatprep.subr.mxu0 0.0
    %2842 = vmatpush1.msra.mxu0 0.0
    %2843 = vmatprep.subr.mxu0 0.0
    %2844 = vmatpush1.msra.mxu0 0.0
    %2845 = vmatprep.subr.mxu0 0.0
    %2846 = vmatpush1.msra.mxu0 0.0
    %2847 = vmatprep.subr.mxu0 0.0
    %2848 = vmatpush1.msra.mxu0 0.0
    %2849 = vmatprep.subr.mxu0 0.0
    %2850 = vmatpush1.msra.mxu0 0.0
    %2851 = vmatprep.subr.mxu0 0.0
    %2852 = vmatpush1.msra.mxu0 0.0
    %2853 = vmatprep.subr.mxu0 0.0
    %2854 = vmatpush1.msra.mxu0 0.0
    %2855 = vmatprep.subr.mxu0 0.0
    %2856 = vmatpush1.msra.mxu0 0.0
    %2857 = vmatprep.subr.mxu0 0.0
    %2858 = vmatpush1.msra.mxu0 0.0
    %2859 = vmatprep.mubr.f32.mxu0 0.0
    %2860 = vmatmul.mubr.f32.gmra.mrb[0].mxu0 %v2722
    %v2861 = vpop.f32.mrb[0].mxu0
    %v2862 = vadd.f32 0.0, %v2861
    %v2863 = vpop.f32.mrb[0].mxu0
    %2864 = vdwg.mxu0
    %s2865 = scalar_lea.vmem [#allocation13], 288
    %v2866 = vld [vmem:[%s2865] sm:$0xff]
    %v2867 = vld [vmem:[%s2865 + $0x8] sm:$0xff]
    %v2868 = vld [vmem:[%s2865 + $0x10] sm:$0xff]
    %v2869 = vld [vmem:[%s2865 + $0x18] sm:$0xff]
    %v2870 = vld [vmem:[%s2865 + $0x20] sm:$0xff]
    %v2871 = vld [vmem:[%s2865 + $0x28] sm:$0xff]
    %v2872 = vld [vmem:[%s2865 + $0x30] sm:$0xff]
    %v2873 = vld [vmem:[%s2865 + $0x38] sm:$0xff]
    %v2874 = vld [vmem:[%s2865 + $0x40] sm:$0xff]
    %v2875 = vld [vmem:[%s2865 + $0x48] sm:$0xff]
    %v2876 = vld [vmem:[%s2865 + $0x50] sm:$0xff]
    %v2877 = vld [vmem:[%s2865 + $0x58] sm:$0xff]
    %v2878 = vld [vmem:[%s2865 + $0x60] sm:$0xff]
    %v2879 = vld [vmem:[%s2865 + $0x68] sm:$0xff]
    %v2880 = vld [vmem:[%s2865 + $0x70] sm:$0xff]
    %v2881 = vld [vmem:[%s2865 + $0x78] sm:$0xff]
    %v2882 = vld [vmem:[%s2865 + $0x80] sm:$0xff]
    %v2883 = vld [vmem:[%s2865 + $0x88] sm:$0xff]
    %v2884 = vld [vmem:[%s2865 + $0x90] sm:$0xff]
    %v2885 = vld [vmem:[%s2865 + $0x98] sm:$0xff]
    %v2886 = vld [vmem:[%s2865 + $0xa0] sm:$0xff]
    %v2887 = vld [vmem:[%s2865 + $0xa8] sm:$0xff]
    %v2888 = vld [vmem:[%s2865 + $0xb0] sm:$0xff]
    %v2889 = vld [vmem:[%s2865 + $0xb8] sm:$0xff]
    %v2890 = vld [vmem:[%s2865 + $0xc0] sm:$0xff]
    %v2891 = vld [vmem:[%s2865 + $0xc8] sm:$0xff]
    %v2892 = vld [vmem:[%s2865 + $0xd0] sm:$0xff]
    %v2893 = vld [vmem:[%s2865 + $0xd8] sm:$0xff]
    %v2894 = vld [vmem:[%s2865 + $0xe0] sm:$0xff]
    %v2895 = vld [vmem:[%s2865 + $0xe8] sm:$0xff]
    %v2896 = vld [vmem:[%s2865 + $0xf0] sm:$0xff]
    %v2897 = vld [vmem:[%s2865 + $0xf8] sm:$0xff]
    %v2898 = vld [vmem:[%s2865 + $0x100] sm:$0xff]
    %v2899 = vld [vmem:[%s2865 + $0x108] sm:$0xff]
    %v2900 = vld [vmem:[%s2865 + $0x110] sm:$0xff]
    %v2901 = vld [vmem:[%s2865 + $0x118] sm:$0xff]
    %v2903 = vsel %vm1651, %v2862, 0
    %2905 = vmatprep.subr.mxu0 0.0
    %2906 = vmatpush1.msra.mxu0 %v2866
    %2907 = vmatprep.subr.mxu0 0.0
    %2908 = vmatpush1.msra.mxu0 %v2867
    %2909 = vmatprep.subr.mxu0 0.0
    %2910 = vmatpush1.msra.mxu0 %v2868
    %2911 = vmatprep.subr.mxu0 0.0
    %2912 = vmatpush1.msra.mxu0 %v2869
    %2913 = vmatprep.subr.mxu0 0.0
    %2914 = vmatpush1.msra.mxu0 %v2870
    %2915 = vmatprep.subr.mxu0 0.0
    %2916 = vmatpush1.msra.mxu0 %v2871
    %2917 = vmatprep.subr.mxu0 0.0
    %2918 = vmatpush1.msra.mxu0 %v2872
    %2919 = vmatprep.subr.mxu0 0.0
    %2920 = vmatpush1.msra.mxu0 %v2873
    %2921 = vmatprep.subr.mxu0 0.0
    %2922 = vmatpush1.msra.mxu0 %v2874
    %2923 = vmatprep.subr.mxu0 0.0
    %2924 = vmatpush1.msra.mxu0 %v2875
    %2925 = vmatprep.subr.mxu0 0.0
    %2926 = vmatpush1.msra.mxu0 %v2876
    %2927 = vmatprep.subr.mxu0 0.0
    %2928 = vmatpush1.msra.mxu0 %v2877
    %2929 = vmatprep.subr.mxu0 0.0
    %2930 = vmatpush1.msra.mxu0 %v2878
    %2931 = vmatprep.subr.mxu0 0.0
    %2932 = vmatpush1.msra.mxu0 %v2879
    %2933 = vmatprep.subr.mxu0 0.0
    %2934 = vmatpush1.msra.mxu0 %v2880
    %2935 = vmatprep.subr.mxu0 0.0
    %2936 = vmatpush1.msra.mxu0 %v2881
    %2937 = vmatprep.subr.mxu0 0.0
    %2938 = vmatpush1.msra.mxu0 %v2882
    %2939 = vmatprep.subr.mxu0 0.0
    %2940 = vmatpush1.msra.mxu0 %v2883
    %2941 = vmatprep.subr.mxu0 0.0
    %2942 = vmatpush1.msra.mxu0 %v2884
    %2943 = vmatprep.subr.mxu0 0.0
    %2944 = vmatpush1.msra.mxu0 %v2885
    %2945 = vmatprep.subr.mxu0 0.0
    %2946 = vmatpush1.msra.mxu0 %v2886
    %2947 = vmatprep.subr.mxu0 0.0
    %2948 = vmatpush1.msra.mxu0 %v2887
    %2949 = vmatprep.subr.mxu0 0.0
    %2950 = vmatpush1.msra.mxu0 %v2888
    %2951 = vmatprep.subr.mxu0 0.0
    %2952 = vmatpush1.msra.mxu0 %v2889
    %2953 = vmatprep.subr.mxu0 0.0
    %2954 = vmatpush1.msra.mxu0 %v2890
    %2955 = vmatprep.subr.mxu0 0.0
    %2956 = vmatpush1.msra.mxu0 %v2891
    %2957 = vmatprep.subr.mxu0 0.0
    %2958 = vmatpush1.msra.mxu0 %v2892
    %2959 = vmatprep.subr.mxu0 0.0
    %2960 = vmatpush1.msra.mxu0 %v2893
    %2961 = vmatprep.subr.mxu0 0.0
    %2962 = vmatpush1.msra.mxu0 %v2894
    %2963 = vmatprep.subr.mxu0 0.0
    %2964 = vmatpush1.msra.mxu0 %v2895
    %2965 = vmatprep.subr.mxu0 0.0
    %2966 = vmatpush1.msra.mxu0 %v2896
    %2967 = vmatprep.subr.mxu0 0.0
    %2968 = vmatpush1.msra.mxu0 %v2897
    %2969 = vmatprep.mubr.f32.mxu0 %v2793
    %2970 = vmatmul.mubr.f32.gmra.mrb[0].mxu0 %v2791
    %v2971 = vpop.f32.mrb[0].mxu0
    %v2972 = vadd.f32 0.0, %v2971
    %v2973 = vpop.f32.mrb[0].mxu0
    %2974 = vdwg.mxu0
    %2975 = vmatprep.subr.mxu0 0.0
    %2976 = vmatpush1.msra.mxu0 %v2898
    %2977 = vmatprep.subr.mxu0 0.0
    %2978 = vmatpush1.msra.mxu0 %v2899
    %2979 = vmatprep.subr.mxu0 0.0
    %2980 = vmatpush1.msra.mxu0 %v2900
    %2981 = vmatprep.subr.mxu0 0.0
    %2982 = vmatpush1.msra.mxu0 %v2901
    %2983 = vmatprep.subr.mxu0 0.0
    %2984 = vmatpush1.msra.mxu0 0.0
    %2985 = vmatprep.subr.mxu0 0.0
    %2986 = vmatpush1.msra.mxu0 0.0
    %2987 = vmatprep.subr.mxu0 0.0
    %2988 = vmatpush1.msra.mxu0 0.0
    %2989 = vmatprep.subr.mxu0 0.0
    %2990 = vmatpush1.msra.mxu0 0.0
    %2991 = vmatprep.subr.mxu0 0.0
    %2992 = vmatpush1.msra.mxu0 0.0
    %2993 = vmatprep.subr.mxu0 0.0
    %2994 = vmatpush1.msra.mxu0 0.0
    %2995 = vmatprep.subr.mxu0 0.0
    %2996 = vmatpush1.msra.mxu0 0.0
    %2997 = vmatprep.subr.mxu0 0.0
    %2998 = vmatpush1.msra.mxu0 0.0
    %2999 = vmatprep.subr.mxu0 0.0
    %3000 = vmatpush1.msra.mxu0 0.0
    %3001 = vmatprep.subr.mxu0 0.0
    %3002 = vmatpush1.msra.mxu0 0.0
    %3003 = vmatprep.subr.mxu0 0.0
    %3004 = vmatpush1.msra.mxu0 0.0
    %3005 = vmatprep.subr.mxu0 0.0
    %3006 = vmatpush1.msra.mxu0 0.0
    %3007 = vmatprep.subr.mxu0 0.0
    %3008 = vmatpush1.msra.mxu0 0.0
    %3009 = vmatprep.subr.mxu0 0.0
    %3010 = vmatpush1.msra.mxu0 0.0
    %3011 = vmatprep.subr.mxu0 0.0
    %3012 = vmatpush1.msra.mxu0 0.0
    %3013 = vmatprep.subr.mxu0 0.0
    %3014 = vmatpush1.msra.mxu0 0.0
    %3015 = vmatprep.subr.mxu0 0.0
    %3016 = vmatpush1.msra.mxu0 0.0
    %3017 = vmatprep.subr.mxu0 0.0
    %3018 = vmatpush1.msra.mxu0 0.0
    %3019 = vmatprep.subr.mxu0 0.0
    %3020 = vmatpush1.msra.mxu0 0.0
    %3021 = vmatprep.subr.mxu0 0.0
    %3022 = vmatpush1.msra.mxu0 0.0
    %3023 = vmatprep.subr.mxu0 0.0
    %3024 = vmatpush1.msra.mxu0 0.0
    %3025 = vmatprep.subr.mxu0 0.0
    %3026 = vmatpush1.msra.mxu0 0.0
    %3027 = vmatprep.subr.mxu0 0.0
    %3028 = vmatpush1.msra.mxu0 0.0
    %3029 = vmatprep.subr.mxu0 0.0
    %3030 = vmatpush1.msra.mxu0 0.0
    %3031 = vmatprep.subr.mxu0 0.0
    %3032 = vmatpush1.msra.mxu0 0.0
    %3033 = vmatprep.subr.mxu0 0.0
    %3034 = vmatpush1.msra.mxu0 0.0
    %3035 = vmatprep.subr.mxu0 0.0
    %3036 = vmatpush1.msra.mxu0 0.0
    %3037 = vmatprep.subr.mxu0 0.0
    %3038 = vmatpush1.msra.mxu0 0.0
    %3039 = vmatprep.mubr.f32.mxu0 0.0
    %3040 = vmatmul.mubr.f32.gmra.mrb[0].mxu0 %v2903
    %v3041 = vpop.f32.mrb[0].mxu0
    %v3042 = vadd.f32 %v2972, %v3041
    %v3043 = vpop.f32.mrb[0].mxu0
    %3044 = vdwg.mxu0
    %v3046 = vsel %vm1651, %v2680, 0
    %3048 = vmatprep.subr.mxu0 0.0
    %3049 = vmatpush1.msra.mxu0 %v2683
    %3050 = vmatprep.subr.mxu0 0.0
    %3051 = vmatpush1.msra.mxu0 %v2684
    %3052 = vmatprep.subr.mxu0 0.0
    %3053 = vmatpush1.msra.mxu0 %v2685
    %3054 = vmatprep.subr.mxu0 0.0
    %3055 = vmatpush1.msra.mxu0 %v2686
    %3056 = vmatprep.subr.mxu0 0.0
    %3057 = vmatpush1.msra.mxu0 %v2687
    %3058 = vmatprep.subr.mxu0 0.0
    %3059 = vmatpush1.msra.mxu0 %v2688
    %3060 = vmatprep.subr.mxu0 0.0
    %3061 = vmatpush1.msra.mxu0 %v2689
    %3062 = vmatprep.subr.mxu0 0.0
    %3063 = vmatpush1.msra.mxu0 %v2690
    %3064 = vmatprep.subr.mxu0 0.0
    %3065 = vmatpush1.msra.mxu0 %v2691
    %3066 = vmatprep.subr.mxu0 0.0
    %3067 = vmatpush1.msra.mxu0 %v2692
    %3068 = vmatprep.subr.mxu0 0.0
    %3069 = vmatpush1.msra.mxu0 %v2693
    %3070 = vmatprep.subr.mxu0 0.0
    %3071 = vmatpush1.msra.mxu0 %v2694
    %3072 = vmatprep.subr.mxu0 0.0
    %3073 = vmatpush1.msra.mxu0 %v2695
    %3074 = vmatprep.subr.mxu0 0.0
    %3075 = vmatpush1.msra.mxu0 %v2696
    %3076 = vmatprep.subr.mxu0 0.0
    %3077 = vmatpush1.msra.mxu0 %v2697
    %3078 = vmatprep.subr.mxu0 0.0
    %3079 = vmatpush1.msra.mxu0 %v2698
    %3080 = vmatprep.subr.mxu0 0.0
    %3081 = vmatpush1.msra.mxu0 %v2699
    %3082 = vmatprep.subr.mxu0 0.0
    %3083 = vmatpush1.msra.mxu0 %v2700
    %3084 = vmatprep.subr.mxu0 0.0
    %3085 = vmatpush1.msra.mxu0 %v2701
    %3086 = vmatprep.subr.mxu0 0.0
    %3087 = vmatpush1.msra.mxu0 %v2702
    %3088 = vmatprep.subr.mxu0 0.0
    %3089 = vmatpush1.msra.mxu0 %v2703
    %3090 = vmatprep.subr.mxu0 0.0
    %3091 = vmatpush1.msra.mxu0 %v2704
    %3092 = vmatprep.subr.mxu0 0.0
    %3093 = vmatpush1.msra.mxu0 %v2705
    %3094 = vmatprep.subr.mxu0 0.0
    %3095 = vmatpush1.msra.mxu0 %v2706
    %3096 = vmatprep.subr.mxu0 0.0
    %3097 = vmatpush1.msra.mxu0 %v2707
    %3098 = vmatprep.subr.mxu0 0.0
    %3099 = vmatpush1.msra.mxu0 %v2708
    %3100 = vmatprep.subr.mxu0 0.0
    %3101 = vmatpush1.msra.mxu0 %v2709
    %3102 = vmatprep.subr.mxu0 0.0
    %3103 = vmatpush1.msra.mxu0 %v2710
    %3104 = vmatprep.subr.mxu0 0.0
    %3105 = vmatpush1.msra.mxu0 %v2711
    %3106 = vmatprep.subr.mxu0 0.0
    %3107 = vmatpush1.msra.mxu0 %v2712
    %3108 = vmatprep.subr.mxu0 0.0
    %3109 = vmatpush1.msra.mxu0 %v2713
    %3110 = vmatprep.subr.mxu0 0.0
    %3111 = vmatpush1.msra.mxu0 %v2714
    %3112 = vmatprep.mubr.f32.mxu0 %v2611
    %3113 = vmatmul.mubr.f32.gmra.mrb[0].mxu0 %v2609
    %v3114 = vpop.f32.mrb[0].mxu0
    %v3115 = vadd.f32 %v3042, %v3114
    %v3116 = vpop.f32.mrb[0].mxu0
    %3117 = vdwg.mxu0
    %3118 = vmatprep.subr.mxu0 0.0
    %3119 = vmatpush1.msra.mxu0 %v2715
    %3120 = vmatprep.subr.mxu0 0.0
    %3121 = vmatpush1.msra.mxu0 %v2716
    %3122 = vmatprep.subr.mxu0 0.0
    %3123 = vmatpush1.msra.mxu0 %v2717
    %3124 = vmatprep.subr.mxu0 0.0
    %3125 = vmatpush1.msra.mxu0 %v2718
    %3126 = vmatprep.subr.mxu0 0.0
    %3127 = vmatpush1.msra.mxu0 0.0
    %3128 = vmatprep.subr.mxu0 0.0
    %3129 = vmatpush1.msra.mxu0 0.0
    %3130 = vmatprep.subr.mxu0 0.0
    %3131 = vmatpush1.msra.mxu0 0.0
    %3132 = vmatprep.subr.mxu0 0.0
    %3133 = vmatpush1.msra.mxu0 0.0
    %3134 = vmatprep.subr.mxu0 0.0
    %3135 = vmatpush1.msra.mxu0 0.0
    %3136 = vmatprep.subr.mxu0 0.0
    %3137 = vmatpush1.msra.mxu0 0.0
    %3138 = vmatprep.subr.mxu0 0.0
    %3139 = vmatpush1.msra.mxu0 0.0
    %3140 = vmatprep.subr.mxu0 0.0
    %3141 = vmatpush1.msra.mxu0 0.0
    %3142 = vmatprep.subr.mxu0 0.0
    %3143 = vmatpush1.msra.mxu0 0.0
    %3144 = vmatprep.subr.mxu0 0.0
    %3145 = vmatpush1.msra.mxu0 0.0
    %3146 = vmatprep.subr.mxu0 0.0
    %3147 = vmatpush1.msra.mxu0 0.0
    %3148 = vmatprep.subr.mxu0 0.0
    %3149 = vmatpush1.msra.mxu0 0.0
    %3150 = vmatprep.subr.mxu0 0.0
    %3151 = vmatpush1.msra.mxu0 0.0
    %3152 = vmatprep.subr.mxu0 0.0
    %3153 = vmatpush1.msra.mxu0 0.0
    %3154 = vmatprep.subr.mxu0 0.0
    %3155 = vmatpush1.msra.mxu0 0.0
    %3156 = vmatprep.subr.mxu0 0.0
    %3157 = vmatpush1.msra.mxu0 0.0
    %3158 = vmatprep.subr.mxu0 0.0
    %3159 = vmatpush1.msra.mxu0 0.0
    %3160 = vmatprep.subr.mxu0 0.0
    %3161 = vmatpush1.msra.mxu0 0.0
    %3162 = vmatprep.subr.mxu0 0.0
    %3163 = vmatpush1.msra.mxu0 0.0
    %3164 = vmatprep.subr.mxu0 0.0
    %3165 = vmatpush1.msra.mxu0 0.0
    %3166 = vmatprep.subr.mxu0 0.0
    %3167 = vmatpush1.msra.mxu0 0.0
    %3168 = vmatprep.subr.mxu0 0.0
    %3169 = vmatpush1.msra.mxu0 0.0
    %3170 = vmatprep.subr.mxu0 0.0
    %3171 = vmatpush1.msra.mxu0 0.0
    %3172 = vmatprep.subr.mxu0 0.0
    %3173 = vmatpush1.msra.mxu0 0.0
    %3174 = vmatprep.subr.mxu0 0.0
    %3175 = vmatpush1.msra.mxu0 0.0
    %3176 = vmatprep.subr.mxu0 0.0
    %3177 = vmatpush1.msra.mxu0 0.0
    %3178 = vmatprep.subr.mxu0 0.0
    %3179 = vmatpush1.msra.mxu0 0.0
    %3180 = vmatprep.subr.mxu0 0.0
    %3181 = vmatpush1.msra.mxu0 0.0
    %3182 = vmatprep.mubr.f32.mxu0 0.0
    %3183 = vmatmul.mubr.f32.gmra.mrb[0].mxu0 %v3046
    %v3184 = vpop.f32.mrb[0].mxu0
    %v3185 = vadd.f32 %v3115, %v3184
    %v3186 = vpop.f32.mrb[0].mxu0
    %3187 = vdwg.mxu0
    %s3188 = scalar_lea.vmem [#allocation11], 16
    %v3189 = vld [vmem:[%s3188] sm:$0x7f]
    %v3191 = vsel %vm2529, %v3189, 0
    %3193 = vmatprep.subr.mxu0 %v2520
    %3194 = vmatpush1.msra.mxu0 %v2519
    %3195 = vmatprep.subr.mxu0 %v2523
    %3196 = vmatpush1.msra.mxu0 %v2522
    %3197 = vmatprep.subr.mxu0 %v2537
    %3198 = vmatpush1.msra.mxu0 %v2534
    %3199 = vmatprep.subr.mxu0 0.0
    %3200 = vmatpush1.msra.mxu0 0.0
    %3201 = vmatprep.subr.mxu0 0.0
    %3202 = vmatpush1.msra.mxu0 0.0
    %3203 = vmatprep.subr.mxu0 0.0
    %3204 = vmatpush1.msra.mxu0 0.0
    %3205 = vmatprep.subr.mxu0 0.0
    %3206 = vmatpush1.msra.mxu0 0.0
    %3207 = vmatprep.subr.mxu0 0.0
    %3208 = vmatpush1.msra.mxu0 0.0
    %3209 = vmatprep.subr.mxu0 0.0
    %3210 = vmatpush1.msra.mxu0 0.0
    %3211 = vmatprep.subr.mxu0 0.0
    %3212 = vmatpush1.msra.mxu0 0.0
    %3213 = vmatprep.subr.mxu0 0.0
    %3214 = vmatpush1.msra.mxu0 0.0
    %3215 = vmatprep.subr.mxu0 0.0
    %3216 = vmatpush1.msra.mxu0 0.0
    %3217 = vmatprep.subr.mxu0 0.0
    %3218 = vmatpush1.msra.mxu0 0.0
    %3219 = vmatprep.subr.mxu0 0.0
    %3220 = vmatpush1.msra.mxu0 0.0
    %3221 = vmatprep.subr.mxu0 0.0
    %3222 = vmatpush1.msra.mxu0 0.0
    %3223 = vmatprep.subr.mxu0 0.0
    %3224 = vmatpush1.msra.mxu0 0.0
    %3225 = vmatprep.subr.mxu0 0.0
    %3226 = vmatpush1.msra.mxu0 0.0
    %3227 = vmatprep.subr.mxu0 0.0
    %3228 = vmatpush1.msra.mxu0 0.0
    %3229 = vmatprep.subr.mxu0 0.0
    %3230 = vmatpush1.msra.mxu0 0.0
    %3231 = vmatprep.subr.mxu0 0.0
    %3232 = vmatpush1.msra.mxu0 0.0
    %3233 = vmatprep.subr.mxu0 0.0
    %3234 = vmatpush1.msra.mxu0 0.0
    %3235 = vmatprep.subr.mxu0 0.0
    %3236 = vmatpush1.msra.mxu0 0.0
    %3237 = vmatprep.subr.mxu0 0.0
    %3238 = vmatpush1.msra.mxu0 0.0
    %3239 = vmatprep.subr.mxu0 0.0
    %3240 = vmatpush1.msra.mxu0 0.0
    %3241 = vmatprep.subr.mxu0 0.0
    %3242 = vmatpush1.msra.mxu0 0.0
    %3243 = vmatprep.subr.mxu0 0.0
    %3244 = vmatpush1.msra.mxu0 0.0
    %3245 = vmatprep.subr.mxu0 0.0
    %3246 = vmatpush1.msra.mxu0 0.0
    %3247 = vmatprep.subr.mxu0 0.0
    %3248 = vmatpush1.msra.mxu0 0.0
    %3249 = vmatprep.subr.mxu0 0.0
    %3250 = vmatpush1.msra.mxu0 0.0
    %3251 = vmatprep.subr.mxu0 0.0
    %3252 = vmatpush1.msra.mxu0 0.0
    %3253 = vmatprep.subr.mxu0 0.0
    %3254 = vmatpush1.msra.mxu0 0.0
    %3255 = vmatprep.subr.mxu0 0.0
    %3256 = vmatpush1.msra.mxu0 0.0
    %3257 = vmatprep.mubr.f32.mxu0 0.0
    %3258 = vmatmul.mubr.f32.gmra.mrb[0].mxu0 %v3191
    %v3259 = vpop.f32.mrb[0].mxu0
    %v3260 = vadd.f32 0.0, %v3259
    %v3261 = vpop.f32.mrb[0].mxu0
    %v3262 = vadd.f32 0.0, %v3261
    %3263 = vdwg.mxu0
    %3264 = vmatprep.subr.mxu0 0.0
    %3265 = vmatpush1.msra.mxu0 %v2521
    %3266 = vmatprep.subr.mxu0 0.0
    %3267 = vmatpush1.msra.mxu0 %v2524
    %3268 = vmatprep.subr.mxu0 0.0
    %3269 = vmatpush1.msra.mxu0 %v2540
    %3270 = vmatprep.subr.mxu0 0.0
    %3271 = vmatpush1.msra.mxu0 0.0
    %3272 = vmatprep.subr.mxu0 0.0
    %3273 = vmatpush1.msra.mxu0 0.0
    %3274 = vmatprep.subr.mxu0 0.0
    %3275 = vmatpush1.msra.mxu0 0.0
    %3276 = vmatprep.subr.mxu0 0.0
    %3277 = vmatpush1.msra.mxu0 0.0
    %3278 = vmatprep.subr.mxu0 0.0
    %3279 = vmatpush1.msra.mxu0 0.0
    %3280 = vmatprep.subr.mxu0 0.0
    %3281 = vmatpush1.msra.mxu0 0.0
    %3282 = vmatprep.subr.mxu0 0.0
    %3283 = vmatpush1.msra.mxu0 0.0
    %3284 = vmatprep.subr.mxu0 0.0
    %3285 = vmatpush1.msra.mxu0 0.0
    %3286 = vmatprep.subr.mxu0 0.0
    %3287 = vmatpush1.msra.mxu0 0.0
    %3288 = vmatprep.subr.mxu0 0.0
    %3289 = vmatpush1.msra.mxu0 0.0
    %3290 = vmatprep.subr.mxu0 0.0
    %3291 = vmatpush1.msra.mxu0 0.0
    %3292 = vmatprep.subr.mxu0 0.0
    %3293 = vmatpush1.msra.mxu0 0.0
    %3294 = vmatprep.subr.mxu0 0.0
    %3295 = vmatpush1.msra.mxu0 0.0
    %3296 = vmatprep.subr.mxu0 0.0
    %3297 = vmatpush1.msra.mxu0 0.0
    %3298 = vmatprep.subr.mxu0 0.0
    %3299 = vmatpush1.msra.mxu0 0.0
    %3300 = vmatprep.subr.mxu0 0.0
    %3301 = vmatpush1.msra.mxu0 0.0
    %3302 = vmatprep.subr.mxu0 0.0
    %3303 = vmatpush1.msra.mxu0 0.0
    %3304 = vmatprep.subr.mxu0 0.0
    %3305 = vmatpush1.msra.mxu0 0.0
    %3306 = vmatprep.subr.mxu0 0.0
    %3307 = vmatpush1.msra.mxu0 0.0
    %3308 = vmatprep.subr.mxu0 0.0
    %3309 = vmatpush1.msra.mxu0 0.0
    %3310 = vmatprep.subr.mxu0 0.0
    %3311 = vmatpush1.msra.mxu0 0.0
    %3312 = vmatprep.subr.mxu0 0.0
    %3313 = vmatpush1.msra.mxu0 0.0
    %3314 = vmatprep.subr.mxu0 0.0
    %3315 = vmatpush1.msra.mxu0 0.0
    %3316 = vmatprep.subr.mxu0 0.0
    %3317 = vmatpush1.msra.mxu0 0.0
    %3318 = vmatprep.subr.mxu0 0.0
    %3319 = vmatpush1.msra.mxu0 0.0
    %3320 = vmatprep.subr.mxu0 0.0
    %3321 = vmatpush1.msra.mxu0 0.0
    %3322 = vmatprep.subr.mxu0 0.0
    %3323 = vmatpush1.msra.mxu0 0.0
    %3324 = vmatprep.subr.mxu0 0.0
    %3325 = vmatpush1.msra.mxu0 0.0
    %3326 = vmatprep.subr.mxu0 0.0
    %3327 = vmatpush1.msra.mxu0 0.0
    %3328 = vmatprep.mubr.f32.mxu0 0.0
    %3329 = vmatmul.mubr.f32.gmra.mrb[0].mxu0 %v3191
    %v3330 = vpop.f32.mrb[0].mxu0
    %v3331 = vadd.f32 0.0, %v3330
    %v3332 = vpop.f32.mrb[0].mxu0
    %3333 = vdwg.mxu0
    %s3334 = scalar_lea.vmem [#allocation13], 576
    %v3335 = vld [vmem:[%s3334] sm:$0xff]
    %v3336 = vld [vmem:[%s3334 + $0x8] sm:$0xff]
    %v3337 = vld [vmem:[%s3334 + $0x10] sm:$0xff]
    %v3338 = vld [vmem:[%s3334 + $0x18] sm:$0xff]
    %v3339 = vld [vmem:[%s3334 + $0x20] sm:$0xff]
    %v3340 = vld [vmem:[%s3334 + $0x28] sm:$0xff]
    %v3341 = vld [vmem:[%s3334 + $0x30] sm:$0xff]
    %v3342 = vld [vmem:[%s3334 + $0x38] sm:$0xff]
    %v3343 = vld [vmem:[%s3334 + $0x40] sm:$0xff]
    %v3344 = vld [vmem:[%s3334 + $0x48] sm:$0xff]
    %v3345 = vld [vmem:[%s3334 + $0x50] sm:$0xff]
    %v3346 = vld [vmem:[%s3334 + $0x58] sm:$0xff]
    %v3347 = vld [vmem:[%s3334 + $0x60] sm:$0xff]
    %v3348 = vld [vmem:[%s3334 + $0x68] sm:$0xff]
    %v3349 = vld [vmem:[%s3334 + $0x70] sm:$0xff]
    %v3350 = vld [vmem:[%s3334 + $0x78] sm:$0xff]
    %v3351 = vld [vmem:[%s3334 + $0x80] sm:$0xff]
    %v3352 = vld [vmem:[%s3334 + $0x88] sm:$0xff]
    %v3353 = vld [vmem:[%s3334 + $0x90] sm:$0xff]
    %v3354 = vld [vmem:[%s3334 + $0x98] sm:$0xff]
    %v3355 = vld [vmem:[%s3334 + $0xa0] sm:$0xff]
    %v3356 = vld [vmem:[%s3334 + $0xa8] sm:$0xff]
    %v3357 = vld [vmem:[%s3334 + $0xb0] sm:$0xff]
    %v3358 = vld [vmem:[%s3334 + $0xb8] sm:$0xff]
    %v3359 = vld [vmem:[%s3334 + $0xc0] sm:$0xff]
    %v3360 = vld [vmem:[%s3334 + $0xc8] sm:$0xff]
    %v3361 = vld [vmem:[%s3334 + $0xd0] sm:$0xff]
    %v3362 = vld [vmem:[%s3334 + $0xd8] sm:$0xff]
    %v3363 = vld [vmem:[%s3334 + $0xe0] sm:$0xff]
    %v3364 = vld [vmem:[%s3334 + $0xe8] sm:$0xff]
    %v3365 = vld [vmem:[%s3334 + $0xf0] sm:$0xff]
    %v3366 = vld [vmem:[%s3334 + $0xf8] sm:$0xff]
    %v3367 = vld [vmem:[%s3334 + $0x100] sm:$0xff]
    %v3368 = vld [vmem:[%s3334 + $0x108] sm:$0xff]
    %v3369 = vld [vmem:[%s3334 + $0x110] sm:$0xff]
    %v3370 = vld [vmem:[%s3334 + $0x118] sm:$0xff]
    %v3372 = vsel %vm1651, %v3331, 0
    %3374 = vmatprep.subr.mxu0 0.0
    %3375 = vmatpush1.msra.mxu0 %v3335
    %3376 = vmatprep.subr.mxu0 0.0
    %3377 = vmatpush1.msra.mxu0 %v3336
    %3378 = vmatprep.subr.mxu0 0.0
    %3379 = vmatpush1.msra.mxu0 %v3337
    %3380 = vmatprep.subr.mxu0 0.0
    %3381 = vmatpush1.msra.mxu0 %v3338
    %3382 = vmatprep.subr.mxu0 0.0
    %3383 = vmatpush1.msra.mxu0 %v3339
    %3384 = vmatprep.subr.mxu0 0.0
    %3385 = vmatpush1.msra.mxu0 %v3340
    %3386 = vmatprep.subr.mxu0 0.0
    %3387 = vmatpush1.msra.mxu0 %v3341
    %3388 = vmatprep.subr.mxu0 0.0
    %3389 = vmatpush1.msra.mxu0 %v3342
    %3390 = vmatprep.subr.mxu0 0.0
    %3391 = vmatpush1.msra.mxu0 %v3343
    %3392 = vmatprep.subr.mxu0 0.0
    %3393 = vmatpush1.msra.mxu0 %v3344
    %3394 = vmatprep.subr.mxu0 0.0
    %3395 = vmatpush1.msra.mxu0 %v3345
    %3396 = vmatprep.subr.mxu0 0.0
    %3397 = vmatpush1.msra.mxu0 %v3346
    %3398 = vmatprep.subr.mxu0 0.0
    %3399 = vmatpush1.msra.mxu0 %v3347
    %3400 = vmatprep.subr.mxu0 0.0
    %3401 = vmatpush1.msra.mxu0 %v3348
    %3402 = vmatprep.subr.mxu0 0.0
    %3403 = vmatpush1.msra.mxu0 %v3349
    %3404 = vmatprep.subr.mxu0 0.0
    %3405 = vmatpush1.msra.mxu0 %v3350
    %3406 = vmatprep.subr.mxu0 0.0
    %3407 = vmatpush1.msra.mxu0 %v3351
    %3408 = vmatprep.subr.mxu0 0.0
    %3409 = vmatpush1.msra.mxu0 %v3352
    %3410 = vmatprep.subr.mxu0 0.0
    %3411 = vmatpush1.msra.mxu0 %v3353
    %3412 = vmatprep.subr.mxu0 0.0
    %3413 = vmatpush1.msra.mxu0 %v3354
    %3414 = vmatprep.subr.mxu0 0.0
    %3415 = vmatpush1.msra.mxu0 %v3355
    %3416 = vmatprep.subr.mxu0 0.0
    %3417 = vmatpush1.msra.mxu0 %v3356
    %3418 = vmatprep.subr.mxu0 0.0
    %3419 = vmatpush1.msra.mxu0 %v3357
    %3420 = vmatprep.subr.mxu0 0.0
    %3421 = vmatpush1.msra.mxu0 %v3358
    %3422 = vmatprep.subr.mxu0 0.0
    %3423 = vmatpush1.msra.mxu0 %v3359
    %3424 = vmatprep.subr.mxu0 0.0
    %3425 = vmatpush1.msra.mxu0 %v3360
    %3426 = vmatprep.subr.mxu0 0.0
    %3427 = vmatpush1.msra.mxu0 %v3361
    %3428 = vmatprep.subr.mxu0 0.0
    %3429 = vmatpush1.msra.mxu0 %v3362
    %3430 = vmatprep.subr.mxu0 0.0
    %3431 = vmatpush1.msra.mxu0 %v3363
    %3432 = vmatprep.subr.mxu0 0.0
    %3433 = vmatpush1.msra.mxu0 %v3364
    %3434 = vmatprep.subr.mxu0 0.0
    %3435 = vmatpush1.msra.mxu0 %v3365
    %3436 = vmatprep.subr.mxu0 0.0
    %3437 = vmatpush1.msra.mxu0 %v3366
    %3438 = vmatprep.mubr.f32.mxu0 %v3262
    %3439 = vmatmul.mubr.f32.gmra.mrb[0].mxu0 %v3260
    %v3440 = vpop.f32.mrb[0].mxu0
    %v3441 = vadd.f32 0.0, %v3440
    %v3442 = vpop.f32.mrb[0].mxu0
    %3443 = vdwg.mxu0
    %3444 = vmatprep.subr.mxu0 0.0
    %3445 = vmatpush1.msra.mxu0 %v3367
    %3446 = vmatprep.subr.mxu0 0.0
    %3447 = vmatpush1.msra.mxu0 %v3368
    %3448 = vmatprep.subr.mxu0 0.0
    %3449 = vmatpush1.msra.mxu0 %v3369
    %3450 = vmatprep.subr.mxu0 0.0
    %3451 = vmatpush1.msra.mxu0 %v3370
    %3452 = vmatprep.subr.mxu0 0.0
    %3453 = vmatpush1.msra.mxu0 0.0
    %3454 = vmatprep.subr.mxu0 0.0
    %3455 = vmatpush1.msra.mxu0 0.0
    %3456 = vmatprep.subr.mxu0 0.0
    %3457 = vmatpush1.msra.mxu0 0.0
    %3458 = vmatprep.subr.mxu0 0.0
    %3459 = vmatpush1.msra.mxu0 0.0
    %3460 = vmatprep.subr.mxu0 0.0
    %3461 = vmatpush1.msra.mxu0 0.0
    %3462 = vmatprep.subr.mxu0 0.0
    %3463 = vmatpush1.msra.mxu0 0.0
    %3464 = vmatprep.subr.mxu0 0.0
    %3465 = vmatpush1.msra.mxu0 0.0
    %3466 = vmatprep.subr.mxu0 0.0
    %3467 = vmatpush1.msra.mxu0 0.0
    %3468 = vmatprep.subr.mxu0 0.0
    %3469 = vmatpush1.msra.mxu0 0.0
    %3470 = vmatprep.subr.mxu0 0.0
    %3471 = vmatpush1.msra.mxu0 0.0
    %3472 = vmatprep.subr.mxu0 0.0
    %3473 = vmatpush1.msra.mxu0 0.0
    %3474 = vmatprep.subr.mxu0 0.0
    %3475 = vmatpush1.msra.mxu0 0.0
    %3476 = vmatprep.subr.mxu0 0.0
    %3477 = vmatpush1.msra.mxu0 0.0
    %3478 = vmatprep.subr.mxu0 0.0
    %3479 = vmatpush1.msra.mxu0 0.0
    %3480 = vmatprep.subr.mxu0 0.0
    %3481 = vmatpush1.msra.mxu0 0.0
    %3482 = vmatprep.subr.mxu0 0.0
    %3483 = vmatpush1.msra.mxu0 0.0
    %3484 = vmatprep.subr.mxu0 0.0
    %3485 = vmatpush1.msra.mxu0 0.0
    %3486 = vmatprep.subr.mxu0 0.0
    %3487 = vmatpush1.msra.mxu0 0.0
    %3488 = vmatprep.subr.mxu0 0.0
    %3489 = vmatpush1.msra.mxu0 0.0
    %3490 = vmatprep.subr.mxu0 0.0
    %3491 = vmatpush1.msra.mxu0 0.0
    %3492 = vmatprep.subr.mxu0 0.0
    %3493 = vmatpush1.msra.mxu0 0.0
    %3494 = vmatprep.subr.mxu0 0.0
    %3495 = vmatpush1.msra.mxu0 0.0
    %3496 = vmatprep.subr.mxu0 0.0
    %3497 = vmatpush1.msra.mxu0 0.0
    %3498 = vmatprep.subr.mxu0 0.0
    %3499 = vmatpush1.msra.mxu0 0.0
    %3500 = vmatprep.subr.mxu0 0.0
    %3501 = vmatpush1.msra.mxu0 0.0
    %3502 = vmatprep.subr.mxu0 0.0
    %3503 = vmatpush1.msra.mxu0 0.0
    %3504 = vmatprep.subr.mxu0 0.0
    %3505 = vmatpush1.msra.mxu0 0.0
    %3506 = vmatprep.subr.mxu0 0.0
    %3507 = vmatpush1.msra.mxu0 0.0
    %3508 = vmatprep.mubr.f32.mxu0 0.0
    %3509 = vmatmul.mubr.f32.gmra.mrb[0].mxu0 %v3372
    %v3510 = vpop.f32.mrb[0].mxu0
    %v3511 = vadd.f32 %v3441, %v3510
    %v3512 = vpop.f32.mrb[0].mxu0
    %3513 = vdwg.mxu0
    %v3514 = vadd.f32 %v3185, %v3511
    %s3515 = scalar_lea.vmem [#allocation11], 24
    %v3516 = vld [vmem:[%s3515] sm:$0x7f]
    %v3518 = vsel %vm2529, %v3516, 0
    %3520 = vmatprep.subr.mxu0 %v2520
    %3521 = vmatpush1.msra.mxu0 %v2519
    %3522 = vmatprep.subr.mxu0 %v2523
    %3523 = vmatpush1.msra.mxu0 %v2522
    %3524 = vmatprep.subr.mxu0 %v2537
    %3525 = vmatpush1.msra.mxu0 %v2534
    %3526 = vmatprep.subr.mxu0 0.0
    %3527 = vmatpush1.msra.mxu0 0.0
    %3528 = vmatprep.subr.mxu0 0.0
    %3529 = vmatpush1.msra.mxu0 0.0
    %3530 = vmatprep.subr.mxu0 0.0
    %3531 = vmatpush1.msra.mxu0 0.0
    %3532 = vmatprep.subr.mxu0 0.0
    %3533 = vmatpush1.msra.mxu0 0.0
    %3534 = vmatprep.subr.mxu0 0.0
    %3535 = vmatpush1.msra.mxu0 0.0
    %3536 = vmatprep.subr.mxu0 0.0
    %3537 = vmatpush1.msra.mxu0 0.0
    %3538 = vmatprep.subr.mxu0 0.0
    %3539 = vmatpush1.msra.mxu0 0.0
    %3540 = vmatprep.subr.mxu0 0.0
    %3541 = vmatpush1.msra.mxu0 0.0
    %3542 = vmatprep.subr.mxu0 0.0
    %3543 = vmatpush1.msra.mxu0 0.0
    %3544 = vmatprep.subr.mxu0 0.0
    %3545 = vmatpush1.msra.mxu0 0.0
    %3546 = vmatprep.subr.mxu0 0.0
    %3547 = vmatpush1.msra.mxu0 0.0
    %3548 = vmatprep.subr.mxu0 0.0
    %3549 = vmatpush1.msra.mxu0 0.0
    %3550 = vmatprep.subr.mxu0 0.0
    %3551 = vmatpush1.msra.mxu0 0.0
    %3552 = vmatprep.subr.mxu0 0.0
    %3553 = vmatpush1.msra.mxu0 0.0
    %3554 = vmatprep.subr.mxu0 0.0
    %3555 = vmatpush1.msra.mxu0 0.0
    %3556 = vmatprep.subr.mxu0 0.0
    %3557 = vmatpush1.msra.mxu0 0.0
    %3558 = vmatprep.subr.mxu0 0.0
    %3559 = vmatpush1.msra.mxu0 0.0
    %3560 = vmatprep.subr.mxu0 0.0
    %3561 = vmatpush1.msra.mxu0 0.0
    %3562 = vmatprep.subr.mxu0 0.0
    %3563 = vmatpush1.msra.mxu0 0.0
    %3564 = vmatprep.subr.mxu0 0.0
    %3565 = vmatpush1.msra.mxu0 0.0
    %3566 = vmatprep.subr.mxu0 0.0
    %3567 = vmatpush1.msra.mxu0 0.0
    %3568 = vmatprep.subr.mxu0 0.0
    %3569 = vmatpush1.msra.mxu0 0.0
    %3570 = vmatprep.subr.mxu0 0.0
    %3571 = vmatpush1.msra.mxu0 0.0
    %3572 = vmatprep.subr.mxu0 0.0
    %3573 = vmatpush1.msra.mxu0 0.0
    %3574 = vmatprep.subr.mxu0 0.0
    %3575 = vmatpush1.msra.mxu0 0.0
    %3576 = vmatprep.subr.mxu0 0.0
    %3577 = vmatpush1.msra.mxu0 0.0
    %3578 = vmatprep.subr.mxu0 0.0
    %3579 = vmatpush1.msra.mxu0 0.0
    %3580 = vmatprep.subr.mxu0 0.0
    %3581 = vmatpush1.msra.mxu0 0.0
    %3582 = vmatprep.subr.mxu0 0.0
    %3583 = vmatpush1.msra.mxu0 0.0
    %3584 = vmatprep.mubr.f32.mxu0 0.0
    %3585 = vmatmul.mubr.f32.gmra.mrb[0].mxu0 %v3518
    %v3586 = vpop.f32.mrb[0].mxu0
    %v3587 = vadd.f32 0.0, %v3586
    %v3588 = vpop.f32.mrb[0].mxu0
    %v3589 = vadd.f32 0.0, %v3588
    %3590 = vdwg.mxu0
    %3591 = vmatprep.subr.mxu0 0.0
    %3592 = vmatpush1.msra.mxu0 %v2521
    %3593 = vmatprep.subr.mxu0 0.0
    %3594 = vmatpush1.msra.mxu0 %v2524
    %3595 = vmatprep.subr.mxu0 0.0
    %3596 = vmatpush1.msra.mxu0 %v2540
    %3597 = vmatprep.subr.mxu0 0.0
    %3598 = vmatpush1.msra.mxu0 0.0
    %3599 = vmatprep.subr.mxu0 0.0
    %3600 = vmatpush1.msra.mxu0 0.0
    %3601 = vmatprep.subr.mxu0 0.0
    %3602 = vmatpush1.msra.mxu0 0.0
    %3603 = vmatprep.subr.mxu0 0.0
    %3604 = vmatpush1.msra.mxu0 0.0
    %3605 = vmatprep.subr.mxu0 0.0
    %3606 = vmatpush1.msra.mxu0 0.0
    %3607 = vmatprep.subr.mxu0 0.0
    %3608 = vmatpush1.msra.mxu0 0.0
    %3609 = vmatprep.subr.mxu0 0.0
    %3610 = vmatpush1.msra.mxu0 0.0
    %3611 = vmatprep.subr.mxu0 0.0
    %3612 = vmatpush1.msra.mxu0 0.0
    %3613 = vmatprep.subr.mxu0 0.0
    %3614 = vmatpush1.msra.mxu0 0.0
    %3615 = vmatprep.subr.mxu0 0.0
    %3616 = vmatpush1.msra.mxu0 0.0
    %3617 = vmatprep.subr.mxu0 0.0
    %3618 = vmatpush1.msra.mxu0 0.0
    %3619 = vmatprep.subr.mxu0 0.0
    %3620 = vmatpush1.msra.mxu0 0.0
    %3621 = vmatprep.subr.mxu0 0.0
    %3622 = vmatpush1.msra.mxu0 0.0
    %3623 = vmatprep.subr.mxu0 0.0
    %3624 = vmatpush1.msra.mxu0 0.0
    %3625 = vmatprep.subr.mxu0 0.0
    %3626 = vmatpush1.msra.mxu0 0.0
    %3627 = vmatprep.subr.mxu0 0.0
    %3628 = vmatpush1.msra.mxu0 0.0
    %3629 = vmatprep.subr.mxu0 0.0
    %3630 = vmatpush1.msra.mxu0 0.0
    %3631 = vmatprep.subr.mxu0 0.0
    %3632 = vmatpush1.msra.mxu0 0.0
    %3633 = vmatprep.subr.mxu0 0.0
    %3634 = vmatpush1.msra.mxu0 0.0
    %3635 = vmatprep.subr.mxu0 0.0
    %3636 = vmatpush1.msra.mxu0 0.0
    %3637 = vmatprep.subr.mxu0 0.0
    %3638 = vmatpush1.msra.mxu0 0.0
    %3639 = vmatprep.subr.mxu0 0.0
    %3640 = vmatpush1.msra.mxu0 0.0
    %3641 = vmatprep.subr.mxu0 0.0
    %3642 = vmatpush1.msra.mxu0 0.0
    %3643 = vmatprep.subr.mxu0 0.0
    %3644 = vmatpush1.msra.mxu0 0.0
    %3645 = vmatprep.subr.mxu0 0.0
    %3646 = vmatpush1.msra.mxu0 0.0
    %3647 = vmatprep.subr.mxu0 0.0
    %3648 = vmatpush1.msra.mxu0 0.0
    %3649 = vmatprep.subr.mxu0 0.0
    %3650 = vmatpush1.msra.mxu0 0.0
    %3651 = vmatprep.subr.mxu0 0.0
    %3652 = vmatpush1.msra.mxu0 0.0
    %3653 = vmatprep.subr.mxu0 0.0
    %3654 = vmatpush1.msra.mxu0 0.0
    %3655 = vmatprep.mubr.f32.mxu0 0.0
    %3656 = vmatmul.mubr.f32.gmra.mrb[0].mxu0 %v3518
    %v3657 = vpop.f32.mrb[0].mxu0
    %v3658 = vadd.f32 0.0, %v3657
    %v3659 = vpop.f32.mrb[0].mxu0
    %3660 = vdwg.mxu0
    %s3661 = scalar_lea.vmem [#allocation13], 864
    %v3662 = vld [vmem:[%s3661] sm:$0xff]
    %v3663 = vld [vmem:[%s3661 + $0x8] sm:$0xff]
    %v3664 = vld [vmem:[%s3661 + $0x10] sm:$0xff]
    %v3665 = vld [vmem:[%s3661 + $0x18] sm:$0xff]
    %v3666 = vld [vmem:[%s3661 + $0x20] sm:$0xff]
    %v3667 = vld [vmem:[%s3661 + $0x28] sm:$0xff]
    %v3668 = vld [vmem:[%s3661 + $0x30] sm:$0xff]
    %v3669 = vld [vmem:[%s3661 + $0x38] sm:$0xff]
    %v3670 = vld [vmem:[%s3661 + $0x40] sm:$0xff]
    %v3671 = vld [vmem:[%s3661 + $0x48] sm:$0xff]
    %v3672 = vld [vmem:[%s3661 + $0x50] sm:$0xff]
    %v3673 = vld [vmem:[%s3661 + $0x58] sm:$0xff]
    %v3674 = vld [vmem:[%s3661 + $0x60] sm:$0xff]
    %v3675 = vld [vmem:[%s3661 + $0x68] sm:$0xff]
    %v3676 = vld [vmem:[%s3661 + $0x70] sm:$0xff]
    %v3677 = vld [vmem:[%s3661 + $0x78] sm:$0xff]
    %v3678 = vld [vmem:[%s3661 + $0x80] sm:$0xff]
    %v3679 = vld [vmem:[%s3661 + $0x88] sm:$0xff]
    %v3680 = vld [vmem:[%s3661 + $0x90] sm:$0xff]
    %v3681 = vld [vmem:[%s3661 + $0x98] sm:$0xff]
    %v3682 = vld [vmem:[%s3661 + $0xa0] sm:$0xff]
    %v3683 = vld [vmem:[%s3661 + $0xa8] sm:$0xff]
    %v3684 = vld [vmem:[%s3661 + $0xb0] sm:$0xff]
    %v3685 = vld [vmem:[%s3661 + $0xb8] sm:$0xff]
    %v3686 = vld [vmem:[%s3661 + $0xc0] sm:$0xff]
    %v3687 = vld [vmem:[%s3661 + $0xc8] sm:$0xff]
    %v3688 = vld [vmem:[%s3661 + $0xd0] sm:$0xff]
    %v3689 = vld [vmem:[%s3661 + $0xd8] sm:$0xff]
    %v3690 = vld [vmem:[%s3661 + $0xe0] sm:$0xff]
    %v3691 = vld [vmem:[%s3661 + $0xe8] sm:$0xff]
    %v3692 = vld [vmem:[%s3661 + $0xf0] sm:$0xff]
    %v3693 = vld [vmem:[%s3661 + $0xf8] sm:$0xff]
    %v3694 = vld [vmem:[%s3661 + $0x100] sm:$0xff]
    %v3695 = vld [vmem:[%s3661 + $0x108] sm:$0xff]
    %v3696 = vld [vmem:[%s3661 + $0x110] sm:$0xff]
    %v3697 = vld [vmem:[%s3661 + $0x118] sm:$0xff]
    %v3699 = vsel %vm1651, %v3658, 0
    %3701 = vmatprep.subr.mxu0 0.0
    %3702 = vmatpush1.msra.mxu0 %v3662
    %3703 = vmatprep.subr.mxu0 0.0
    %3704 = vmatpush1.msra.mxu0 %v3663
    %3705 = vmatprep.subr.mxu0 0.0
    %3706 = vmatpush1.msra.mxu0 %v3664
    %3707 = vmatprep.subr.mxu0 0.0
    %3708 = vmatpush1.msra.mxu0 %v3665
    %3709 = vmatprep.subr.mxu0 0.0
    %3710 = vmatpush1.msra.mxu0 %v3666
    %3711 = vmatprep.subr.mxu0 0.0
    %3712 = vmatpush1.msra.mxu0 %v3667
    %3713 = vmatprep.subr.mxu0 0.0
    %3714 = vmatpush1.msra.mxu0 %v3668
    %3715 = vmatprep.subr.mxu0 0.0
    %3716 = vmatpush1.msra.mxu0 %v3669
    %3717 = vmatprep.subr.mxu0 0.0
    %3718 = vmatpush1.msra.mxu0 %v3670
    %3719 = vmatprep.subr.mxu0 0.0
    %3720 = vmatpush1.msra.mxu0 %v3671
    %3721 = vmatprep.subr.mxu0 0.0
    %3722 = vmatpush1.msra.mxu0 %v3672
    %3723 = vmatprep.subr.mxu0 0.0
    %3724 = vmatpush1.msra.mxu0 %v3673
    %3725 = vmatprep.subr.mxu0 0.0
    %3726 = vmatpush1.msra.mxu0 %v3674
    %3727 = vmatprep.subr.mxu0 0.0
    %3728 = vmatpush1.msra.mxu0 %v3675
    %3729 = vmatprep.subr.mxu0 0.0
    %3730 = vmatpush1.msra.mxu0 %v3676
    %3731 = vmatprep.subr.mxu0 0.0
    %3732 = vmatpush1.msra.mxu0 %v3677
    %3733 = vmatprep.subr.mxu0 0.0
    %3734 = vmatpush1.msra.mxu0 %v3678
    %3735 = vmatprep.subr.mxu0 0.0
    %3736 = vmatpush1.msra.mxu0 %v3679
    %3737 = vmatprep.subr.mxu0 0.0
    %3738 = vmatpush1.msra.mxu0 %v3680
    %3739 = vmatprep.subr.mxu0 0.0
    %3740 = vmatpush1.msra.mxu0 %v3681
    %3741 = vmatprep.subr.mxu0 0.0
    %3742 = vmatpush1.msra.mxu0 %v3682
    %3743 = vmatprep.subr.mxu0 0.0
    %3744 = vmatpush1.msra.mxu0 %v3683
    %3745 = vmatprep.subr.mxu0 0.0
    %3746 = vmatpush1.msra.mxu0 %v3684
    %3747 = vmatprep.subr.mxu0 0.0
    %3748 = vmatpush1.msra.mxu0 %v3685
    %3749 = vmatprep.subr.mxu0 0.0
    %3750 = vmatpush1.msra.mxu0 %v3686
    %3751 = vmatprep.subr.mxu0 0.0
    %3752 = vmatpush1.msra.mxu0 %v3687
    %3753 = vmatprep.subr.mxu0 0.0
    %3754 = vmatpush1.msra.mxu0 %v3688
    %3755 = vmatprep.subr.mxu0 0.0
    %3756 = vmatpush1.msra.mxu0 %v3689
    %3757 = vmatprep.subr.mxu0 0.0
    %3758 = vmatpush1.msra.mxu0 %v3690
    %3759 = vmatprep.subr.mxu0 0.0
    %3760 = vmatpush1.msra.mxu0 %v3691
    %3761 = vmatprep.subr.mxu0 0.0
    %3762 = vmatpush1.msra.mxu0 %v3692
    %3763 = vmatprep.subr.mxu0 0.0
    %3764 = vmatpush1.msra.mxu0 %v3693
    %3765 = vmatprep.mubr.f32.mxu0 %v3589
    %3766 = vmatmul.mubr.f32.gmra.mrb[0].mxu0 %v3587
    %v3767 = vpop.f32.mrb[0].mxu0
    %v3768 = vadd.f32 0.0, %v3767
    %v3769 = vpop.f32.mrb[0].mxu0
    %3770 = vdwg.mxu0
    %3771 = vmatprep.subr.mxu0 0.0
    %3772 = vmatpush1.msra.mxu0 %v3694
    %3773 = vmatprep.subr.mxu0 0.0
    %3774 = vmatpush1.msra.mxu0 %v3695
    %3775 = vmatprep.subr.mxu0 0.0
    %3776 = vmatpush1.msra.mxu0 %v3696
    %3777 = vmatprep.subr.mxu0 0.0
    %3778 = vmatpush1.msra.mxu0 %v3697
    %3779 = vmatprep.subr.mxu0 0.0
    %3780 = vmatpush1.msra.mxu0 0.0
    %3781 = vmatprep.subr.mxu0 0.0
    %3782 = vmatpush1.msra.mxu0 0.0
    %3783 = vmatprep.subr.mxu0 0.0
    %3784 = vmatpush1.msra.mxu0 0.0
    %3785 = vmatprep.subr.mxu0 0.0
    %3786 = vmatpush1.msra.mxu0 0.0
    %3787 = vmatprep.subr.mxu0 0.0
    %3788 = vmatpush1.msra.mxu0 0.0
    %3789 = vmatprep.subr.mxu0 0.0
    %3790 = vmatpush1.msra.mxu0 0.0
    %3791 = vmatprep.subr.mxu0 0.0
    %3792 = vmatpush1.msra.mxu0 0.0
    %3793 = vmatprep.subr.mxu0 0.0
    %3794 = vmatpush1.msra.mxu0 0.0
    %3795 = vmatprep.subr.mxu0 0.0
    %3796 = vmatpush1.msra.mxu0 0.0
    %3797 = vmatprep.subr.mxu0 0.0
    %3798 = vmatpush1.msra.mxu0 0.0
    %3799 = vmatprep.subr.mxu0 0.0
    %3800 = vmatpush1.msra.mxu0 0.0
    %3801 = vmatprep.subr.mxu0 0.0
    %3802 = vmatpush1.msra.mxu0 0.0
    %3803 = vmatprep.subr.mxu0 0.0
    %3804 = vmatpush1.msra.mxu0 0.0
    %3805 = vmatprep.subr.mxu0 0.0
    %3806 = vmatpush1.msra.mxu0 0.0
    %3807 = vmatprep.subr.mxu0 0.0
    %3808 = vmatpush1.msra.mxu0 0.0
    %3809 = vmatprep.subr.mxu0 0.0
    %3810 = vmatpush1.msra.mxu0 0.0
    %3811 = vmatprep.subr.mxu0 0.0
    %3812 = vmatpush1.msra.mxu0 0.0
    %3813 = vmatprep.subr.mxu0 0.0
    %3814 = vmatpush1.msra.mxu0 0.0
    %3815 = vmatprep.subr.mxu0 0.0
    %3816 = vmatpush1.msra.mxu0 0.0
    %3817 = vmatprep.subr.mxu0 0.0
    %3818 = vmatpush1.msra.mxu0 0.0
    %3819 = vmatprep.subr.mxu0 0.0
    %3820 = vmatpush1.msra.mxu0 0.0
    %3821 = vmatprep.subr.mxu0 0.0
    %3822 = vmatpush1.msra.mxu0 0.0
    %3823 = vmatprep.subr.mxu0 0.0
    %3824 = vmatpush1.msra.mxu0 0.0
    %3825 = vmatprep.subr.mxu0 0.0
    %3826 = vmatpush1.msra.mxu0 0.0
    %3827 = vmatprep.subr.mxu0 0.0
    %3828 = vmatpush1.msra.mxu0 0.0
    %3829 = vmatprep.subr.mxu0 0.0
    %3830 = vmatpush1.msra.mxu0 0.0
    %3831 = vmatprep.subr.mxu0 0.0
    %3832 = vmatpush1.msra.mxu0 0.0
    %3833 = vmatprep.subr.mxu0 0.0
    %3834 = vmatpush1.msra.mxu0 0.0
    %3835 = vmatprep.mubr.f32.mxu0 0.0
    %3836 = vmatmul.mubr.f32.gmra.mrb[0].mxu0 %v3699
    %v3837 = vpop.f32.mrb[0].mxu0
    %v3838 = vadd.f32 %v3768, %v3837
    %v3839 = vpop.f32.mrb[0].mxu0
    %3840 = vdwg.mxu0
    %v3841 = vadd.f32 %v3514, %v3838
    %s3842 = scalar_lea.vmem [#allocation11], 32
    %v3843 = vld [vmem:[%s3842] sm:$0x7f]
    %v3845 = vsel %vm2529, %v3843, 0
    %3847 = vmatprep.subr.mxu0 %v2520
    %3848 = vmatpush1.msra.mxu0 %v2519
    %3849 = vmatprep.subr.mxu0 %v2523
    %3850 = vmatpush1.msra.mxu0 %v2522
    %3851 = vmatprep.subr.mxu0 %v2537
    %3852 = vmatpush1.msra.mxu0 %v2534
    %3853 = vmatprep.subr.mxu0 0.0
    %3854 = vmatpush1.msra.mxu0 0.0
    %3855 = vmatprep.subr.mxu0 0.0
    %3856 = vmatpush1.msra.mxu0 0.0
    %3857 = vmatprep.subr.mxu0 0.0
    %3858 = vmatpush1.msra.mxu0 0.0
    %3859 = vmatprep.subr.mxu0 0.0
    %3860 = vmatpush1.msra.mxu0 0.0
    %3861 = vmatprep.subr.mxu0 0.0
    %3862 = vmatpush1.msra.mxu0 0.0
    %3863 = vmatprep.subr.mxu0 0.0
    %3864 = vmatpush1.msra.mxu0 0.0
    %3865 = vmatprep.subr.mxu0 0.0
    %3866 = vmatpush1.msra.mxu0 0.0
    %3867 = vmatprep.subr.mxu0 0.0
    %3868 = vmatpush1.msra.mxu0 0.0
    %3869 = vmatprep.subr.mxu0 0.0
    %3870 = vmatpush1.msra.mxu0 0.0
    %3871 = vmatprep.subr.mxu0 0.0
    %3872 = vmatpush1.msra.mxu0 0.0
    %3873 = vmatprep.subr.mxu0 0.0
    %3874 = vmatpush1.msra.mxu0 0.0
    %3875 = vmatprep.subr.mxu0 0.0
    %3876 = vmatpush1.msra.mxu0 0.0
    %3877 = vmatprep.subr.mxu0 0.0
    %3878 = vmatpush1.msra.mxu0 0.0
    %3879 = vmatprep.subr.mxu0 0.0
    %3880 = vmatpush1.msra.mxu0 0.0
    %3881 = vmatprep.subr.mxu0 0.0
    %3882 = vmatpush1.msra.mxu0 0.0
    %3883 = vmatprep.subr.mxu0 0.0
    %3884 = vmatpush1.msra.mxu0 0.0
    %3885 = vmatprep.subr.mxu0 0.0
    %3886 = vmatpush1.msra.mxu0 0.0
    %3887 = vmatprep.subr.mxu0 0.0
    %3888 = vmatpush1.msra.mxu0 0.0
    %3889 = vmatprep.subr.mxu0 0.0
    %3890 = vmatpush1.msra.mxu0 0.0
    %3891 = vmatprep.subr.mxu0 0.0
    %3892 = vmatpush1.msra.mxu0 0.0
    %3893 = vmatprep.subr.mxu0 0.0
    %3894 = vmatpush1.msra.mxu0 0.0
    %3895 = vmatprep.subr.mxu0 0.0
    %3896 = vmatpush1.msra.mxu0 0.0
    %3897 = vmatprep.subr.mxu0 0.0
    %3898 = vmatpush1.msra.mxu0 0.0
    %3899 = vmatprep.subr.mxu0 0.0
    %3900 = vmatpush1.msra.mxu0 0.0
    %3901 = vmatprep.subr.mxu0 0.0
    %3902 = vmatpush1.msra.mxu0 0.0
    %3903 = vmatprep.subr.mxu0 0.0
    %3904 = vmatpush1.msra.mxu0 0.0
    %3905 = vmatprep.subr.mxu0 0.0
    %3906 = vmatpush1.msra.mxu0 0.0
    %3907 = vmatprep.subr.mxu0 0.0
    %3908 = vmatpush1.msra.mxu0 0.0
    %3909 = vmatprep.subr.mxu0 0.0
    %3910 = vmatpush1.msra.mxu0 0.0
    %3911 = vmatprep.mubr.f32.mxu0 0.0
    %3912 = vmatmul.mubr.f32.gmra.mrb[0].mxu0 %v3845
    %v3913 = vpop.f32.mrb[0].mxu0
    %v3914 = vadd.f32 0.0, %v3913
    %v3915 = vpop.f32.mrb[0].mxu0
    %v3916 = vadd.f32 0.0, %v3915
    %3917 = vdwg.mxu0
    %3918 = vmatprep.subr.mxu0 0.0
    %3919 = vmatpush1.msra.mxu0 %v2521
    %3920 = vmatprep.subr.mxu0 0.0
    %3921 = vmatpush1.msra.mxu0 %v2524
    %3922 = vmatprep.subr.mxu0 0.0
    %3923 = vmatpush1.msra.mxu0 %v2540
    %3924 = vmatprep.subr.mxu0 0.0
    %3925 = vmatpush1.msra.mxu0 0.0
    %3926 = vmatprep.subr.mxu0 0.0
    %3927 = vmatpush1.msra.mxu0 0.0
    %3928 = vmatprep.subr.mxu0 0.0
    %3929 = vmatpush1.msra.mxu0 0.0
    %3930 = vmatprep.subr.mxu0 0.0
    %3931 = vmatpush1.msra.mxu0 0.0
    %3932 = vmatprep.subr.mxu0 0.0
    %3933 = vmatpush1.msra.mxu0 0.0
    %3934 = vmatprep.subr.mxu0 0.0
    %3935 = vmatpush1.msra.mxu0 0.0
    %3936 = vmatprep.subr.mxu0 0.0
    %3937 = vmatpush1.msra.mxu0 0.0
    %3938 = vmatprep.subr.mxu0 0.0
    %3939 = vmatpush1.msra.mxu0 0.0
    %3940 = vmatprep.subr.mxu0 0.0
    %3941 = vmatpush1.msra.mxu0 0.0
    %3942 = vmatprep.subr.mxu0 0.0
    %3943 = vmatpush1.msra.mxu0 0.0
    %3944 = vmatprep.subr.mxu0 0.0
    %3945 = vmatpush1.msra.mxu0 0.0
    %3946 = vmatprep.subr.mxu0 0.0
    %3947 = vmatpush1.msra.mxu0 0.0
    %3948 = vmatprep.subr.mxu0 0.0
    %3949 = vmatpush1.msra.mxu0 0.0
    %3950 = vmatprep.subr.mxu0 0.0
    %3951 = vmatpush1.msra.mxu0 0.0
    %3952 = vmatprep.subr.mxu0 0.0
    %3953 = vmatpush1.msra.mxu0 0.0
    %3954 = vmatprep.subr.mxu0 0.0
    %3955 = vmatpush1.msra.mxu0 0.0
    %3956 = vmatprep.subr.mxu0 0.0
    %3957 = vmatpush1.msra.mxu0 0.0
    %3958 = vmatprep.subr.mxu0 0.0
    %3959 = vmatpush1.msra.mxu0 0.0
    %3960 = vmatprep.subr.mxu0 0.0
    %3961 = vmatpush1.msra.mxu0 0.0
    %3962 = vmatprep.subr.mxu0 0.0
    %3963 = vmatpush1.msra.mxu0 0.0
    %3964 = vmatprep.subr.mxu0 0.0
    %3965 = vmatpush1.msra.mxu0 0.0
    %3966 = vmatprep.subr.mxu0 0.0
    %3967 = vmatpush1.msra.mxu0 0.0
    %3968 = vmatprep.subr.mxu0 0.0
    %3969 = vmatpush1.msra.mxu0 0.0
    %3970 = vmatprep.subr.mxu0 0.0
    %3971 = vmatpush1.msra.mxu0 0.0
    %3972 = vmatprep.subr.mxu0 0.0
    %3973 = vmatpush1.msra.mxu0 0.0
    %3974 = vmatprep.subr.mxu0 0.0
    %3975 = vmatpush1.msra.mxu0 0.0
    %3976 = vmatprep.subr.mxu0 0.0
    %3977 = vmatpush1.msra.mxu0 0.0
    %3978 = vmatprep.subr.mxu0 0.0
    %3979 = vmatpush1.msra.mxu0 0.0
    %3980 = vmatprep.subr.mxu0 0.0
    %3981 = vmatpush1.msra.mxu0 0.0
    %3982 = vmatprep.mubr.f32.mxu0 0.0
    %3983 = vmatmul.mubr.f32.gmra.mrb[0].mxu0 %v3845
    %v3984 = vpop.f32.mrb[0].mxu0
    %v3985 = vadd.f32 0.0, %v3984
    %v3986 = vpop.f32.mrb[0].mxu0
    %3987 = vdwg.mxu0
    %s3988 = scalar_lea.vmem [#allocation13], 1152
    %v3989 = vld [vmem:[%s3988] sm:$0xff]
    %v3990 = vld [vmem:[%s3988 + $0x8] sm:$0xff]
    %v3991 = vld [vmem:[%s3988 + $0x10] sm:$0xff]
    %v3992 = vld [vmem:[%s3988 + $0x18] sm:$0xff]
    %v3993 = vld [vmem:[%s3988 + $0x20] sm:$0xff]
    %v3994 = vld [vmem:[%s3988 + $0x28] sm:$0xff]
    %v3995 = vld [vmem:[%s3988 + $0x30] sm:$0xff]
    %v3996 = vld [vmem:[%s3988 + $0x38] sm:$0xff]
    %v3997 = vld [vmem:[%s3988 + $0x40] sm:$0xff]
    %v3998 = vld [vmem:[%s3988 + $0x48] sm:$0xff]
    %v3999 = vld [vmem:[%s3988 + $0x50] sm:$0xff]
    %v4000 = vld [vmem:[%s3988 + $0x58] sm:$0xff]
    %v4001 = vld [vmem:[%s3988 + $0x60] sm:$0xff]
    %v4002 = vld [vmem:[%s3988 + $0x68] sm:$0xff]
    %v4003 = vld [vmem:[%s3988 + $0x70] sm:$0xff]
    %v4004 = vld [vmem:[%s3988 + $0x78] sm:$0xff]
    %v4005 = vld [vmem:[%s3988 + $0x80] sm:$0xff]
    %v4006 = vld [vmem:[%s3988 + $0x88] sm:$0xff]
    %v4007 = vld [vmem:[%s3988 + $0x90] sm:$0xff]
    %v4008 = vld [vmem:[%s3988 + $0x98] sm:$0xff]
    %v4009 = vld [vmem:[%s3988 + $0xa0] sm:$0xff]
    %v4010 = vld [vmem:[%s3988 + $0xa8] sm:$0xff]
    %v4011 = vld [vmem:[%s3988 + $0xb0] sm:$0xff]
    %v4012 = vld [vmem:[%s3988 + $0xb8] sm:$0xff]
    %v4013 = vld [vmem:[%s3988 + $0xc0] sm:$0xff]
    %v4014 = vld [vmem:[%s3988 + $0xc8] sm:$0xff]
    %v4015 = vld [vmem:[%s3988 + $0xd0] sm:$0xff]
    %v4016 = vld [vmem:[%s3988 + $0xd8] sm:$0xff]
    %v4017 = vld [vmem:[%s3988 + $0xe0] sm:$0xff]
    %v4018 = vld [vmem:[%s3988 + $0xe8] sm:$0xff]
    %v4019 = vld [vmem:[%s3988 + $0xf0] sm:$0xff]
    %v4020 = vld [vmem:[%s3988 + $0xf8] sm:$0xff]
    %v4021 = vld [vmem:[%s3988 + $0x100] sm:$0xff]
    %v4022 = vld [vmem:[%s3988 + $0x108] sm:$0xff]
    %v4023 = vld [vmem:[%s3988 + $0x110] sm:$0xff]
    %v4024 = vld [vmem:[%s3988 + $0x118] sm:$0xff]
    %v4026 = vsel %vm1651, %v3985, 0
    %4028 = vmatprep.subr.mxu0 0.0
    %4029 = vmatpush1.msra.mxu0 %v3989
    %4030 = vmatprep.subr.mxu0 0.0
    %4031 = vmatpush1.msra.mxu0 %v3990
    %4032 = vmatprep.subr.mxu0 0.0
    %4033 = vmatpush1.msra.mxu0 %v3991
    %4034 = vmatprep.subr.mxu0 0.0
    %4035 = vmatpush1.msra.mxu0 %v3992
    %4036 = vmatprep.subr.mxu0 0.0
    %4037 = vmatpush1.msra.mxu0 %v3993
    %4038 = vmatprep.subr.mxu0 0.0
    %4039 = vmatpush1.msra.mxu0 %v3994
    %4040 = vmatprep.subr.mxu0 0.0
    %4041 = vmatpush1.msra.mxu0 %v3995
    %4042 = vmatprep.subr.mxu0 0.0
    %4043 = vmatpush1.msra.mxu0 %v3996
    %4044 = vmatprep.subr.mxu0 0.0
    %4045 = vmatpush1.msra.mxu0 %v3997
    %4046 = vmatprep.subr.mxu0 0.0
    %4047 = vmatpush1.msra.mxu0 %v3998
    %4048 = vmatprep.subr.mxu0 0.0
    %4049 = vmatpush1.msra.mxu0 %v3999
    %4050 = vmatprep.subr.mxu0 0.0
    %4051 = vmatpush1.msra.mxu0 %v4000
    %4052 = vmatprep.subr.mxu0 0.0
    %4053 = vmatpush1.msra.mxu0 %v4001
    %4054 = vmatprep.subr.mxu0 0.0
    %4055 = vmatpush1.msra.mxu0 %v4002
    %4056 = vmatprep.subr.mxu0 0.0
    %4057 = vmatpush1.msra.mxu0 %v4003
    %4058 = vmatprep.subr.mxu0 0.0
    %4059 = vmatpush1.msra.mxu0 %v4004
    %4060 = vmatprep.subr.mxu0 0.0
    %4061 = vmatpush1.msra.mxu0 %v4005
    %4062 = vmatprep.subr.mxu0 0.0
    %4063 = vmatpush1.msra.mxu0 %v4006
    %4064 = vmatprep.subr.mxu0 0.0
    %4065 = vmatpush1.msra.mxu0 %v4007
    %4066 = vmatprep.subr.mxu0 0.0
    %4067 = vmatpush1.msra.mxu0 %v4008
    %4068 = vmatprep.subr.mxu0 0.0
    %4069 = vmatpush1.msra.mxu0 %v4009
    %4070 = vmatprep.subr.mxu0 0.0
    %4071 = vmatpush1.msra.mxu0 %v4010
    %4072 = vmatprep.subr.mxu0 0.0
    %4073 = vmatpush1.msra.mxu0 %v4011
    %4074 = vmatprep.subr.mxu0 0.0
    %4075 = vmatpush1.msra.mxu0 %v4012
    %4076 = vmatprep.subr.mxu0 0.0
    %4077 = vmatpush1.msra.mxu0 %v4013
    %4078 = vmatprep.subr.mxu0 0.0
    %4079 = vmatpush1.msra.mxu0 %v4014
    %4080 = vmatprep.subr.mxu0 0.0
    %4081 = vmatpush1.msra.mxu0 %v4015
    %4082 = vmatprep.subr.mxu0 0.0
    %4083 = vmatpush1.msra.mxu0 %v4016
    %4084 = vmatprep.subr.mxu0 0.0
    %4085 = vmatpush1.msra.mxu0 %v4017
    %4086 = vmatprep.subr.mxu0 0.0
    %4087 = vmatpush1.msra.mxu0 %v4018
    %4088 = vmatprep.subr.mxu0 0.0
    %4089 = vmatpush1.msra.mxu0 %v4019
    %4090 = vmatprep.subr.mxu0 0.0
    %4091 = vmatpush1.msra.mxu0 %v4020
    %4092 = vmatprep.mubr.f32.mxu0 %v3916
    %4093 = vmatmul.mubr.f32.gmra.mrb[0].mxu0 %v3914
    %v4094 = vpop.f32.mrb[0].mxu0
    %v4095 = vadd.f32 0.0, %v4094
    %v4096 = vpop.f32.mrb[0].mxu0
    %4097 = vdwg.mxu0
    %4098 = vmatprep.subr.mxu0 0.0
    %4099 = vmatpush1.msra.mxu0 %v4021
    %4100 = vmatprep.subr.mxu0 0.0
    %4101 = vmatpush1.msra.mxu0 %v4022
    %4102 = vmatprep.subr.mxu0 0.0
    %4103 = vmatpush1.msra.mxu0 %v4023
    %4104 = vmatprep.subr.mxu0 0.0
    %4105 = vmatpush1.msra.mxu0 %v4024
    %4106 = vmatprep.subr.mxu0 0.0
    %4107 = vmatpush1.msra.mxu0 0.0
    %4108 = vmatprep.subr.mxu0 0.0
    %4109 = vmatpush1.msra.mxu0 0.0
    %4110 = vmatprep.subr.mxu0 0.0
    %4111 = vmatpush1.msra.mxu0 0.0
    %4112 = vmatprep.subr.mxu0 0.0
    %4113 = vmatpush1.msra.mxu0 0.0
    %4114 = vmatprep.subr.mxu0 0.0
    %4115 = vmatpush1.msra.mxu0 0.0
    %4116 = vmatprep.subr.mxu0 0.0
    %4117 = vmatpush1.msra.mxu0 0.0
    %4118 = vmatprep.subr.mxu0 0.0
    %4119 = vmatpush1.msra.mxu0 0.0
    %4120 = vmatprep.subr.mxu0 0.0
    %4121 = vmatpush1.msra.mxu0 0.0
    %4122 = vmatprep.subr.mxu0 0.0
    %4123 = vmatpush1.msra.mxu0 0.0
    %4124 = vmatprep.subr.mxu0 0.0
    %4125 = vmatpush1.msra.mxu0 0.0
    %4126 = vmatprep.subr.mxu0 0.0
    %4127 = vmatpush1.msra.mxu0 0.0
    %4128 = vmatprep.subr.mxu0 0.0
    %4129 = vmatpush1.msra.mxu0 0.0
    %4130 = vmatprep.subr.mxu0 0.0
    %4131 = vmatpush1.msra.mxu0 0.0
    %4132 = vmatprep.subr.mxu0 0.0
    %4133 = vmatpush1.msra.mxu0 0.0
    %4134 = vmatprep.subr.mxu0 0.0
    %4135 = vmatpush1.msra.mxu0 0.0
    %4136 = vmatprep.subr.mxu0 0.0
    %4137 = vmatpush1.msra.mxu0 0.0
    %4138 = vmatprep.subr.mxu0 0.0
    %4139 = vmatpush1.msra.mxu0 0.0
    %4140 = vmatprep.subr.mxu0 0.0
    %4141 = vmatpush1.msra.mxu0 0.0
    %4142 = vmatprep.subr.mxu0 0.0
    %4143 = vmatpush1.msra.mxu0 0.0
    %4144 = vmatprep.subr.mxu0 0.0
    %4145 = vmatpush1.msra.mxu0 0.0
    %4146 = vmatprep.subr.mxu0 0.0
    %4147 = vmatpush1.msra.mxu0 0.0
    %4148 = vmatprep.subr.mxu0 0.0
    %4149 = vmatpush1.msra.mxu0 0.0
    %4150 = vmatprep.subr.mxu0 0.0
    %4151 = vmatpush1.msra.mxu0 0.0
    %4152 = vmatprep.subr.mxu0 0.0
    %4153 = vmatpush1.msra.mxu0 0.0
    %4154 = vmatprep.subr.mxu0 0.0
    %4155 = vmatpush1.msra.mxu0 0.0
    %4156 = vmatprep.subr.mxu0 0.0
    %4157 = vmatpush1.msra.mxu0 0.0
    %4158 = vmatprep.subr.mxu0 0.0
    %4159 = vmatpush1.msra.mxu0 0.0
    %4160 = vmatprep.subr.mxu0 0.0
    %4161 = vmatpush1.msra.mxu0 0.0
    %4162 = vmatprep.mubr.f32.mxu0 0.0
    %4163 = vmatmul.mubr.f32.gmra.mrb[0].mxu0 %v4026
    %v4164 = vpop.f32.mrb[0].mxu0
    %v4165 = vadd.f32 %v4095, %v4164
    %v4166 = vpop.f32.mrb[0].mxu0
    %4167 = vdwg.mxu0
    %v4168 = vadd.f32 %v3841, %v4165
    %vm4169 = vcmask 915456
    %v4170 = vsel %vm4169, %v4168, 0.0
    %v4171 = vrot.slane %v4170, 4
    %v4172 = vadd.f32 %v4170, %v4171
    %v4173 = vrot.slane %v4172, 2
    %v4174 = vadd.f32 %v4172, %v4173
    %v4175 = vrot.slane %v4174, 1
    %v4176 = vadd.f32 %v4174, %v4175
    %v4177 = vmul.f32 %v4168, %v4168
    %v4178 = vsel %vm4169, %v4177, 0.0
    %v4179 = vrot.slane %v4178, 4
    %v4180 = vadd.f32 %v4178, %v4179
    %v4181 = vrot.slane %v4180, 2
    %v4182 = vadd.f32 %v4180, %v4181
    %v4183 = vrot.slane %v4182, 1
    %v4184 = vadd.f32 %v4182, %v4183
    %v4185 = vld [vmem:[#allocation14] sm:$0xff]
    %v4186 = vld [vmem:[#allocation14 + $0x8] sm:$0xff]
    %v4187 = vld [vmem:[#allocation14 + $0x10] sm:$0xff]
    %v4188 = vld [vmem:[#allocation14 + $0x18] sm:$0xff]
    %v4189 = vld [vmem:[#allocation14 + $0x20] sm:$0xff]
    %v4190 = vld [vmem:[#allocation14 + $0x28] sm:$0xff]
    %v4191 = vld [vmem:[#allocation14 + $0x30] sm:$0xff]
    %v4192 = vld [vmem:[#allocation14 + $0x38] sm:$0xff]
    %v4193 = vld [vmem:[#allocation14 + $0x40] sm:$0xff]
    %v4194 = vld [vmem:[#allocation14 + $0x48] sm:$0xff]
    %v4195 = vld [vmem:[#allocation14 + $0x50] sm:$0xff]
    %v4196 = vld [vmem:[#allocation14 + $0x58] sm:$0xff]
    %v4197 = vld [vmem:[#allocation14 + $0x60] sm:$0xff]
    %v4198 = vld [vmem:[#allocation14 + $0x68] sm:$0xff]
    %vm4199 = vcmask 916480
    %v4201 = vsel %vm4199, %v4176, 0
    %4203 = vmatprep.subr.mxu0 0.0
    %4204 = vmatpush1.msra.mxu0 %v4185
    %4205 = vmatprep.subr.mxu0 0.0
    %4206 = vmatpush1.msra.mxu0 %v4186
    %4207 = vmatprep.subr.mxu0 0.0
    %4208 = vmatpush1.msra.mxu0 %v4187
    %4209 = vmatprep.subr.mxu0 0.0
    %4210 = vmatpush1.msra.mxu0 %v4188
    %4211 = vmatprep.subr.mxu0 0.0
    %4212 = vmatpush1.msra.mxu0 %v4189
    %4213 = vmatprep.subr.mxu0 0.0
    %4214 = vmatpush1.msra.mxu0 %v4190
    %4215 = vmatprep.subr.mxu0 0.0
    %4216 = vmatpush1.msra.mxu0 %v4191
    %4217 = vmatprep.subr.mxu0 0.0
    %4218 = vmatpush1.msra.mxu0 %v4192
    %4219 = vmatprep.subr.mxu0 0.0
    %4220 = vmatpush1.msra.mxu0 %v4193
    %4221 = vmatprep.subr.mxu0 0.0
    %4222 = vmatpush1.msra.mxu0 %v4194
    %4223 = vmatprep.subr.mxu0 0.0
    %4224 = vmatpush1.msra.mxu0 %v4195
    %4225 = vmatprep.subr.mxu0 0.0
    %4226 = vmatpush1.msra.mxu0 %v4196
    %4227 = vmatprep.subr.mxu0 0.0
    %4228 = vmatpush1.msra.mxu0 %v4197
    %4229 = vmatprep.subr.mxu0 0.0
    %4230 = vmatpush1.msra.mxu0 %v4198
    %4231 = vmatprep.subr.mxu0 0.0
    %4232 = vmatpush1.msra.mxu0 0.0
    %4233 = vmatprep.subr.mxu0 0.0
    %4234 = vmatpush1.msra.mxu0 0.0
    %4235 = vmatprep.subr.mxu0 0.0
    %4236 = vmatpush1.msra.mxu0 0.0
    %4237 = vmatprep.subr.mxu0 0.0
    %4238 = vmatpush1.msra.mxu0 0.0
    %4239 = vmatprep.subr.mxu0 0.0
    %4240 = vmatpush1.msra.mxu0 0.0
    %4241 = vmatprep.subr.mxu0 0.0
    %4242 = vmatpush1.msra.mxu0 0.0
    %4243 = vmatprep.subr.mxu0 0.0
    %4244 = vmatpush1.msra.mxu0 0.0
    %4245 = vmatprep.subr.mxu0 0.0
    %4246 = vmatpush1.msra.mxu0 0.0
    %4247 = vmatprep.subr.mxu0 0.0
    %4248 = vmatpush1.msra.mxu0 0.0
    %4249 = vmatprep.subr.mxu0 0.0
    %4250 = vmatpush1.msra.mxu0 0.0
    %4251 = vmatprep.subr.mxu0 0.0
    %4252 = vmatpush1.msra.mxu0 0.0
    %4253 = vmatprep.subr.mxu0 0.0
    %4254 = vmatpush1.msra.mxu0 0.0
    %4255 = vmatprep.subr.mxu0 0.0
    %4256 = vmatpush1.msra.mxu0 0.0
    %4257 = vmatprep.subr.mxu0 0.0
    %4258 = vmatpush1.msra.mxu0 0.0
    %4259 = vmatprep.subr.mxu0 0.0
    %4260 = vmatpush1.msra.mxu0 0.0
    %4261 = vmatprep.subr.mxu0 0.0
    %4262 = vmatpush1.msra.mxu0 0.0
    %4263 = vmatprep.subr.mxu0 0.0
    %4264 = vmatpush1.msra.mxu0 0.0
    %4265 = vmatprep.subr.mxu0 0.0
    %4266 = vmatpush1.msra.mxu0 0.0
    %4267 = vmatprep.mubr.f32.mxu0 0.0
    %4268 = vmatmul.mubr.f32.gmra.mrb[0].mxu0 %v4201
    %v4269 = vpop.f32.mrb[0].mxu0
    %v4270 = vadd.f32 0.0, %v4269
    %v4271 = vpop.f32.mrb[0].mxu0
    %4272 = vdwg.mxu0
    %v4273 = vmul.f32 %v4270, 0.020408163
    %v4275 = vsel %vm4199, %v4184, 0
    %4277 = vmatprep.subr.mxu0 0.0
    %4278 = vmatpush1.msra.mxu0 %v4185
    %4279 = vmatprep.subr.mxu0 0.0
    %4280 = vmatpush1.msra.mxu0 %v4186
    %4281 = vmatprep.subr.mxu0 0.0
    %4282 = vmatpush1.msra.mxu0 %v4187
    %4283 = vmatprep.subr.mxu0 0.0
    %4284 = vmatpush1.msra.mxu0 %v4188
    %4285 = vmatprep.subr.mxu0 0.0
    %4286 = vmatpush1.msra.mxu0 %v4189
    %4287 = vmatprep.subr.mxu0 0.0
    %4288 = vmatpush1.msra.mxu0 %v4190
    %4289 = vmatprep.subr.mxu0 0.0
    %4290 = vmatpush1.msra.mxu0 %v4191
    %4291 = vmatprep.subr.mxu0 0.0
    %4292 = vmatpush1.msra.mxu0 %v4192
    %4293 = vmatprep.subr.mxu0 0.0
    %4294 = vmatpush1.msra.mxu0 %v4193
    %4295 = vmatprep.subr.mxu0 0.0
    %4296 = vmatpush1.msra.mxu0 %v4194
    %4297 = vmatprep.subr.mxu0 0.0
    %4298 = vmatpush1.msra.mxu0 %v4195
    %4299 = vmatprep.subr.mxu0 0.0
    %4300 = vmatpush1.msra.mxu0 %v4196
    %4301 = vmatprep.subr.mxu0 0.0
    %4302 = vmatpush1.msra.mxu0 %v4197
    %4303 = vmatprep.subr.mxu0 0.0
    %4304 = vmatpush1.msra.mxu0 %v4198
    %4305 = vmatprep.subr.mxu0 0.0
    %4306 = vmatpush1.msra.mxu0 0.0
    %4307 = vmatprep.subr.mxu0 0.0
    %4308 = vmatpush1.msra.mxu0 0.0
    %4309 = vmatprep.subr.mxu0 0.0
    %4310 = vmatpush1.msra.mxu0 0.0
    %4311 = vmatprep.subr.mxu0 0.0
    %4312 = vmatpush1.msra.mxu0 0.0
    %4313 = vmatprep.subr.mxu0 0.0
    %4314 = vmatpush1.msra.mxu0 0.0
    %4315 = vmatprep.subr.mxu0 0.0
    %4316 = vmatpush1.msra.mxu0 0.0
    %4317 = vmatprep.subr.mxu0 0.0
    %4318 = vmatpush1.msra.mxu0 0.0
    %4319 = vmatprep.subr.mxu0 0.0
    %4320 = vmatpush1.msra.mxu0 0.0
    %4321 = vmatprep.subr.mxu0 0.0
    %4322 = vmatpush1.msra.mxu0 0.0
    %4323 = vmatprep.subr.mxu0 0.0
    %4324 = vmatpush1.msra.mxu0 0.0
    %4325 = vmatprep.subr.mxu0 0.0
    %4326 = vmatpush1.msra.mxu0 0.0
    %4327 = vmatprep.subr.mxu0 0.0
    %4328 = vmatpush1.msra.mxu0 0.0
    %4329 = vmatprep.subr.mxu0 0.0
    %4330 = vmatpush1.msra.mxu0 0.0
    %4331 = vmatprep.subr.mxu0 0.0
    %4332 = vmatpush1.msra.mxu0 0.0
    %4333 = vmatprep.subr.mxu0 0.0
    %4334 = vmatpush1.msra.mxu0 0.0
    %4335 = vmatprep.subr.mxu0 0.0
    %4336 = vmatpush1.msra.mxu0 0.0
    %4337 = vmatprep.subr.mxu0 0.0
    %4338 = vmatpush1.msra.mxu0 0.0
    %4339 = vmatprep.subr.mxu0 0.0
    %4340 = vmatpush1.msra.mxu0 0.0
    %4341 = vmatprep.mubr.f32.mxu0 0.0
    %4342 = vmatmul.mubr.f32.gmra.mrb[0].mxu0 %v4275
    %v4343 = vpop.f32.mrb[0].mxu0
    %v4344 = vadd.f32 0.0, %v4343
    %v4345 = vpop.f32.mrb[0].mxu0
    %4346 = vdwg.mxu0
    %v4347 = vmul.f32 %v4344, 0.020408163
    %v4348 = vmul.f32 %v4273, %v4273
    %v4349 = vsub.f32 %v4347, %v4348
    %v4350 = vld [vmem:[#allocation16] sm:$0x3]
    %v4351 = vadd.f32 %v4349, 1e-05
    %v4352 = vrsqrt.pop %v4351
    %v4353 = vmul.f32 %v4350, %v4352
    %v4354 = vmul.f32 %v4273, %v4353
    %v4356 = vrot.slane %v4354, 7
    %v4358 = vsub.f32 %v4350, %v4356
    %v4359 = vlaneseq
    %v4360 = vshrl.u32 %v4359, 7
    %v4361 = vsub.s32 0, %v4360
    %v4362 = vrot.slane %v4353, %v4361
    %v4363 = vmul.f32 %v4168, %v4362
    %v4364 = vlaneseq
    %v4365 = vshrl.u32 %v4364, 7
    %v4366 = vsub.s32 1, %v4365
    %v4367 = vrot.slane %v4358, %v4366
    %v4368 = vadd.f32 %v4363, %v4367
    %v4369 = vmax.f32 %v4368, 0.0
    %v4370 = vld [vmem:[%s9] sm:$0x3]
    %vm4371 = vcmask 56320
    %v4373 = vsel %vm4371, %v4370, 0
    %vm4375 = vcmask 1046528
    %v4377 = vsel %vm4375, %v4369, 0
    %4379 = vmatprep.subr.mxu0 0.0
    %4380 = vmatpush1.msra.mxu0 %v4377
    %4381 = vmatprep.subr.mxu0 0.0
    %4382 = vmatpush1.msra.mxu0 0.0
    %4383 = vmatprep.subr.mxu0 0.0
    %4384 = vmatpush1.msra.mxu0 0.0
    %4385 = vmatprep.subr.mxu0 0.0
    %4386 = vmatpush1.msra.mxu0 0.0
    %4387 = vmatprep.subr.mxu0 0.0
    %4388 = vmatpush1.msra.mxu0 0.0
    %4389 = vmatprep.subr.mxu0 0.0
    %4390 = vmatpush1.msra.mxu0 0.0
    %4391 = vmatprep.subr.mxu0 0.0
    %4392 = vmatpush1.msra.mxu0 0.0
    %4393 = vmatprep.subr.mxu0 0.0
    %4394 = vmatpush1.msra.mxu0 0.0
    %4395 = vmatprep.subr.mxu0 0.0
    %4396 = vmatpush1.msra.mxu0 0.0
    %4397 = vmatprep.subr.mxu0 0.0
    %4398 = vmatpush1.msra.mxu0 0.0
    %4399 = vmatprep.subr.mxu0 0.0
    %4400 = vmatpush1.msra.mxu0 0.0
    %4401 = vmatprep.subr.mxu0 0.0
    %4402 = vmatpush1.msra.mxu0 0.0
    %4403 = vmatprep.subr.mxu0 0.0
    %4404 = vmatpush1.msra.mxu0 0.0
    %4405 = vmatprep.subr.mxu0 0.0
    %4406 = vmatpush1.msra.mxu0 0.0
    %4407 = vmatprep.subr.mxu0 0.0
    %4408 = vmatpush1.msra.mxu0 0.0
    %4409 = vmatprep.subr.mxu0 0.0
    %4410 = vmatpush1.msra.mxu0 0.0
    %4411 = vmatprep.subr.mxu0 0.0
    %4412 = vmatpush1.msra.mxu0 0.0
    %4413 = vmatprep.subr.mxu0 0.0
    %4414 = vmatpush1.msra.mxu0 0.0
    %4415 = vmatprep.subr.mxu0 0.0
    %4416 = vmatpush1.msra.mxu0 0.0
    %4417 = vmatprep.subr.mxu0 0.0
    %4418 = vmatpush1.msra.mxu0 0.0
    %4419 = vmatprep.subr.mxu0 0.0
    %4420 = vmatpush1.msra.mxu0 0.0
    %4421 = vmatprep.subr.mxu0 0.0
    %4422 = vmatpush1.msra.mxu0 0.0
    %4423 = vmatprep.subr.mxu0 0.0
    %4424 = vmatpush1.msra.mxu0 0.0
    %4425 = vmatprep.subr.mxu0 0.0
    %4426 = vmatpush1.msra.mxu0 0.0
    %4427 = vmatprep.subr.mxu0 0.0
    %4428 = vmatpush1.msra.mxu0 0.0
    %4429 = vmatprep.subr.mxu0 0.0
    %4430 = vmatpush1.msra.mxu0 0.0
    %4431 = vmatprep.subr.mxu0 0.0
    %4432 = vmatpush1.msra.mxu0 0.0
    %4433 = vmatprep.subr.mxu0 0.0
    %4434 = vmatpush1.msra.mxu0 0.0
    %4435 = vmatprep.subr.mxu0 0.0
    %4436 = vmatpush1.msra.mxu0 0.0
    %4437 = vmatprep.subr.mxu0 0.0
    %4438 = vmatpush1.msra.mxu0 0.0
    %4439 = vmatprep.subr.mxu0 0.0
    %4440 = vmatpush1.msra.mxu0 0.0
    %4441 = vmatprep.subr.mxu0 0.0
    %4442 = vmatpush1.msra.mxu0 0.0
    %4443 = vmatprep.mubr.f32.mxu0 0.0
    %4444 = vmatmul.mubr.f32.gmra.mrb[0].mxu0 %v4373
    %v4445 = vpop.f32.mrb[0].mxu0
    %v4446 = vadd.f32 0.0, %v4445
    %v4447 = vpop.f32.mrb[0].mxu0
    %4448 = vdwg.mxu0
    %v4449 = vld [vmem:[#allocation17] sm:$0xff]
    %v4450 = vld [vmem:[#allocation17 + $0x8] sm:$0xff]
    %v4451 = vld [vmem:[#allocation17 + $0x10] sm:$0xff]
    %v4452 = vld [vmem:[#allocation17 + $0x18] sm:$0xff]
    %v4453 = vld [vmem:[#allocation17 + $0x20] sm:$0xff]
    %v4454 = vld [vmem:[#allocation17 + $0x28] sm:$0xff]
    %v4455 = vld [vmem:[#allocation17 + $0x30] sm:$0xff]
    %v4456 = vld [vmem:[#allocation17 + $0x38] sm:$0xff]
    %v4457 = vld [vmem:[#allocation17 + $0x40] sm:$0xff]
    %v4458 = vld [vmem:[#allocation17 + $0x48] sm:$0xff]
    %v4459 = vld [vmem:[#allocation17 + $0x50] sm:$0xff]
    %v4460 = vld [vmem:[#allocation17 + $0x58] sm:$0xff]
    %v4461 = vld [vmem:[#allocation17 + $0x60] sm:$0xff]
    %v4462 = vld [vmem:[#allocation17 + $0x68] sm:$0xff]
    %s4463 = scalar_lea.vmem %s9, 2
    %v4464 = vld [vmem:[%s4463] sm:$0x3]
    %v4466 = vsel %vm4371, %v4464, 0
    %4468 = vmatprep.subr.mxu0 0.0
    %4469 = vmatpush1.msra.mxu0 %v4377
    %4470 = vmatprep.subr.mxu0 0.0
    %4471 = vmatpush1.msra.mxu0 0.0
    %4472 = vmatprep.subr.mxu0 0.0
    %4473 = vmatpush1.msra.mxu0 0.0
    %4474 = vmatprep.subr.mxu0 0.0
    %4475 = vmatpush1.msra.mxu0 0.0
    %4476 = vmatprep.subr.mxu0 0.0
    %4477 = vmatpush1.msra.mxu0 0.0
    %4478 = vmatprep.subr.mxu0 0.0
    %4479 = vmatpush1.msra.mxu0 0.0
    %4480 = vmatprep.subr.mxu0 0.0
    %4481 = vmatpush1.msra.mxu0 0.0
    %4482 = vmatprep.subr.mxu0 0.0
    %4483 = vmatpush1.msra.mxu0 0.0
    %4484 = vmatprep.subr.mxu0 0.0
    %4485 = vmatpush1.msra.mxu0 0.0
    %4486 = vmatprep.subr.mxu0 0.0
    %4487 = vmatpush1.msra.mxu0 0.0
    %4488 = vmatprep.subr.mxu0 0.0
    %4489 = vmatpush1.msra.mxu0 0.0
    %4490 = vmatprep.subr.mxu0 0.0
    %4491 = vmatpush1.msra.mxu0 0.0
    %4492 = vmatprep.subr.mxu0 0.0
    %4493 = vmatpush1.msra.mxu0 0.0
    %4494 = vmatprep.subr.mxu0 0.0
    %4495 = vmatpush1.msra.mxu0 0.0
    %4496 = vmatprep.subr.mxu0 0.0
    %4497 = vmatpush1.msra.mxu0 0.0
    %4498 = vmatprep.subr.mxu0 0.0
    %4499 = vmatpush1.msra.mxu0 0.0
    %4500 = vmatprep.subr.mxu0 0.0
    %4501 = vmatpush1.msra.mxu0 0.0
    %4502 = vmatprep.subr.mxu0 0.0
    %4503 = vmatpush1.msra.mxu0 0.0
    %4504 = vmatprep.subr.mxu0 0.0
    %4505 = vmatpush1.msra.mxu0 0.0
    %4506 = vmatprep.subr.mxu0 0.0
    %4507 = vmatpush1.msra.mxu0 0.0
    %4508 = vmatprep.subr.mxu0 0.0
    %4509 = vmatpush1.msra.mxu0 0.0
    %4510 = vmatprep.subr.mxu0 0.0
    %4511 = vmatpush1.msra.mxu0 0.0
    %4512 = vmatprep.subr.mxu0 0.0
    %4513 = vmatpush1.msra.mxu0 0.0
    %4514 = vmatprep.subr.mxu0 0.0
    %4515 = vmatpush1.msra.mxu0 0.0
    %4516 = vmatprep.subr.mxu0 0.0
    %4517 = vmatpush1.msra.mxu0 0.0
    %4518 = vmatprep.subr.mxu0 0.0
    %4519 = vmatpush1.msra.mxu0 0.0
    %4520 = vmatprep.subr.mxu0 0.0
    %4521 = vmatpush1.msra.mxu0 0.0
    %4522 = vmatprep.subr.mxu0 0.0
    %4523 = vmatpush1.msra.mxu0 0.0
    %4524 = vmatprep.subr.mxu0 0.0
    %4525 = vmatpush1.msra.mxu0 0.0
    %4526 = vmatprep.subr.mxu0 0.0
    %4527 = vmatpush1.msra.mxu0 0.0
    %4528 = vmatprep.subr.mxu0 0.0
    %4529 = vmatpush1.msra.mxu0 0.0
    %4530 = vmatprep.subr.mxu0 0.0
    %4531 = vmatpush1.msra.mxu0 0.0
    %4532 = vmatprep.mubr.f32.mxu0 0.0
    %4533 = vmatmul.mubr.f32.gmra.mrb[0].mxu0 %v4466
    %v4534 = vpop.f32.mrb[0].mxu0
    %v4535 = vadd.f32 0.0, %v4534
    %v4536 = vpop.f32.mrb[0].mxu0
    %4537 = vdwg.mxu0
    %s4538 = scalar_lea.vmem [#allocation17], 112
    %v4539 = vld [vmem:[%s4538] sm:$0xff]
    %v4540 = vld [vmem:[%s4538 + $0x8] sm:$0xff]
    %v4541 = vld [vmem:[%s4538 + $0x10] sm:$0xff]
    %v4542 = vld [vmem:[%s4538 + $0x18] sm:$0xff]
    %v4543 = vld [vmem:[%s4538 + $0x20] sm:$0xff]
    %v4544 = vld [vmem:[%s4538 + $0x28] sm:$0xff]
    %v4545 = vld [vmem:[%s4538 + $0x30] sm:$0xff]
    %v4546 = vld [vmem:[%s4538 + $0x38] sm:$0xff]
    %v4547 = vld [vmem:[%s4538 + $0x40] sm:$0xff]
    %v4548 = vld [vmem:[%s4538 + $0x48] sm:$0xff]
    %v4549 = vld [vmem:[%s4538 + $0x50] sm:$0xff]
    %v4550 = vld [vmem:[%s4538 + $0x58] sm:$0xff]
    %v4551 = vld [vmem:[%s4538 + $0x60] sm:$0xff]
    %v4552 = vld [vmem:[%s4538 + $0x68] sm:$0xff]
    %v4554 = vsel %vm4199, %v4535, 0
    %4556 = vmatprep.subr.mxu0 0.0
    %4557 = vmatpush1.msra.mxu0 %v4539
    %4558 = vmatprep.subr.mxu0 0.0
    %4559 = vmatpush1.msra.mxu0 %v4540
    %4560 = vmatprep.subr.mxu0 0.0
    %4561 = vmatpush1.msra.mxu0 %v4541
    %4562 = vmatprep.subr.mxu0 0.0
    %4563 = vmatpush1.msra.mxu0 %v4542
    %4564 = vmatprep.subr.mxu0 0.0
    %4565 = vmatpush1.msra.mxu0 %v4543
    %4566 = vmatprep.subr.mxu0 0.0
    %4567 = vmatpush1.msra.mxu0 %v4544
    %4568 = vmatprep.subr.mxu0 0.0
    %4569 = vmatpush1.msra.mxu0 %v4545
    %4570 = vmatprep.subr.mxu0 0.0
    %4571 = vmatpush1.msra.mxu0 %v4546
    %4572 = vmatprep.subr.mxu0 0.0
    %4573 = vmatpush1.msra.mxu0 %v4547
    %4574 = vmatprep.subr.mxu0 0.0
    %4575 = vmatpush1.msra.mxu0 %v4548
    %4576 = vmatprep.subr.mxu0 0.0
    %4577 = vmatpush1.msra.mxu0 %v4549
    %4578 = vmatprep.subr.mxu0 0.0
    %4579 = vmatpush1.msra.mxu0 %v4550
    %4580 = vmatprep.subr.mxu0 0.0
    %4581 = vmatpush1.msra.mxu0 %v4551
    %4582 = vmatprep.subr.mxu0 0.0
    %4583 = vmatpush1.msra.mxu0 %v4552
    %4584 = vmatprep.subr.mxu0 0.0
    %4585 = vmatpush1.msra.mxu0 0.0
    %4586 = vmatprep.subr.mxu0 0.0
    %4587 = vmatpush1.msra.mxu0 0.0
    %4588 = vmatprep.subr.mxu0 0.0
    %4589 = vmatpush1.msra.mxu0 0.0
    %4590 = vmatprep.subr.mxu0 0.0
    %4591 = vmatpush1.msra.mxu0 0.0
    %4592 = vmatprep.subr.mxu0 0.0
    %4593 = vmatpush1.msra.mxu0 0.0
    %4594 = vmatprep.subr.mxu0 0.0
    %4595 = vmatpush1.msra.mxu0 0.0
    %4596 = vmatprep.subr.mxu0 0.0
    %4597 = vmatpush1.msra.mxu0 0.0
    %4598 = vmatprep.subr.mxu0 0.0
    %4599 = vmatpush1.msra.mxu0 0.0
    %4600 = vmatprep.subr.mxu0 0.0
    %4601 = vmatpush1.msra.mxu0 0.0
    %4602 = vmatprep.subr.mxu0 0.0
    %4603 = vmatpush1.msra.mxu0 0.0
    %4604 = vmatprep.subr.mxu0 0.0
    %4605 = vmatpush1.msra.mxu0 0.0
    %4606 = vmatprep.subr.mxu0 0.0
    %4607 = vmatpush1.msra.mxu0 0.0
    %4608 = vmatprep.subr.mxu0 0.0
    %4609 = vmatpush1.msra.mxu0 0.0
    %4610 = vmatprep.subr.mxu0 0.0
    %4611 = vmatpush1.msra.mxu0 0.0
    %4612 = vmatprep.subr.mxu0 0.0
    %4613 = vmatpush1.msra.mxu0 0.0
    %4614 = vmatprep.subr.mxu0 0.0
    %4615 = vmatpush1.msra.mxu0 0.0
    %4616 = vmatprep.subr.mxu0 0.0
    %4617 = vmatpush1.msra.mxu0 0.0
    %4618 = vmatprep.subr.mxu0 0.0
    %4619 = vmatpush1.msra.mxu0 0.0
    %4620 = vmatprep.mubr.f32.mxu0 0.0
    %4621 = vmatmul.mubr.f32.gmra.mrb[0].mxu0 %v4554
    %v4622 = vpop.f32.mrb[0].mxu0
    %v4623 = vadd.f32 0.0, %v4622
    %v4624 = vpop.f32.mrb[0].mxu0
    %4625 = vdwg.mxu0
    %v4627 = vsel %vm4199, %v4446, 0
    %4629 = vmatprep.subr.mxu0 0.0
    %4630 = vmatpush1.msra.mxu0 %v4449
    %4631 = vmatprep.subr.mxu0 0.0
    %4632 = vmatpush1.msra.mxu0 %v4450
    %4633 = vmatprep.subr.mxu0 0.0
    %4634 = vmatpush1.msra.mxu0 %v4451
    %4635 = vmatprep.subr.mxu0 0.0
    %4636 = vmatpush1.msra.mxu0 %v4452
    %4637 = vmatprep.subr.mxu0 0.0
    %4638 = vmatpush1.msra.mxu0 %v4453
    %4639 = vmatprep.subr.mxu0 0.0
    %4640 = vmatpush1.msra.mxu0 %v4454
    %4641 = vmatprep.subr.mxu0 0.0
    %4642 = vmatpush1.msra.mxu0 %v4455
    %4643 = vmatprep.subr.mxu0 0.0
    %4644 = vmatpush1.msra.mxu0 %v4456
    %4645 = vmatprep.subr.mxu0 0.0
    %4646 = vmatpush1.msra.mxu0 %v4457
    %4647 = vmatprep.subr.mxu0 0.0
    %4648 = vmatpush1.msra.mxu0 %v4458
    %4649 = vmatprep.subr.mxu0 0.0
    %4650 = vmatpush1.msra.mxu0 %v4459
    %4651 = vmatprep.subr.mxu0 0.0
    %4652 = vmatpush1.msra.mxu0 %v4460
    %4653 = vmatprep.subr.mxu0 0.0
    %4654 = vmatpush1.msra.mxu0 %v4461
    %4655 = vmatprep.subr.mxu0 0.0
    %4656 = vmatpush1.msra.mxu0 %v4462
    %4657 = vmatprep.subr.mxu0 0.0
    %4658 = vmatpush1.msra.mxu0 0.0
    %4659 = vmatprep.subr.mxu0 0.0
    %4660 = vmatpush1.msra.mxu0 0.0
    %4661 = vmatprep.subr.mxu0 0.0
    %4662 = vmatpush1.msra.mxu0 0.0
    %4663 = vmatprep.subr.mxu0 0.0
    %4664 = vmatpush1.msra.mxu0 0.0
    %4665 = vmatprep.subr.mxu0 0.0
    %4666 = vmatpush1.msra.mxu0 0.0
    %4667 = vmatprep.subr.mxu0 0.0
    %4668 = vmatpush1.msra.mxu0 0.0
    %4669 = vmatprep.subr.mxu0 0.0
    %4670 = vmatpush1.msra.mxu0 0.0
    %4671 = vmatprep.subr.mxu0 0.0
    %4672 = vmatpush1.msra.mxu0 0.0
    %4673 = vmatprep.subr.mxu0 0.0
    %4674 = vmatpush1.msra.mxu0 0.0
    %4675 = vmatprep.subr.mxu0 0.0
    %4676 = vmatpush1.msra.mxu0 0.0
    %4677 = vmatprep.subr.mxu0 0.0
    %4678 = vmatpush1.msra.mxu0 0.0
    %4679 = vmatprep.subr.mxu0 0.0
    %4680 = vmatpush1.msra.mxu0 0.0
    %4681 = vmatprep.subr.mxu0 0.0
    %4682 = vmatpush1.msra.mxu0 0.0
    %4683 = vmatprep.subr.mxu0 0.0
    %4684 = vmatpush1.msra.mxu0 0.0
    %4685 = vmatprep.subr.mxu0 0.0
    %4686 = vmatpush1.msra.mxu0 0.0
    %4687 = vmatprep.subr.mxu0 0.0
    %4688 = vmatpush1.msra.mxu0 0.0
    %4689 = vmatprep.subr.mxu0 0.0
    %4690 = vmatpush1.msra.mxu0 0.0
    %4691 = vmatprep.subr.mxu0 0.0
    %4692 = vmatpush1.msra.mxu0 0.0
    %4693 = vmatprep.mubr.f32.mxu0 0.0
    %4694 = vmatmul.mubr.f32.gmra.mrb[0].mxu0 %v4627
    %v4695 = vpop.f32.mrb[0].mxu0
    %v4696 = vadd.f32 %v4623, %v4695
    %v4697 = vpop.f32.mrb[0].mxu0
    %4698 = vdwg.mxu0
    %s4699 = scalar_lea.vmem %s9, 4
    %v4700 = vld [vmem:[%s4699] sm:$0x3]
    %v4702 = vsel %vm4371, %v4700, 0
    %4704 = vmatprep.subr.mxu0 0.0
    %4705 = vmatpush1.msra.mxu0 %v4377
    %4706 = vmatprep.subr.mxu0 0.0
    %4707 = vmatpush1.msra.mxu0 0.0
    %4708 = vmatprep.subr.mxu0 0.0
    %4709 = vmatpush1.msra.mxu0 0.0
    %4710 = vmatprep.subr.mxu0 0.0
    %4711 = vmatpush1.msra.mxu0 0.0
    %4712 = vmatprep.subr.mxu0 0.0
    %4713 = vmatpush1.msra.mxu0 0.0
    %4714 = vmatprep.subr.mxu0 0.0
    %4715 = vmatpush1.msra.mxu0 0.0
    %4716 = vmatprep.subr.mxu0 0.0
    %4717 = vmatpush1.msra.mxu0 0.0
    %4718 = vmatprep.subr.mxu0 0.0
    %4719 = vmatpush1.msra.mxu0 0.0
    %4720 = vmatprep.subr.mxu0 0.0
    %4721 = vmatpush1.msra.mxu0 0.0
    %4722 = vmatprep.subr.mxu0 0.0
    %4723 = vmatpush1.msra.mxu0 0.0
    %4724 = vmatprep.subr.mxu0 0.0
    %4725 = vmatpush1.msra.mxu0 0.0
    %4726 = vmatprep.subr.mxu0 0.0
    %4727 = vmatpush1.msra.mxu0 0.0
    %4728 = vmatprep.subr.mxu0 0.0
    %4729 = vmatpush1.msra.mxu0 0.0
    %4730 = vmatprep.subr.mxu0 0.0
    %4731 = vmatpush1.msra.mxu0 0.0
    %4732 = vmatprep.subr.mxu0 0.0
    %4733 = vmatpush1.msra.mxu0 0.0
    %4734 = vmatprep.subr.mxu0 0.0
    %4735 = vmatpush1.msra.mxu0 0.0
    %4736 = vmatprep.subr.mxu0 0.0
    %4737 = vmatpush1.msra.mxu0 0.0
    %4738 = vmatprep.subr.mxu0 0.0
    %4739 = vmatpush1.msra.mxu0 0.0
    %4740 = vmatprep.subr.mxu0 0.0
    %4741 = vmatpush1.msra.mxu0 0.0
    %4742 = vmatprep.subr.mxu0 0.0
    %4743 = vmatpush1.msra.mxu0 0.0
    %4744 = vmatprep.subr.mxu0 0.0
    %4745 = vmatpush1.msra.mxu0 0.0
    %4746 = vmatprep.subr.mxu0 0.0
    %4747 = vmatpush1.msra.mxu0 0.0
    %4748 = vmatprep.subr.mxu0 0.0
    %4749 = vmatpush1.msra.mxu0 0.0
    %4750 = vmatprep.subr.mxu0 0.0
    %4751 = vmatpush1.msra.mxu0 0.0
    %4752 = vmatprep.subr.mxu0 0.0
    %4753 = vmatpush1.msra.mxu0 0.0
    %4754 = vmatprep.subr.mxu0 0.0
    %4755 = vmatpush1.msra.mxu0 0.0
    %4756 = vmatprep.subr.mxu0 0.0
    %4757 = vmatpush1.msra.mxu0 0.0
    %4758 = vmatprep.subr.mxu0 0.0
    %4759 = vmatpush1.msra.mxu0 0.0
    %4760 = vmatprep.subr.mxu0 0.0
    %4761 = vmatpush1.msra.mxu0 0.0
    %4762 = vmatprep.subr.mxu0 0.0
    %4763 = vmatpush1.msra.mxu0 0.0
    %4764 = vmatprep.subr.mxu0 0.0
    %4765 = vmatpush1.msra.mxu0 0.0
    %4766 = vmatprep.subr.mxu0 0.0
    %4767 = vmatpush1.msra.mxu0 0.0
    %4768 = vmatprep.mubr.f32.mxu0 0.0
    %4769 = vmatmul.mubr.f32.gmra.mrb[0].mxu0 %v4702
    %v4770 = vpop.f32.mrb[0].mxu0
    %v4771 = vadd.f32 0.0, %v4770
    %v4772 = vpop.f32.mrb[0].mxu0
    %4773 = vdwg.mxu0
    %s4774 = scalar_lea.vmem [#allocation17], 224
    %v4775 = vld [vmem:[%s4774] sm:$0xff]
    %v4776 = vld [vmem:[%s4774 + $0x8] sm:$0xff]
    %v4777 = vld [vmem:[%s4774 + $0x10] sm:$0xff]
    %v4778 = vld [vmem:[%s4774 + $0x18] sm:$0xff]
    %v4779 = vld [vmem:[%s4774 + $0x20] sm:$0xff]
    %v4780 = vld [vmem:[%s4774 + $0x28] sm:$0xff]
    %v4781 = vld [vmem:[%s4774 + $0x30] sm:$0xff]
    %v4782 = vld [vmem:[%s4774 + $0x38] sm:$0xff]
    %v4783 = vld [vmem:[%s4774 + $0x40] sm:$0xff]
    %v4784 = vld [vmem:[%s4774 + $0x48] sm:$0xff]
    %v4785 = vld [vmem:[%s4774 + $0x50] sm:$0xff]
    %v4786 = vld [vmem:[%s4774 + $0x58] sm:$0xff]
    %v4787 = vld [vmem:[%s4774 + $0x60] sm:$0xff]
    %v4788 = vld [vmem:[%s4774 + $0x68] sm:$0xff]
    %v4790 = vsel %vm4199, %v4771, 0
    %4792 = vmatprep.subr.mxu0 0.0
    %4793 = vmatpush1.msra.mxu0 %v4775
    %4794 = vmatprep.subr.mxu0 0.0
    %4795 = vmatpush1.msra.mxu0 %v4776
    %4796 = vmatprep.subr.mxu0 0.0
    %4797 = vmatpush1.msra.mxu0 %v4777
    %4798 = vmatprep.subr.mxu0 0.0
    %4799 = vmatpush1.msra.mxu0 %v4778
    %4800 = vmatprep.subr.mxu0 0.0
    %4801 = vmatpush1.msra.mxu0 %v4779
    %4802 = vmatprep.subr.mxu0 0.0
    %4803 = vmatpush1.msra.mxu0 %v4780
    %4804 = vmatprep.subr.mxu0 0.0
    %4805 = vmatpush1.msra.mxu0 %v4781
    %4806 = vmatprep.subr.mxu0 0.0
    %4807 = vmatpush1.msra.mxu0 %v4782
    %4808 = vmatprep.subr.mxu0 0.0
    %4809 = vmatpush1.msra.mxu0 %v4783
    %4810 = vmatprep.subr.mxu0 0.0
    %4811 = vmatpush1.msra.mxu0 %v4784
    %4812 = vmatprep.subr.mxu0 0.0
    %4813 = vmatpush1.msra.mxu0 %v4785
    %4814 = vmatprep.subr.mxu0 0.0
    %4815 = vmatpush1.msra.mxu0 %v4786
    %4816 = vmatprep.subr.mxu0 0.0
    %4817 = vmatpush1.msra.mxu0 %v4787
    %4818 = vmatprep.subr.mxu0 0.0
    %4819 = vmatpush1.msra.mxu0 %v4788
    %4820 = vmatprep.subr.mxu0 0.0
    %4821 = vmatpush1.msra.mxu0 0.0
    %4822 = vmatprep.subr.mxu0 0.0
    %4823 = vmatpush1.msra.mxu0 0.0
    %4824 = vmatprep.subr.mxu0 0.0
    %4825 = vmatpush1.msra.mxu0 0.0
    %4826 = vmatprep.subr.mxu0 0.0
    %4827 = vmatpush1.msra.mxu0 0.0
    %4828 = vmatprep.subr.mxu0 0.0
    %4829 = vmatpush1.msra.mxu0 0.0
    %4830 = vmatprep.subr.mxu0 0.0
    %4831 = vmatpush1.msra.mxu0 0.0
    %4832 = vmatprep.subr.mxu0 0.0
    %4833 = vmatpush1.msra.mxu0 0.0
    %4834 = vmatprep.subr.mxu0 0.0
    %4835 = vmatpush1.msra.mxu0 0.0
    %4836 = vmatprep.subr.mxu0 0.0
    %4837 = vmatpush1.msra.mxu0 0.0
    %4838 = vmatprep.subr.mxu0 0.0
    %4839 = vmatpush1.msra.mxu0 0.0
    %4840 = vmatprep.subr.mxu0 0.0
    %4841 = vmatpush1.msra.mxu0 0.0
    %4842 = vmatprep.subr.mxu0 0.0
    %4843 = vmatpush1.msra.mxu0 0.0
    %4844 = vmatprep.subr.mxu0 0.0
    %4845 = vmatpush1.msra.mxu0 0.0
    %4846 = vmatprep.subr.mxu0 0.0
    %4847 = vmatpush1.msra.mxu0 0.0
    %4848 = vmatprep.subr.mxu0 0.0
    %4849 = vmatpush1.msra.mxu0 0.0
    %4850 = vmatprep.subr.mxu0 0.0
    %4851 = vmatpush1.msra.mxu0 0.0
    %4852 = vmatprep.subr.mxu0 0.0
    %4853 = vmatpush1.msra.mxu0 0.0
    %4854 = vmatprep.subr.mxu0 0.0
    %4855 = vmatpush1.msra.mxu0 0.0
    %4856 = vmatprep.mubr.f32.mxu0 0.0
    %4857 = vmatmul.mubr.f32.gmra.mrb[0].mxu0 %v4790
    %v4858 = vpop.f32.mrb[0].mxu0
    %v4859 = vadd.f32 0.0, %v4858
    %v4860 = vpop.f32.mrb[0].mxu0
    %4861 = vdwg.mxu0
    %v4862 = vadd.f32 %v4696, %v4859
    %s4863 = scalar_lea.vmem %s9, 6
    %v4864 = vld [vmem:[%s4863] sm:$0x3]
    %v4866 = vsel %vm4371, %v4864, 0
    %4868 = vmatprep.subr.mxu0 0.0
    %4869 = vmatpush1.msra.mxu0 %v4377
    %4870 = vmatprep.subr.mxu0 0.0
    %4871 = vmatpush1.msra.mxu0 0.0
    %4872 = vmatprep.subr.mxu0 0.0
    %4873 = vmatpush1.msra.mxu0 0.0
    %4874 = vmatprep.subr.mxu0 0.0
    %4875 = vmatpush1.msra.mxu0 0.0
    %4876 = vmatprep.subr.mxu0 0.0
    %4877 = vmatpush1.msra.mxu0 0.0
    %4878 = vmatprep.subr.mxu0 0.0
    %4879 = vmatpush1.msra.mxu0 0.0
    %4880 = vmatprep.subr.mxu0 0.0
    %4881 = vmatpush1.msra.mxu0 0.0
    %4882 = vmatprep.subr.mxu0 0.0
    %4883 = vmatpush1.msra.mxu0 0.0
    %4884 = vmatprep.subr.mxu0 0.0
    %4885 = vmatpush1.msra.mxu0 0.0
    %4886 = vmatprep.subr.mxu0 0.0
    %4887 = vmatpush1.msra.mxu0 0.0
    %4888 = vmatprep.subr.mxu0 0.0
    %4889 = vmatpush1.msra.mxu0 0.0
    %4890 = vmatprep.subr.mxu0 0.0
    %4891 = vmatpush1.msra.mxu0 0.0
    %4892 = vmatprep.subr.mxu0 0.0
    %4893 = vmatpush1.msra.mxu0 0.0
    %4894 = vmatprep.subr.mxu0 0.0
    %4895 = vmatpush1.msra.mxu0 0.0
    %4896 = vmatprep.subr.mxu0 0.0
    %4897 = vmatpush1.msra.mxu0 0.0
    %4898 = vmatprep.subr.mxu0 0.0
    %4899 = vmatpush1.msra.mxu0 0.0
    %4900 = vmatprep.subr.mxu0 0.0
    %4901 = vmatpush1.msra.mxu0 0.0
    %4902 = vmatprep.subr.mxu0 0.0
    %4903 = vmatpush1.msra.mxu0 0.0
    %4904 = vmatprep.subr.mxu0 0.0
    %4905 = vmatpush1.msra.mxu0 0.0
    %4906 = vmatprep.subr.mxu0 0.0
    %4907 = vmatpush1.msra.mxu0 0.0
    %4908 = vmatprep.subr.mxu0 0.0
    %4909 = vmatpush1.msra.mxu0 0.0
    %4910 = vmatprep.subr.mxu0 0.0
    %4911 = vmatpush1.msra.mxu0 0.0
    %4912 = vmatprep.subr.mxu0 0.0
    %4913 = vmatpush1.msra.mxu0 0.0
    %4914 = vmatprep.subr.mxu0 0.0
    %4915 = vmatpush1.msra.mxu0 0.0
    %4916 = vmatprep.subr.mxu0 0.0
    %4917 = vmatpush1.msra.mxu0 0.0
    %4918 = vmatprep.subr.mxu0 0.0
    %4919 = vmatpush1.msra.mxu0 0.0
    %4920 = vmatprep.subr.mxu0 0.0
    %4921 = vmatpush1.msra.mxu0 0.0
    %4922 = vmatprep.subr.mxu0 0.0
    %4923 = vmatpush1.msra.mxu0 0.0
    %4924 = vmatprep.subr.mxu0 0.0
    %4925 = vmatpush1.msra.mxu0 0.0
    %4926 = vmatprep.subr.mxu0 0.0
    %4927 = vmatpush1.msra.mxu0 0.0
    %4928 = vmatprep.subr.mxu0 0.0
    %4929 = vmatpush1.msra.mxu0 0.0
    %4930 = vmatprep.subr.mxu0 0.0
    %4931 = vmatpush1.msra.mxu0 0.0
    %4932 = vmatprep.mubr.f32.mxu0 0.0
    %4933 = vmatmul.mubr.f32.gmra.mrb[0].mxu0 %v4866
    %v4934 = vpop.f32.mrb[0].mxu0
    %v4935 = vadd.f32 0.0, %v4934
    %v4936 = vpop.f32.mrb[0].mxu0
    %4937 = vdwg.mxu0
    %s4938 = scalar_lea.vmem [#allocation17], 336
    %v4939 = vld [vmem:[%s4938] sm:$0xff]
    %v4940 = vld [vmem:[%s4938 + $0x8] sm:$0xff]
    %v4941 = vld [vmem:[%s4938 + $0x10] sm:$0xff]
    %v4942 = vld [vmem:[%s4938 + $0x18] sm:$0xff]
    %v4943 = vld [vmem:[%s4938 + $0x20] sm:$0xff]
    %v4944 = vld [vmem:[%s4938 + $0x28] sm:$0xff]
    %v4945 = vld [vmem:[%s4938 + $0x30] sm:$0xff]
    %v4946 = vld [vmem:[%s4938 + $0x38] sm:$0xff]
    %v4947 = vld [vmem:[%s4938 + $0x40] sm:$0xff]
    %v4948 = vld [vmem:[%s4938 + $0x48] sm:$0xff]
    %v4949 = vld [vmem:[%s4938 + $0x50] sm:$0xff]
    %v4950 = vld [vmem:[%s4938 + $0x58] sm:$0xff]
    %v4951 = vld [vmem:[%s4938 + $0x60] sm:$0xff]
    %v4952 = vld [vmem:[%s4938 + $0x68] sm:$0xff]
    %v4954 = vsel %vm4199, %v4935, 0
    %4956 = vmatprep.subr.mxu0 0.0
    %4957 = vmatpush1.msra.mxu0 %v4939
    %4958 = vmatprep.subr.mxu0 0.0
    %4959 = vmatpush1.msra.mxu0 %v4940
    %4960 = vmatprep.subr.mxu0 0.0
    %4961 = vmatpush1.msra.mxu0 %v4941
    %4962 = vmatprep.subr.mxu0 0.0
    %4963 = vmatpush1.msra.mxu0 %v4942
    %4964 = vmatprep.subr.mxu0 0.0
    %4965 = vmatpush1.msra.mxu0 %v4943
    %4966 = vmatprep.subr.mxu0 0.0
    %4967 = vmatpush1.msra.mxu0 %v4944
    %4968 = vmatprep.subr.mxu0 0.0
    %4969 = vmatpush1.msra.mxu0 %v4945
    %4970 = vmatprep.subr.mxu0 0.0
    %4971 = vmatpush1.msra.mxu0 %v4946
    %4972 = vmatprep.subr.mxu0 0.0
    %4973 = vmatpush1.msra.mxu0 %v4947
    %4974 = vmatprep.subr.mxu0 0.0
    %4975 = vmatpush1.msra.mxu0 %v4948
    %4976 = vmatprep.subr.mxu0 0.0
    %4977 = vmatpush1.msra.mxu0 %v4949
    %4978 = vmatprep.subr.mxu0 0.0
    %4979 = vmatpush1.msra.mxu0 %v4950
    %4980 = vmatprep.subr.mxu0 0.0
    %4981 = vmatpush1.msra.mxu0 %v4951
    %4982 = vmatprep.subr.mxu0 0.0
    %4983 = vmatpush1.msra.mxu0 %v4952
    %4984 = vmatprep.subr.mxu0 0.0
    %4985 = vmatpush1.msra.mxu0 0.0
    %4986 = vmatprep.subr.mxu0 0.0
    %4987 = vmatpush1.msra.mxu0 0.0
    %4988 = vmatprep.subr.mxu0 0.0
    %4989 = vmatpush1.msra.mxu0 0.0
    %4990 = vmatprep.subr.mxu0 0.0
    %4991 = vmatpush1.msra.mxu0 0.0
    %4992 = vmatprep.subr.mxu0 0.0
    %4993 = vmatpush1.msra.mxu0 0.0
    %4994 = vmatprep.subr.mxu0 0.0
    %4995 = vmatpush1.msra.mxu0 0.0
    %4996 = vmatprep.subr.mxu0 0.0
    %4997 = vmatpush1.msra.mxu0 0.0
    %4998 = vmatprep.subr.mxu0 0.0
    %4999 = vmatpush1.msra.mxu0 0.0
    %5000 = vmatprep.subr.mxu0 0.0
    %5001 = vmatpush1.msra.mxu0 0.0
    %5002 = vmatprep.subr.mxu0 0.0
    %5003 = vmatpush1.msra.mxu0 0.0
    %5004 = vmatprep.subr.mxu0 0.0
    %5005 = vmatpush1.msra.mxu0 0.0
    %5006 = vmatprep.subr.mxu0 0.0
    %5007 = vmatpush1.msra.mxu0 0.0
    %5008 = vmatprep.subr.mxu0 0.0
    %5009 = vmatpush1.msra.mxu0 0.0
    %5010 = vmatprep.subr.mxu0 0.0
    %5011 = vmatpush1.msra.mxu0 0.0
    %5012 = vmatprep.subr.mxu0 0.0
    %5013 = vmatpush1.msra.mxu0 0.0
    %5014 = vmatprep.subr.mxu0 0.0
    %5015 = vmatpush1.msra.mxu0 0.0
    %5016 = vmatprep.subr.mxu0 0.0
    %5017 = vmatpush1.msra.mxu0 0.0
    %5018 = vmatprep.subr.mxu0 0.0
    %5019 = vmatpush1.msra.mxu0 0.0
    %5020 = vmatprep.mubr.f32.mxu0 0.0
    %5021 = vmatmul.mubr.f32.gmra.mrb[0].mxu0 %v4954
    %v5022 = vpop.f32.mrb[0].mxu0
    %v5023 = vadd.f32 0.0, %v5022
    %v5024 = vpop.f32.mrb[0].mxu0
    %5025 = vdwg.mxu0
    %v5026 = vadd.f32 %v4862, %v5023
    %s5027 = scalar_lea.vmem %s9, 8
    %v5028 = vld [vmem:[%s5027] sm:$0x3]
    %v5030 = vsel %vm4371, %v5028, 0
    %5032 = vmatprep.subr.mxu0 0.0
    %5033 = vmatpush1.msra.mxu0 %v4377
    %5034 = vmatprep.subr.mxu0 0.0
    %5035 = vmatpush1.msra.mxu0 0.0
    %5036 = vmatprep.subr.mxu0 0.0
    %5037 = vmatpush1.msra.mxu0 0.0
    %5038 = vmatprep.subr.mxu0 0.0
    %5039 = vmatpush1.msra.mxu0 0.0
    %5040 = vmatprep.subr.mxu0 0.0
    %5041 = vmatpush1.msra.mxu0 0.0
    %5042 = vmatprep.subr.mxu0 0.0
    %5043 = vmatpush1.msra.mxu0 0.0
    %5044 = vmatprep.subr.mxu0 0.0
    %5045 = vmatpush1.msra.mxu0 0.0
    %5046 = vmatprep.subr.mxu0 0.0
    %5047 = vmatpush1.msra.mxu0 0.0
    %5048 = vmatprep.subr.mxu0 0.0
    %5049 = vmatpush1.msra.mxu0 0.0
    %5050 = vmatprep.subr.mxu0 0.0
    %5051 = vmatpush1.msra.mxu0 0.0
    %5052 = vmatprep.subr.mxu0 0.0
    %5053 = vmatpush1.msra.mxu0 0.0
    %5054 = vmatprep.subr.mxu0 0.0
    %5055 = vmatpush1.msra.mxu0 0.0
    %5056 = vmatprep.subr.mxu0 0.0
    %5057 = vmatpush1.msra.mxu0 0.0
    %5058 = vmatprep.subr.mxu0 0.0
    %5059 = vmatpush1.msra.mxu0 0.0
    %5060 = vmatprep.subr.mxu0 0.0
    %5061 = vmatpush1.msra.mxu0 0.0
    %5062 = vmatprep.subr.mxu0 0.0
    %5063 = vmatpush1.msra.mxu0 0.0
    %5064 = vmatprep.subr.mxu0 0.0
    %5065 = vmatpush1.msra.mxu0 0.0
    %5066 = vmatprep.subr.mxu0 0.0
    %5067 = vmatpush1.msra.mxu0 0.0
    %5068 = vmatprep.subr.mxu0 0.0
    %5069 = vmatpush1.msra.mxu0 0.0
    %5070 = vmatprep.subr.mxu0 0.0
    %5071 = vmatpush1.msra.mxu0 0.0
    %5072 = vmatprep.subr.mxu0 0.0
    %5073 = vmatpush1.msra.mxu0 0.0
    %5074 = vmatprep.subr.mxu0 0.0
    %5075 = vmatpush1.msra.mxu0 0.0
    %5076 = vmatprep.subr.mxu0 0.0
    %5077 = vmatpush1.msra.mxu0 0.0
    %5078 = vmatprep.subr.mxu0 0.0
    %5079 = vmatpush1.msra.mxu0 0.0
    %5080 = vmatprep.subr.mxu0 0.0
    %5081 = vmatpush1.msra.mxu0 0.0
    %5082 = vmatprep.subr.mxu0 0.0
    %5083 = vmatpush1.msra.mxu0 0.0
    %5084 = vmatprep.subr.mxu0 0.0
    %5085 = vmatpush1.msra.mxu0 0.0
    %5086 = vmatprep.subr.mxu0 0.0
    %5087 = vmatpush1.msra.mxu0 0.0
    %5088 = vmatprep.subr.mxu0 0.0
    %5089 = vmatpush1.msra.mxu0 0.0
    %5090 = vmatprep.subr.mxu0 0.0
    %5091 = vmatpush1.msra.mxu0 0.0
    %5092 = vmatprep.subr.mxu0 0.0
    %5093 = vmatpush1.msra.mxu0 0.0
    %5094 = vmatprep.subr.mxu0 0.0
    %5095 = vmatpush1.msra.mxu0 0.0
    %5096 = vmatprep.mubr.f32.mxu0 0.0
    %5097 = vmatmul.mubr.f32.gmra.mrb[0].mxu0 %v5030
    %v5098 = vpop.f32.mrb[0].mxu0
    %v5099 = vadd.f32 0.0, %v5098
    %v5100 = vpop.f32.mrb[0].mxu0
    %5101 = vdwg.mxu0
    %s5102 = scalar_lea.vmem [#allocation17], 448
    %v5103 = vld [vmem:[%s5102] sm:$0xff]
    %v5104 = vld [vmem:[%s5102 + $0x8] sm:$0xff]
    %v5105 = vld [vmem:[%s5102 + $0x10] sm:$0xff]
    %v5106 = vld [vmem:[%s5102 + $0x18] sm:$0xff]
    %v5107 = vld [vmem:[%s5102 + $0x20] sm:$0xff]
    %v5108 = vld [vmem:[%s5102 + $0x28] sm:$0xff]
    %v5109 = vld [vmem:[%s5102 + $0x30] sm:$0xff]
    %v5110 = vld [vmem:[%s5102 + $0x38] sm:$0xff]
    %v5111 = vld [vmem:[%s5102 + $0x40] sm:$0xff]
    %v5112 = vld [vmem:[%s5102 + $0x48] sm:$0xff]
    %v5113 = vld [vmem:[%s5102 + $0x50] sm:$0xff]
    %v5114 = vld [vmem:[%s5102 + $0x58] sm:$0xff]
    %v5115 = vld [vmem:[%s5102 + $0x60] sm:$0xff]
    %v5116 = vld [vmem:[%s5102 + $0x68] sm:$0xff]
    %v5118 = vsel %vm4199, %v5099, 0
    %5120 = vmatprep.subr.mxu0 0.0
    %5121 = vmatpush1.msra.mxu0 %v5103
    %5122 = vmatprep.subr.mxu0 0.0
    %5123 = vmatpush1.msra.mxu0 %v5104
    %5124 = vmatprep.subr.mxu0 0.0
    %5125 = vmatpush1.msra.mxu0 %v5105
    %5126 = vmatprep.subr.mxu0 0.0
    %5127 = vmatpush1.msra.mxu0 %v5106
    %5128 = vmatprep.subr.mxu0 0.0
    %5129 = vmatpush1.msra.mxu0 %v5107
    %5130 = vmatprep.subr.mxu0 0.0
    %5131 = vmatpush1.msra.mxu0 %v5108
    %5132 = vmatprep.subr.mxu0 0.0
    %5133 = vmatpush1.msra.mxu0 %v5109
    %5134 = vmatprep.subr.mxu0 0.0
    %5135 = vmatpush1.msra.mxu0 %v5110
    %5136 = vmatprep.subr.mxu0 0.0
    %5137 = vmatpush1.msra.mxu0 %v5111
    %5138 = vmatprep.subr.mxu0 0.0
    %5139 = vmatpush1.msra.mxu0 %v5112
    %5140 = vmatprep.subr.mxu0 0.0
    %5141 = vmatpush1.msra.mxu0 %v5113
    %5142 = vmatprep.subr.mxu0 0.0
    %5143 = vmatpush1.msra.mxu0 %v5114
    %5144 = vmatprep.subr.mxu0 0.0
    %5145 = vmatpush1.msra.mxu0 %v5115
    %5146 = vmatprep.subr.mxu0 0.0
    %5147 = vmatpush1.msra.mxu0 %v5116
    %5148 = vmatprep.subr.mxu0 0.0
    %5149 = vmatpush1.msra.mxu0 0.0
    %5150 = vmatprep.subr.mxu0 0.0
    %5151 = vmatpush1.msra.mxu0 0.0
    %5152 = vmatprep.subr.mxu0 0.0
    %5153 = vmatpush1.msra.mxu0 0.0
    %5154 = vmatprep.subr.mxu0 0.0
    %5155 = vmatpush1.msra.mxu0 0.0
    %5156 = vmatprep.subr.mxu0 0.0
    %5157 = vmatpush1.msra.mxu0 0.0
    %5158 = vmatprep.subr.mxu0 0.0
    %5159 = vmatpush1.msra.mxu0 0.0
    %5160 = vmatprep.subr.mxu0 0.0
    %5161 = vmatpush1.msra.mxu0 0.0
    %5162 = vmatprep.subr.mxu0 0.0
    %5163 = vmatpush1.msra.mxu0 0.0
    %5164 = vmatprep.subr.mxu0 0.0
    %5165 = vmatpush1.msra.mxu0 0.0
    %5166 = vmatprep.subr.mxu0 0.0
    %5167 = vmatpush1.msra.mxu0 0.0
    %5168 = vmatprep.subr.mxu0 0.0
    %5169 = vmatpush1.msra.mxu0 0.0
    %5170 = vmatprep.subr.mxu0 0.0
    %5171 = vmatpush1.msra.mxu0 0.0
    %5172 = vmatprep.subr.mxu0 0.0
    %5173 = vmatpush1.msra.mxu0 0.0
    %5174 = vmatprep.subr.mxu0 0.0
    %5175 = vmatpush1.msra.mxu0 0.0
    %5176 = vmatprep.subr.mxu0 0.0
    %5177 = vmatpush1.msra.mxu0 0.0
    %5178 = vmatprep.subr.mxu0 0.0
    %5179 = vmatpush1.msra.mxu0 0.0
    %5180 = vmatprep.subr.mxu0 0.0
    %5181 = vmatpush1.msra.mxu0 0.0
    %5182 = vmatprep.subr.mxu0 0.0
    %5183 = vmatpush1.msra.mxu0 0.0
    %5184 = vmatprep.mubr.f32.mxu0 0.0
    %5185 = vmatmul.mubr.f32.gmra.mrb[0].mxu0 %v5118
    %v5186 = vpop.f32.mrb[0].mxu0
    %v5187 = vadd.f32 0.0, %v5186
    %v5188 = vpop.f32.mrb[0].mxu0
    %5189 = vdwg.mxu0
    %v5190 = vadd.f32 %v5026, %v5187
    %v5191 = vsel %vm1655, %v5190, 0.0
    %v5192 = vrot.slane %v5191, 4
    %v5193 = vadd.f32 %v5191, %v5192
    %v5194 = vrot.slane %v5193, 2
    %v5195 = vadd.f32 %v5193, %v5194
    %v5196 = vrot.slane %v5195, 1
    %v5197 = vadd.f32 %v5195, %v5196
    %v5198 = vmul.f32 %v5190, %v5190
    %v5199 = vsel %vm1655, %v5198, 0.0
    %v5200 = vrot.slane %v5199, 4
    %v5201 = vadd.f32 %v5199, %v5200
    %v5202 = vrot.slane %v5201, 2
    %v5203 = vadd.f32 %v5201, %v5202
    %v5204 = vrot.slane %v5203, 1
    %v5205 = vadd.f32 %v5203, %v5204
    %v5206 = vld [vmem:[%s11] sm:$0xff]
    %v5207 = vld [vmem:[%s11 + $0x8] sm:$0xff]
    %v5208 = vld [vmem:[%s11 + $0x10] sm:$0xff]
    %v5209 = vld [vmem:[%s11 + $0x18] sm:$0xff]
    %v5211 = vsel %vm1651, %v5197, 0
    %5213 = vmatprep.subr.mxu0 0.0
    %5214 = vmatpush1.msra.mxu0 %v5206
    %5215 = vmatprep.subr.mxu0 0.0
    %5216 = vmatpush1.msra.mxu0 %v5207
    %5217 = vmatprep.subr.mxu0 0.0
    %5218 = vmatpush1.msra.mxu0 %v5208
    %5219 = vmatprep.subr.mxu0 0.0
    %5220 = vmatpush1.msra.mxu0 %v5209
    %5221 = vmatprep.subr.mxu0 0.0
    %5222 = vmatpush1.msra.mxu0 0.0
    %5223 = vmatprep.subr.mxu0 0.0
    %5224 = vmatpush1.msra.mxu0 0.0
    %5225 = vmatprep.subr.mxu0 0.0
    %5226 = vmatpush1.msra.mxu0 0.0
    %5227 = vmatprep.subr.mxu0 0.0
    %5228 = vmatpush1.msra.mxu0 0.0
    %5229 = vmatprep.subr.mxu0 0.0
    %5230 = vmatpush1.msra.mxu0 0.0
    %5231 = vmatprep.subr.mxu0 0.0
    %5232 = vmatpush1.msra.mxu0 0.0
    %5233 = vmatprep.subr.mxu0 0.0
    %5234 = vmatpush1.msra.mxu0 0.0
    %5235 = vmatprep.subr.mxu0 0.0
    %5236 = vmatpush1.msra.mxu0 0.0
    %5237 = vmatprep.subr.mxu0 0.0
    %5238 = vmatpush1.msra.mxu0 0.0
    %5239 = vmatprep.subr.mxu0 0.0
    %5240 = vmatpush1.msra.mxu0 0.0
    %5241 = vmatprep.subr.mxu0 0.0
    %5242 = vmatpush1.msra.mxu0 0.0
    %5243 = vmatprep.subr.mxu0 0.0
    %5244 = vmatpush1.msra.mxu0 0.0
    %5245 = vmatprep.subr.mxu0 0.0
    %5246 = vmatpush1.msra.mxu0 0.0
    %5247 = vmatprep.subr.mxu0 0.0
    %5248 = vmatpush1.msra.mxu0 0.0
    %5249 = vmatprep.subr.mxu0 0.0
    %5250 = vmatpush1.msra.mxu0 0.0
    %5251 = vmatprep.subr.mxu0 0.0
    %5252 = vmatpush1.msra.mxu0 0.0
    %5253 = vmatprep.subr.mxu0 0.0
    %5254 = vmatpush1.msra.mxu0 0.0
    %5255 = vmatprep.subr.mxu0 0.0
    %5256 = vmatpush1.msra.mxu0 0.0
    %5257 = vmatprep.subr.mxu0 0.0
    %5258 = vmatpush1.msra.mxu0 0.0
    %5259 = vmatprep.subr.mxu0 0.0
    %5260 = vmatpush1.msra.mxu0 0.0
    %5261 = vmatprep.subr.mxu0 0.0
    %5262 = vmatpush1.msra.mxu0 0.0
    %5263 = vmatprep.subr.mxu0 0.0
    %5264 = vmatpush1.msra.mxu0 0.0
    %5265 = vmatprep.subr.mxu0 0.0
    %5266 = vmatpush1.msra.mxu0 0.0
    %5267 = vmatprep.subr.mxu0 0.0
    %5268 = vmatpush1.msra.mxu0 0.0
    %5269 = vmatprep.subr.mxu0 0.0
    %5270 = vmatpush1.msra.mxu0 0.0
    %5271 = vmatprep.subr.mxu0 0.0
    %5272 = vmatpush1.msra.mxu0 0.0
    %5273 = vmatprep.subr.mxu0 0.0
    %5274 = vmatpush1.msra.mxu0 0.0
    %5275 = vmatprep.subr.mxu0 0.0
    %5276 = vmatpush1.msra.mxu0 0.0
    %5277 = vmatprep.mubr.f32.mxu0 0.0
    %5278 = vmatmul.mubr.f32.gmra.mrb[0].mxu0 %v5211
    %v5279 = vpop.f32.mrb[0].mxu0
    %v5280 = vadd.f32 0.0, %v5279
    %v5281 = vpop.f32.mrb[0].mxu0
    %5282 = vdwg.mxu0
    %v5283 = vmul.f32 %v5280, 0.25
    %v5285 = vsel %vm1651, %v5205, 0
    %5287 = vmatprep.subr.mxu0 0.0
    %5288 = vmatpush1.msra.mxu0 %v5206
    %5289 = vmatprep.subr.mxu0 0.0
    %5290 = vmatpush1.msra.mxu0 %v5207
    %5291 = vmatprep.subr.mxu0 0.0
    %5292 = vmatpush1.msra.mxu0 %v5208
    %5293 = vmatprep.subr.mxu0 0.0
    %5294 = vmatpush1.msra.mxu0 %v5209
    %5295 = vmatprep.subr.mxu0 0.0
    %5296 = vmatpush1.msra.mxu0 0.0
    %5297 = vmatprep.subr.mxu0 0.0
    %5298 = vmatpush1.msra.mxu0 0.0
    %5299 = vmatprep.subr.mxu0 0.0
    %5300 = vmatpush1.msra.mxu0 0.0
    %5301 = vmatprep.subr.mxu0 0.0
    %5302 = vmatpush1.msra.mxu0 0.0
    %5303 = vmatprep.subr.mxu0 0.0
    %5304 = vmatpush1.msra.mxu0 0.0
    %5305 = vmatprep.subr.mxu0 0.0
    %5306 = vmatpush1.msra.mxu0 0.0
    %5307 = vmatprep.subr.mxu0 0.0
    %5308 = vmatpush1.msra.mxu0 0.0
    %5309 = vmatprep.subr.mxu0 0.0
    %5310 = vmatpush1.msra.mxu0 0.0
    %5311 = vmatprep.subr.mxu0 0.0
    %5312 = vmatpush1.msra.mxu0 0.0
    %5313 = vmatprep.subr.mxu0 0.0
    %5314 = vmatpush1.msra.mxu0 0.0
    %5315 = vmatprep.subr.mxu0 0.0
    %5316 = vmatpush1.msra.mxu0 0.0
    %5317 = vmatprep.subr.mxu0 0.0
    %5318 = vmatpush1.msra.mxu0 0.0
    %5319 = vmatprep.subr.mxu0 0.0
    %5320 = vmatpush1.msra.mxu0 0.0
    %5321 = vmatprep.subr.mxu0 0.0
    %5322 = vmatpush1.msra.mxu0 0.0
    %5323 = vmatprep.subr.mxu0 0.0
    %5324 = vmatpush1.msra.mxu0 0.0
    %5325 = vmatprep.subr.mxu0 0.0
    %5326 = vmatpush1.msra.mxu0 0.0
    %5327 = vmatprep.subr.mxu0 0.0
    %5328 = vmatpush1.msra.mxu0 0.0
    %5329 = vmatprep.subr.mxu0 0.0
    %5330 = vmatpush1.msra.mxu0 0.0
    %5331 = vmatprep.subr.mxu0 0.0
    %5332 = vmatpush1.msra.mxu0 0.0
    %5333 = vmatprep.subr.mxu0 0.0
    %5334 = vmatpush1.msra.mxu0 0.0
    %5335 = vmatprep.subr.mxu0 0.0
    %5336 = vmatpush1.msra.mxu0 0.0
    %5337 = vmatprep.subr.mxu0 0.0
    %5338 = vmatpush1.msra.mxu0 0.0
    %5339 = vmatprep.subr.mxu0 0.0
    %5340 = vmatpush1.msra.mxu0 0.0
    %5341 = vmatprep.subr.mxu0 0.0
    %5342 = vmatpush1.msra.mxu0 0.0
    %5343 = vmatprep.subr.mxu0 0.0
    %5344 = vmatpush1.msra.mxu0 0.0
    %5345 = vmatprep.subr.mxu0 0.0
    %5346 = vmatpush1.msra.mxu0 0.0
    %5347 = vmatprep.subr.mxu0 0.0
    %5348 = vmatpush1.msra.mxu0 0.0
    %5349 = vmatprep.subr.mxu0 0.0
    %5350 = vmatpush1.msra.mxu0 0.0
    %5351 = vmatprep.mubr.f32.mxu0 0.0
    %5352 = vmatmul.mubr.f32.gmra.mrb[0].mxu0 %v5285
    %v5353 = vpop.f32.mrb[0].mxu0
    %v5354 = vadd.f32 0.0, %v5353
    %v5355 = vpop.f32.mrb[0].mxu0
    %5356 = vdwg.mxu0
    %v5357 = vmul.f32 %v5354, 0.25
    %v5358 = vmul.f32 %v5283, %v5283
    %v5359 = vsub.f32 %v5357, %v5358
    %v5360 = vld [vmem:[%s12] sm:$0x3]
    %v5361 = vadd.f32 %v5359, 1e-05
    %v5362 = vrsqrt.pop %v5361
    %v5363 = vmul.f32 %v5360, %v5362
    %v5364 = vmul.f32 %v5283, %v5363
    %v5366 = vrot.slane %v5364, 7
    %v5368 = vsub.f32 %v5360, %v5366
    %v5369 = vlaneseq
    %v5370 = vshrl.u32 %v5369, 7
    %v5371 = vsub.s32 0, %v5370
    %v5372 = vrot.slane %v5363, %v5371
    %v5373 = vmul.f32 %v5190, %v5372
    %v5374 = vlaneseq
    %v5375 = vshrl.u32 %v5374, 7
    %v5376 = vsub.s32 1, %v5375
    %v5377 = vrot.slane %v5368, %v5376
    %v5378 = vadd.f32 %v5373, %v5377
    %v5379 = vmax.f32 %v5378, 0.0
    %v5380 = vld [vmem:[%s14] sm:$0x1]
    %v5381 = vld [vmem:[#allocation19] sm:$0xff]
    %v5382 = vld [vmem:[#allocation19 + $0x8] sm:$0xff]
    %v5383 = vld [vmem:[#allocation19 + $0x10] sm:$0xff]
    %v5384 = vld [vmem:[#allocation19 + $0x18] sm:$0xff]
    %v5386 = vsel %vm1651, %v5379, 0
    %5388 = vmatprep.subr.mxu0 0.0
    %5389 = vmatpush1.msra.mxu0 %v5381
    %5390 = vmatprep.subr.mxu0 0.0
    %5391 = vmatpush1.msra.mxu0 %v5382
    %5392 = vmatprep.subr.mxu0 0.0
    %5393 = vmatpush1.msra.mxu0 %v5383
    %5394 = vmatprep.subr.mxu0 0.0
    %5395 = vmatpush1.msra.mxu0 %v5384
    %5396 = vmatprep.subr.mxu0 0.0
    %5397 = vmatpush1.msra.mxu0 0.0
    %5398 = vmatprep.subr.mxu0 0.0
    %5399 = vmatpush1.msra.mxu0 0.0
    %5400 = vmatprep.subr.mxu0 0.0
    %5401 = vmatpush1.msra.mxu0 0.0
    %5402 = vmatprep.subr.mxu0 0.0
    %5403 = vmatpush1.msra.mxu0 0.0
    %5404 = vmatprep.subr.mxu0 0.0
    %5405 = vmatpush1.msra.mxu0 0.0
    %5406 = vmatprep.subr.mxu0 0.0
    %5407 = vmatpush1.msra.mxu0 0.0
    %5408 = vmatprep.subr.mxu0 0.0
    %5409 = vmatpush1.msra.mxu0 0.0
    %5410 = vmatprep.subr.mxu0 0.0
    %5411 = vmatpush1.msra.mxu0 0.0
    %5412 = vmatprep.subr.mxu0 0.0
    %5413 = vmatpush1.msra.mxu0 0.0
    %5414 = vmatprep.subr.mxu0 0.0
    %5415 = vmatpush1.msra.mxu0 0.0
    %5416 = vmatprep.subr.mxu0 0.0
    %5417 = vmatpush1.msra.mxu0 0.0
    %5418 = vmatprep.subr.mxu0 0.0
    %5419 = vmatpush1.msra.mxu0 0.0
    %5420 = vmatprep.subr.mxu0 0.0
    %5421 = vmatpush1.msra.mxu0 0.0
    %5422 = vmatprep.subr.mxu0 0.0
    %5423 = vmatpush1.msra.mxu0 0.0
    %5424 = vmatprep.subr.mxu0 0.0
    %5425 = vmatpush1.msra.mxu0 0.0
    %5426 = vmatprep.subr.mxu0 0.0
    %5427 = vmatpush1.msra.mxu0 0.0
    %5428 = vmatprep.subr.mxu0 0.0
    %5429 = vmatpush1.msra.mxu0 0.0
    %5430 = vmatprep.subr.mxu0 0.0
    %5431 = vmatpush1.msra.mxu0 0.0
    %5432 = vmatprep.subr.mxu0 0.0
    %5433 = vmatpush1.msra.mxu0 0.0
    %5434 = vmatprep.subr.mxu0 0.0
    %5435 = vmatpush1.msra.mxu0 0.0
    %5436 = vmatprep.subr.mxu0 0.0
    %5437 = vmatpush1.msra.mxu0 0.0
    %5438 = vmatprep.subr.mxu0 0.0
    %5439 = vmatpush1.msra.mxu0 0.0
    %5440 = vmatprep.subr.mxu0 0.0
    %5441 = vmatpush1.msra.mxu0 0.0
    %5442 = vmatprep.subr.mxu0 0.0
    %5443 = vmatpush1.msra.mxu0 0.0
    %5444 = vmatprep.subr.mxu0 0.0
    %5445 = vmatpush1.msra.mxu0 0.0
    %5446 = vmatprep.subr.mxu0 0.0
    %5447 = vmatpush1.msra.mxu0 0.0
    %5448 = vmatprep.subr.mxu0 0.0
    %5449 = vmatpush1.msra.mxu0 0.0
    %5450 = vmatprep.subr.mxu0 0.0
    %5451 = vmatpush1.msra.mxu0 0.0
    %5452 = vmatprep.mubr.f32.mxu0 0.0
    %5453 = vmatmul.mubr.f32.gmra.mrb[0].mxu0 %v5386
    %v5454 = vpop.f32.mrb[0].mxu0
    %v5455 = vadd.f32 0.0, %v5454
    %v5456 = vpop.f32.mrb[0].mxu0
    %5457 = vdwg.mxu0
    %v5458 = vadd.f32 %v5380, %v5455
    %s5459 = scalar_lea.vmem [#allocation19], 32
    %v5460 = vld [vmem:[%s5459] sm:$0xff]
    %v5461 = vld [vmem:[%s5459 + $0x8] sm:$0xff]
    %v5462 = vld [vmem:[%s5459 + $0x10] sm:$0xff]
    %v5463 = vld [vmem:[%s5459 + $0x18] sm:$0xff]
    %v5464 = vrot.slane %v5379, 1
    %v5465 = vsel %vm1651, %v5464, 0
    %5467 = vmatprep.subr.mxu0 0.0
    %5468 = vmatpush1.msra.mxu0 %v5460
    %5469 = vmatprep.subr.mxu0 0.0
    %5470 = vmatpush1.msra.mxu0 %v5461
    %5471 = vmatprep.subr.mxu0 0.0
    %5472 = vmatpush1.msra.mxu0 %v5462
    %5473 = vmatprep.subr.mxu0 0.0
    %5474 = vmatpush1.msra.mxu0 %v5463
    %5475 = vmatprep.subr.mxu0 0.0
    %5476 = vmatpush1.msra.mxu0 0.0
    %5477 = vmatprep.subr.mxu0 0.0
    %5478 = vmatpush1.msra.mxu0 0.0
    %5479 = vmatprep.subr.mxu0 0.0
    %5480 = vmatpush1.msra.mxu0 0.0
    %5481 = vmatprep.subr.mxu0 0.0
    %5482 = vmatpush1.msra.mxu0 0.0
    %5483 = vmatprep.subr.mxu0 0.0
    %5484 = vmatpush1.msra.mxu0 0.0
    %5485 = vmatprep.subr.mxu0 0.0
    %5486 = vmatpush1.msra.mxu0 0.0
    %5487 = vmatprep.subr.mxu0 0.0
    %5488 = vmatpush1.msra.mxu0 0.0
    %5489 = vmatprep.subr.mxu0 0.0
    %5490 = vmatpush1.msra.mxu0 0.0
    %5491 = vmatprep.subr.mxu0 0.0
    %5492 = vmatpush1.msra.mxu0 0.0
    %5493 = vmatprep.subr.mxu0 0.0
    %5494 = vmatpush1.msra.mxu0 0.0
    %5495 = vmatprep.subr.mxu0 0.0
    %5496 = vmatpush1.msra.mxu0 0.0
    %5497 = vmatprep.subr.mxu0 0.0
    %5498 = vmatpush1.msra.mxu0 0.0
    %5499 = vmatprep.subr.mxu0 0.0
    %5500 = vmatpush1.msra.mxu0 0.0
    %5501 = vmatprep.subr.mxu0 0.0
    %5502 = vmatpush1.msra.mxu0 0.0
    %5503 = vmatprep.subr.mxu0 0.0
    %5504 = vmatpush1.msra.mxu0 0.0
    %5505 = vmatprep.subr.mxu0 0.0
    %5506 = vmatpush1.msra.mxu0 0.0
    %5507 = vmatprep.subr.mxu0 0.0
    %5508 = vmatpush1.msra.mxu0 0.0
    %5509 = vmatprep.subr.mxu0 0.0
    %5510 = vmatpush1.msra.mxu0 0.0
    %5511 = vmatprep.subr.mxu0 0.0
    %5512 = vmatpush1.msra.mxu0 0.0
    %5513 = vmatprep.subr.mxu0 0.0
    %5514 = vmatpush1.msra.mxu0 0.0
    %5515 = vmatprep.subr.mxu0 0.0
    %5516 = vmatpush1.msra.mxu0 0.0
    %5517 = vmatprep.subr.mxu0 0.0
    %5518 = vmatpush1.msra.mxu0 0.0
    %5519 = vmatprep.subr.mxu0 0.0
    %5520 = vmatpush1.msra.mxu0 0.0
    %5521 = vmatprep.subr.mxu0 0.0
    %5522 = vmatpush1.msra.mxu0 0.0
    %5523 = vmatprep.subr.mxu0 0.0
    %5524 = vmatpush1.msra.mxu0 0.0
    %5525 = vmatprep.subr.mxu0 0.0
    %5526 = vmatpush1.msra.mxu0 0.0
    %5527 = vmatprep.subr.mxu0 0.0
    %5528 = vmatpush1.msra.mxu0 0.0
    %5529 = vmatprep.subr.mxu0 0.0
    %5530 = vmatpush1.msra.mxu0 0.0
    %5531 = vmatprep.mubr.f32.mxu0 0.0
    %5532 = vmatmul.mubr.f32.gmra.mrb[0].mxu0 %v5465
    %v5533 = vpop.f32.mrb[0].mxu0
    %v5534 = vadd.f32 0.0, %v5533
    %v5535 = vpop.f32.mrb[0].mxu0
    %5536 = vdwg.mxu0
    %v5537 = vadd.f32 %v5458, %v5534
    %vm5538 = vcmask 16384
    %v5539 = vsel %vm5538, %v5537, -inf
    %5540 = vmax.xlane.f32.xlu0 %v5539
    %v5541 = vpop.xlane.xlu0 %5540
    %v5542 = vsub.f32 %v5537, %v5541
    %v5543 = vmul.f32 %v5542, 1.442695
    %v5544 = vpow.pop %v5543
    %v5545 = vsel %vm5538, %v5544, 0.0
    %5546 = vadd.xlane.f32.xlu0 %v5545
    %v5547 = vpop.xlane.xlu0 %5546
    %v5548 = vrcp.pop %v5547
    %v5549 = vmul.f32 %v5544, %v5548
    %5550 = vst.msk [vmem:[#allocation20] sm:$0x1] %vm5538, %v5549
    // Predicated region
    $region106: #{forward.1} parent=1 // pred_check
      _
    $region107: #{forward.1} parent=1 // pred_check_branch
      %5552 = sbr.rel (0) target = $region109
    $region108: #{forward.1} parent=1 // pred_region
      %s5554 = ssub.s32 16, 16
      %5555 = vsyncadd [#allocation4], %s5554
      %s5557 = sshll.u32 [#allocation20], 4
      %s5558 = int_to_ptr.vmem [resolvable:$true] %s5557
      %5560 = dma.vmem_to_hbm [thread:$0]  %s5558, 16, %s15, [#allocation4]
    $region109: #{forward.1} parent=1 // pred_fallthru
      _
    // Predicated region
    $region110: #{forward.1} parent=1 // pred_check
      _
    $region111: #{forward.1} parent=1 // pred_check_branch
      %5562 = sbr.rel (0) target = $region113
    $region112: #{forward.1} parent=1 // pred_region
      %5563 = dma.done [#allocation4], 16
    $region113: #{forward.1} parent=1 // pred_fallthru
      _
    %5564 = vsyncpa [#allocation3], 1
    %5565 = vsyncpa [#allocation6], 1
    %5566 = vsyncpa [#allocation9], 1
    %5567 = vsyncpa [#allocation12], 1
    %5568 = vsyncpa [#allocation15], 1
    %5569 = vsyncpa [#allocation18], 1
    %5570 = vsyncpa [#allocation4], 1

</llo_original>
